<compile_context>
chip_gen: v5e
topology: v5e:2x2
jax: 0.10.0
libtpu: 0.0.40
codegen_flags: <defaults>
</compile_context>

<pallas_src>
import functools

import jax
import jax.numpy as jnp
from jax import lax
from jax.experimental import pallas as pl
from jax.experimental.pallas import tpu as pltpu

# ---- scaled-down hyperparameters (original: n_embed=384, n_head=6, n_layer=6,
#      block_size=256, vocab_size=len(chars)) ----
VOCAB = 65
VPAD = 128               # vocab padded to a lane-dense multiple of 128
N_EMBED = 128
N_HEAD = 4
HEAD_SIZE = N_EMBED // N_HEAD
N_LAYER = 2
BLOCK_SIZE = 64          # max sequence length (positional table size)
LN_EPS = 1e-5            # PyTorch nn.LayerNorm default eps


def _layernorm(x, g, b):
    # PyTorch LayerNorm: biased variance, eps inside sqrt, affine.
    mu = jnp.mean(x, axis=-1, keepdims=True)
    var = jnp.mean((x - mu) ** 2, axis=-1, keepdims=True)
    return (x - mu) * lax.rsqrt(var + LN_EPS) * g + b


# --------------------------------------------------------------------------
# Fused kernel: grid loops over layers; activation x stays resident in a VMEM
# scratch (shape (B*T, C)); lm_head runs under pl.when at the last layer step.
# --------------------------------------------------------------------------
def _fused_kernel(B, T,
                  tok_ref, pos_ref,
                  ln1g_ref, ln1b_ref, wqkv_ref, wo_ref, bo_ref,
                  ln2g_ref, ln2b_ref, w1_ref, b1_ref, w2_ref, b2_ref,
                  lnfg_ref, lnfb_ref, hw_ref, hb_ref,
                  o_ref, x_scr, cat_scr):
    layer = pl.program_id(0)
    n_layers = pl.num_programs(0)
    C = N_EMBED
    hs = HEAD_SIZE
    scale = C ** (-0.5)        # reference module scales by n_embed**-0.5

    # ---- first grid step: x = tok_emb + pos_emb (pos broadcast over batch) ----
    @pl.when(layer == 0)
    def _():
        tok = tok_ref[...]                        # (B*T, C)
        pos = pos_ref[...]                        # (T, C)
        for b in range(B):
            x_scr[b * T:(b + 1) * T, :] = tok[b * T:(b + 1) * T, :] + pos

    x = x_scr[...]                                # (B*T, C) f32

    # ---- multi-head causal self-attention (pre-LN) ----
    xn = _layernorm(x, ln1g_ref[0], ln1b_ref[0])
    qkv = jnp.dot(xn.astype(jnp.bfloat16), wqkv_ref[0],
                  preferred_element_type=jnp.float32)          # (B*T, 3C)
    qkv = qkv.astype(jnp.bfloat16)

    row = lax.broadcasted_iota(jnp.int32, (T, T), 0)
    col = lax.broadcasted_iota(jnp.int32, (T, T), 1)
    causal = row >= col

    for b in range(B):                            # static loops: B*N_HEAD small mms
        qb = qkv[b * T:(b + 1) * T, 0 * C:1 * C]
        kb = qkv[b * T:(b + 1) * T, 1 * C:2 * C]
        vb = qkv[b * T:(b + 1) * T, 2 * C:3 * C]
        for h in range(N_HEAD):
            q = qb[:, h * hs:(h + 1) * hs]
            k = kb[:, h * hs:(h + 1) * hs]
            v = vb[:, h * hs:(h + 1) * hs]
            wei = jnp.dot(q, k.T, preferred_element_type=jnp.float32) * scale
            wei = jnp.where(causal, wei, -jnp.inf)
            wei = wei - jnp.max(wei, axis=-1, keepdims=True)
            p = jnp.exp(wei)
            p = p * pl.reciprocal(jnp.sum(p, axis=-1, keepdims=True), approx=True)
            out_h = jnp.dot(p.astype(jnp.bfloat16), v,
                            preferred_element_type=jnp.float32)     # (T, hs)
            cat_scr[b * T:(b + 1) * T, h * hs:(h + 1) * hs] = out_h

    # concat-over-heads followed by a single full-width output projection
    attn = jnp.dot(cat_scr[...].astype(jnp.bfloat16), wo_ref[0],
                   preferred_element_type=jnp.float32) + bo_ref[0]
    x = x + attn                                  # residual 1 (dropout = identity)

    # ---- feed-forward (pre-LN): Linear(C,4C) -> ReLU -> Linear(4C,C) ----
    xn2 = _layernorm(x, ln2g_ref[0], ln2b_ref[0])
    h1 = jnp.dot(xn2.astype(jnp.bfloat16), w1_ref[0],
                 preferred_element_type=jnp.float32) + b1_ref[0]
    h1 = jnp.maximum(h1, 0.0)
    ff = jnp.dot(h1.astype(jnp.bfloat16), w2_ref[0],
                 preferred_element_type=jnp.float32) + b2_ref[0]
    x = x + ff                                    # residual 2 (dropout = identity)
    x_scr[...] = x

    # ---- final LayerNorm + lm_head at the last layer step ----
    @pl.when(layer == n_layers - 1)
    def _():
        xf = _layernorm(x_scr[...], lnfg_ref[...], lnfb_ref[...])
        o_ref[...] = jnp.dot(xf.astype(jnp.bfloat16), hw_ref[...],
                             preferred_element_type=jnp.float32) + hb_ref[...]


def fused_forward(tok_flat, pos, kp, B, T):
    """tok_flat: (B*T, C) f32 token embeddings; returns padded logits (B*T, VPAD)."""
    BT = B * T
    C = N_EMBED
    L = kp["wqkv"].shape[0]

    def rep(shape):      # whole small array, same block every grid step
        return pl.BlockSpec(shape, lambda l: (0,) * len(shape))

    def per_layer(shape):  # pick layer l's slab; next layer's weights prefetch
        return pl.BlockSpec((1,) + shape[1:], lambda l: (l, 0, 0))

    in_specs = [
        rep((BT, C)),                 # tok
        rep((T, C)),                  # pos
        per_layer(kp["ln1_g"].shape),
        per_layer(kp["ln1_b"].shape),
        per_layer(kp["wqkv"].shape),
        per_layer(kp["wo"].shape),
        per_layer(kp["bo"].shape),
        per_layer(kp["ln2_g"].shape),
        per_layer(kp["ln2_b"].shape),
        per_layer(kp["w1"].shape),
        per_layer(kp["b1"].shape),
        per_layer(kp["w2"].shape),
        per_layer(kp["b2"].shape),
        rep(kp["lnf_g"].shape),
        rep(kp["lnf_b"].shape),
        rep(kp["head_w"].shape),
        rep(kp["head_b"].shape),
    ]

    return pl.pallas_call(
        functools.partial(_fused_kernel, B, T),
        out_shape=jax.ShapeDtypeStruct((BT, VPAD), jnp.float32),
        grid=(L,),
        in_specs=in_specs,
        out_specs=pl.BlockSpec((BT, VPAD), lambda l: (0, 0)),
        scratch_shapes=[
            pltpu.VMEM((BT, C), jnp.float32),     # resident activation x
            pltpu.VMEM((BT, C), jnp.float32),     # concat-of-heads buffer
        ],
        compiler_params=pltpu.CompilerParams(
            dimension_semantics=("arbitrary",)),  # layers are sequential
    )(tok_flat, pos,
      kp["ln1_g"], kp["ln1_b"], kp["wqkv"], kp["wo"], kp["bo"],
      kp["ln2_g"], kp["ln2_b"], kp["w1"], kp["b1"], kp["w2"], kp["b2"],
      kp["lnf_g"], kp["lnf_b"], kp["head_w"], kp["head_b"])


# --------------------------------------------------------------------------
# Parameter construction (deterministic, in-script). Matmul weights are
# pre-rounded to bf16-representable values so kernel and f32 reference share
# identical weights.
# --------------------------------------------------------------------------
def _round_bf16(x):
    return x.astype(jnp.bfloat16).astype(jnp.float32)


def init_params(key):
    keys = iter(jax.random.split(key, 4 + 4 * N_LAYER))
    nrm = lambda shp, s=0.02: _round_bf16(
        jax.random.normal(next(keys), shp, jnp.float32) * s)
    params = {
        "tok_emb": jax.random.normal(next(keys), (VOCAB, N_EMBED), jnp.float32) * 0.02,
        "pos_emb": jax.random.normal(next(keys), (BLOCK_SIZE, N_EMBED), jnp.float32) * 0.02,
        "ln_f_g": jnp.ones((1, N_EMBED), jnp.float32),
        "ln_f_b": jnp.zeros((1, N_EMBED), jnp.float32),
        "head_w": nrm((N_EMBED, VOCAB)),
        "head_b": jnp.zeros((1, VOCAB), jnp.float32),
        "blocks": [],
    }
    for _ in range(N_LAYER):
        blk = (
            jnp.ones((1, N_EMBED), jnp.float32),           # ln1 gamma
            jnp.zeros((1, N_EMBED), jnp.float32),          # ln1 beta
            nrm((N_EMBED, 3 * N_EMBED)),                   # Wqkv (heads on columns)
            nrm((N_EMBED, N_EMBED)),                       # proj W
            jnp.zeros((1, N_EMBED), jnp.float32),          # proj b
            jnp.ones((1, N_EMBED), jnp.float32),           # ln2 gamma
            jnp.zeros((1, N_EMBED), jnp.float32),          # ln2 beta
            nrm((N_EMBED, 4 * N_EMBED)),                   # ffn W1
            jnp.zeros((1, 4 * N_EMBED), jnp.float32),      # ffn b1
            nrm((4 * N_EMBED, N_EMBED)),                   # ffn W2
            jnp.zeros((1, N_EMBED), jnp.float32),          # ffn b2
        )
        params["blocks"].append(blk)
    return params


def prepare_kernel_params(params):
    """Stack per-layer weights along a leading layer axis; cast matmul weights
    to bf16; pad the vocab dim to VPAD (zero columns, sliced off in wrapper)."""
    stack = lambda i: jnp.stack([blk[i] for blk in params["blocks"]], axis=0)
    return {
        "ln1_g": stack(0), "ln1_b": stack(1),
        "wqkv": stack(2).astype(jnp.bfloat16),
        "wo": stack(3).astype(jnp.bfloat16),
        "bo": stack(4),
        "ln2_g": stack(5), "ln2_b": stack(6),
        "w1": stack(7).astype(jnp.bfloat16),
        "b1": stack(8),
        "w2": stack(9).astype(jnp.bfloat16),
        "b2": stack(10),
        "lnf_g": params["ln_f_g"], "lnf_b": params["ln_f_b"],
        "head_w": jnp.pad(params["head_w"],
                          ((0, 0), (0, VPAD - VOCAB))).astype(jnp.bfloat16),
        "head_b": jnp.pad(params["head_b"], ((0, 0), (0, VPAD - VOCAB))),
    }


@jax.jit
def forward(idx, params):
    """idx: int32 (B, T) token ids -> logits (B, T, VOCAB). (targets=None path)"""
    B, T = idx.shape
    kp = prepare_kernel_params(params)
    # TODO(synk): token-embedding gather kept as JAX glue (jnp.take); a scalar-
    # prefetch + pl.Element row-gather version is possible but not needed here.
    tok_flat = jnp.take(params["tok_emb"], idx.reshape(-1), axis=0)   # (B*T, C)
    pos = params["pos_emb"][:T]                                       # (T, C)
    logits_pad = fused_forward(tok_flat, pos, kp, B, T)               # (B*T, VPAD)
    return logits_pad.reshape(B, T, VPAD)[:, :, :VOCAB]
    # TODO(synk): on v7x (2 TensorCores) a grid=(B,) "parallel" variant could
    # shard batch across cores; here batch is folded into M=128 for MXU occupancy.


# --------------------------------------------------------------------------
# Pure-JAX f32 reference (sanity check of the kernel math)
# --------------------------------------------------------------------------
def forward_ref(idx, params):
    B, T = idx.shape
    x = jnp.take(params["tok_emb"], idx, axis=0) + params["pos_emb"][:T][None]
    mask = jnp.tril(jnp.ones((T, T), bool))
    scale = N_EMBED ** (-0.5)
    for (g1, b1, wqkv, wo, bo, g2, b2, w1, bb1, w2, bb2) in params["blocks"]:
        xn = _layernorm(x, g1, b1)
        q = xn @ wqkv[:, :N_EMBED]
        k = xn @ wqkv[:, N_EMBED:2 * N_EMBED]
        v = xn @ wqkv[:, 2 * N_EMBED:]
        outs = []
        for h in range(N_HEAD):
            sl = slice(h * HEAD_SIZE, (h + 1) * HEAD_SIZE)
            wei = jnp.einsum("btd,bsd->bts", q[..., sl], k[..., sl]) * scale
            wei = jnp.where(mask, wei, -jnp.inf)
            wei = jax.nn.softmax(wei, axis=-1)
            outs.append(jnp.einsum("bts,bsd->btd", wei, v[..., sl]))
        x = x + (jnp.concatenate(outs, axis=-1) @ wo + bo)
        xn2 = _layernorm(x, g2, b2)
        x = x + (jnp.maximum(xn2 @ w1 + bb1, 0.0) @ w2 + bb2)
    xn = _layernorm(x, params["ln_f_g"], params["ln_f_b"])
    return xn @ params["head_w"] + params["head_b"]


if __name__ == "__main__":
    key = jax.random.PRNGKey(0)
    pkey, ikey = jax.random.split(key)
    params = init_params(pkey)

    B, T = 2, BLOCK_SIZE
    idx = jax.random.randint(ikey, (B, T), 0, VOCAB, dtype=jnp.int32)

    logits = jax.block_until_ready(forward(idx, params))
    assert logits.shape == (B, T, VOCAB), logits.shape

    ref = jax.block_until_ready(forward_ref(idx, params))
    max_err = float(jnp.max(jnp.abs(logits - ref)))
    assert jnp.allclose(logits, ref, rtol=2e-2, atol=2e-2), max_err

    # TODO(synk): dropout (p=0.2) is stochastic in training mode; implemented as
    # identity here (eval-mode forward), and the targets/cross-entropy branch is
    # not computed (module returns loss=None when targets is None).
    print("KERNEL_OK")
</pallas_src>

<mosaic_0001>
module attributes {stable_mosaic.version = 11 : i64} {
  func.func @_fused_kernel(%arg0: i32, %arg1: memref<128x128xf32, #tpu.memory_space<vmem>>, %arg2: memref<64x128xf32, #tpu.memory_space<vmem>>, %arg3: memref<1x1x128xf32, #tpu.memory_space<vmem>>, %arg4: memref<1x1x128xf32, #tpu.memory_space<vmem>>, %arg5: memref<1x128x384xbf16, #tpu.memory_space<vmem>>, %arg6: memref<1x128x128xbf16, #tpu.memory_space<vmem>>, %arg7: memref<1x1x128xf32, #tpu.memory_space<vmem>>, %arg8: memref<1x1x128xf32, #tpu.memory_space<vmem>>, %arg9: memref<1x1x128xf32, #tpu.memory_space<vmem>>, %arg10: memref<1x128x512xbf16, #tpu.memory_space<vmem>>, %arg11: memref<1x1x512xf32, #tpu.memory_space<vmem>>, %arg12: memref<1x512x128xbf16, #tpu.memory_space<vmem>>, %arg13: memref<1x1x128xf32, #tpu.memory_space<vmem>>, %arg14: memref<1x128xf32, #tpu.memory_space<vmem>>, %arg15: memref<1x128xf32, #tpu.memory_space<vmem>>, %arg16: memref<128x128xbf16, #tpu.memory_space<vmem>>, %arg17: memref<1x128xf32, #tpu.memory_space<vmem>>, %arg18: memref<128x128xf32, #tpu.memory_space<vmem>>, %arg19: memref<128x128xf32, #tpu.memory_space<vmem>>, %arg20: memref<128x128xf32, #tpu.memory_space<vmem>>) attributes {dimension_semantics = [#tpu.dimension_semantics<arbitrary>], iteration_bounds = array<i64: 2>, scalar_prefetch = 0 : i64, scratch_operands = 2 : i64, tpu.core_type = #tpu.core_type<tc>, window_params = [{pipeline_mode = #tpu.pipeline_mode<synchronous>, transform_indices = @transform_0, window_bounds = array<i64: 128, 128>}, {pipeline_mode = #tpu.pipeline_mode<synchronous>, transform_indices = @transform_1, window_bounds = array<i64: 64, 128>}, {transform_indices = @transform_2, window_bounds = array<i64: 1, 1, 128>}, {transform_indices = @transform_3, window_bounds = array<i64: 1, 1, 128>}, {transform_indices = @transform_4, window_bounds = array<i64: 1, 128, 384>}, {transform_indices = @transform_5, window_bounds = array<i64: 1, 128, 128>}, {transform_indices = @transform_6, window_bounds = array<i64: 1, 1, 128>}, {transform_indices = @transform_7, window_bounds = array<i64: 1, 1, 128>}, {transform_indices = @transform_8, window_bounds = array<i64: 1, 1, 128>}, {transform_indices = @transform_9, window_bounds = array<i64: 1, 128, 512>}, {transform_indices = @transform_10, window_bounds = array<i64: 1, 1, 512>}, {transform_indices = @transform_11, window_bounds = array<i64: 1, 512, 128>}, {transform_indices = @transform_12, window_bounds = array<i64: 1, 1, 128>}, {pipeline_mode = #tpu.pipeline_mode<synchronous>, transform_indices = @transform_13, window_bounds = array<i64: 1, 128>}, {pipeline_mode = #tpu.pipeline_mode<synchronous>, transform_indices = @transform_14, window_bounds = array<i64: 1, 128>}, {pipeline_mode = #tpu.pipeline_mode<synchronous>, transform_indices = @transform_15, window_bounds = array<i64: 128, 128>}, {pipeline_mode = #tpu.pipeline_mode<synchronous>, transform_indices = @transform_16, window_bounds = array<i64: 1, 128>}, {pipeline_mode = #tpu.pipeline_mode<synchronous>, transform_indices = @transform_17, window_bounds = array<i64: 128, 128>}]} {
    %c0_i32 = arith.constant 0 : i32
    %0 = arith.cmpi eq, %arg0, %c0_i32 : i32
    %1 = arith.extui %0 : i1 to i32
    %c0_i32_0 = arith.constant 0 : i32
    %2 = arith.cmpi ne, %1, %c0_i32_0 : i32
    scf.if %2 {
      %c0_115 = arith.constant 0 : index
      %c0_116 = arith.constant 0 : index
      %279 = vector.load %arg1[%c0_115, %c0_116] : memref<128x128xf32, #tpu.memory_space<vmem>>, vector<128x128xf32>
      %c0_117 = arith.constant 0 : index
      %c0_118 = arith.constant 0 : index
      %280 = vector.load %arg2[%c0_117, %c0_118] : memref<64x128xf32, #tpu.memory_space<vmem>>, vector<64x128xf32>
      %281 = vector.extract_strided_slice %279 {offsets = [0, 0], sizes = [64, 128], strides = [1, 1]} : vector<128x128xf32> to vector<64x128xf32>
      %282 = arith.addf %281, %280 : vector<64x128xf32>
      %c0_119 = arith.constant 0 : index
      %c0_120 = arith.constant 0 : index
      %283 = vector.load %arg19[%c0_119, %c0_120] : memref<128x128xf32, #tpu.memory_space<vmem>>, vector<64x128xf32>
      tpu.vector_store %arg19[%c0_119, %c0_120], %282 {strides = array<i32>} : memref<128x128xf32, #tpu.memory_space<vmem>>, vector<64x128xf32>,
      %284 = vector.extract_strided_slice %279 {offsets = [64, 0], sizes = [64, 128], strides = [1, 1]} : vector<128x128xf32> to vector<64x128xf32>
      %285 = arith.addf %284, %280 : vector<64x128xf32>
      %c64_121 = arith.constant 64 : index
      %c0_122 = arith.constant 0 : index
      %286 = vector.load %arg19[%c64_121, %c0_122] : memref<128x128xf32, #tpu.memory_space<vmem>>, vector<64x128xf32>
      tpu.vector_store %arg19[%c64_121, %c0_122], %285 {strides = array<i32>} : memref<128x128xf32, #tpu.memory_space<vmem>>, vector<64x128xf32>,
    } else {
    }
    %c0 = arith.constant 0 : index
    %c0_1 = arith.constant 0 : index
    %3 = vector.load %arg19[%c0, %c0_1] : memref<128x128xf32, #tpu.memory_space<vmem>>, vector<128x128xf32>
    %c0_2 = arith.constant 0 : index
    %c0_3 = arith.constant 0 : index
    %c0_4 = arith.constant 0 : index
    %4 = vector.load %arg3[%c0_2, %c0_3, %c0_4] : memref<1x1x128xf32, #tpu.memory_space<vmem>>, vector<1x1x128xf32>
    %5 = vector.shape_cast %4 : vector<1x1x128xf32> to vector<1x128xf32>
    %c0_5 = arith.constant 0 : index
    %c0_6 = arith.constant 0 : index
    %c0_7 = arith.constant 0 : index
    %6 = vector.load %arg4[%c0_5, %c0_6, %c0_7] : memref<1x1x128xf32, #tpu.memory_space<vmem>>, vector<1x1x128xf32>
    %7 = vector.shape_cast %6 : vector<1x1x128xf32> to vector<1x128xf32>
    %cst = arith.constant dense<0.000000e+00> : vector<128xf32>
    %8 = vector.multi_reduction <add>, %3, %cst [1] : vector<128x128xf32> to vector<128xf32>
    %9 = vector.shape_cast %8 : vector<128xf32> to vector<128x1xf32>
    %cst_8 = arith.constant 1.280000e+02 : f32
    %10 = vector.broadcast %cst_8 : f32 to vector<128x1xf32>
    %11 = arith.divf %9, %10 : vector<128x1xf32>
    %12 = vector.broadcast %11 : vector<128x1xf32> to vector<128x128xf32>
    %13 = arith.subf %3, %12 : vector<128x128xf32>
    %14 = arith.mulf %13, %13 : vector<128x128xf32>
    %cst_9 = arith.constant dense<0.000000e+00> : vector<128xf32>
    %15 = vector.multi_reduction <add>, %14, %cst_9 [1] : vector<128x128xf32> to vector<128xf32>
    %16 = vector.shape_cast %15 : vector<128xf32> to vector<128x1xf32>
    %cst_10 = arith.constant 1.280000e+02 : f32
    %17 = vector.broadcast %cst_10 : f32 to vector<128x1xf32>
    %18 = arith.divf %16, %17 : vector<128x1xf32>
    %19 = vector.broadcast %11 : vector<128x1xf32> to vector<128x128xf32>
    %20 = arith.subf %3, %19 : vector<128x128xf32>
    %cst_11 = arith.constant 9.99999974E-6 : f32
    %21 = vector.broadcast %cst_11 : f32 to vector<128x1xf32>
    %22 = arith.addf %18, %21 : vector<128x1xf32>
    %23 = math.rsqrt %22 : vector<128x1xf32>
    %24 = vector.broadcast %23 : vector<128x1xf32> to vector<128x128xf32>
    %25 = arith.mulf %20, %24 : vector<128x128xf32>
    %26 = vector.broadcast %5 : vector<1x128xf32> to vector<128x128xf32>
    %27 = arith.mulf %25, %26 : vector<128x128xf32>
    %28 = vector.broadcast %7 : vector<1x128xf32> to vector<128x128xf32>
    %29 = arith.addf %27, %28 : vector<128x128xf32>
    %30 = arith.truncf %29 : vector<128x128xf32> to vector<128x128xbf16>
    %c0_12 = arith.constant 0 : index
    %c0_13 = arith.constant 0 : index
    %c0_14 = arith.constant 0 : index
    %31 = vector.load %arg5[%c0_12, %c0_13, %c0_14] : memref<1x128x384xbf16, #tpu.memory_space<vmem>>, vector<1x128x384xbf16>
    %32 = vector.shape_cast %31 : vector<1x128x384xbf16> to vector<128x384xbf16>
    %cst_15 = arith.constant dense<0.000000e+00> : vector<128x384xf32>
    %33 = tpu.matmul %30, %32, %cst_15 {dimension_numbers = #tpu.dot_dimension_numbers<[1], [0], [0], [1], [0, 0, 1, 1], [], []>} : vector<128x128xbf16>, vector<128x384xbf16>, vector<128x384xf32> -> vector<128x384xf32>
    %34 = arith.truncf %33 : vector<128x384xf32> to vector<128x384xbf16>
    %35 = tpu.iota {dimensions = array<i32: 0>} : vector<64x64xi32>
    %36 = tpu.iota {dimensions = array<i32: 1>} : vector<64x64xi32>
    %37 = arith.cmpi sge, %35, %36 : vector<64x64xi32>
    %38 = vector.extract_strided_slice %34 {offsets = [0, 0], sizes = [64, 128], strides = [1, 1]} : vector<128x384xbf16> to vector<64x128xbf16>
    %39 = vector.extract_strided_slice %34 {offsets = [0, 128], sizes = [64, 128], strides = [1, 1]} : vector<128x384xbf16> to vector<64x128xbf16>
    %40 = vector.extract_strided_slice %34 {offsets = [0, 256], sizes = [64, 128], strides = [1, 1]} : vector<128x384xbf16> to vector<64x128xbf16>
    %41 = vector.extract_strided_slice %38 {offsets = [0, 0], sizes = [64, 32], strides = [1, 1]} : vector<64x128xbf16> to vector<64x32xbf16>
    %42 = vector.extract_strided_slice %39 {offsets = [0, 0], sizes = [64, 32], strides = [1, 1]} : vector<64x128xbf16> to vector<64x32xbf16>
    %43 = vector.extract_strided_slice %40 {offsets = [0, 0], sizes = [64, 32], strides = [1, 1]} : vector<64x128xbf16> to vector<64x32xbf16>
    %44 = tpu.transpose %42, [1, 0] : vector<64x32xbf16> -> vector<32x64xbf16>
    %cst_16 = arith.constant dense<0.000000e+00> : vector<64x64xf32>
    %45 = tpu.matmul %41, %44, %cst_16 {dimension_numbers = #tpu.dot_dimension_numbers<[1], [0], [0], [1], [0, 0, 1, 1], [], []>} : vector<64x32xbf16>, vector<32x64xbf16>, vector<64x64xf32> -> vector<64x64xf32>
    %cst_17 = arith.constant 0.0883883461 : f32
    %46 = vector.broadcast %cst_17 : f32 to vector<64x64xf32>
    %47 = arith.mulf %45, %46 : vector<64x64xf32>
    %cst_18 = arith.constant 0xFF800000 : f32
    %48 = vector.broadcast %cst_18 : f32 to vector<64x64xf32>
    %49 = arith.select %37, %47, %48 : vector<64x64xi1>, vector<64x64xf32>
    %cst_19 = arith.constant dense<0xFF800000> : vector<64xf32>
    %50 = vector.multi_reduction <maximumf>, %49, %cst_19 [1] : vector<64x64xf32> to vector<64xf32>
    %51 = vector.shape_cast %50 : vector<64xf32> to vector<64x1xf32>
    %52 = vector.broadcast %51 : vector<64x1xf32> to vector<64x64xf32>
    %53 = arith.subf %49, %52 : vector<64x64xf32>
    %54 = math.exp %53 : vector<64x64xf32>
    %cst_20 = arith.constant dense<0.000000e+00> : vector<64xf32>
    %55 = vector.multi_reduction <add>, %54, %cst_20 [1] : vector<64x64xf32> to vector<64xf32>
    %56 = vector.shape_cast %55 : vector<64xf32> to vector<64x1xf32>
    %57 = tpu.reciprocal %56 {approx = true} : vector<64x1xf32> -> vector<64x1xf32>
    %58 = vector.broadcast %57 : vector<64x1xf32> to vector<64x64xf32>
    %59 = arith.mulf %54, %58 : vector<64x64xf32>
    %60 = arith.truncf %59 : vector<64x64xf32> to vector<64x64xbf16>
    %cst_21 = arith.constant dense<0.000000e+00> : vector<64x32xf32>
    %61 = tpu.matmul %60, %43, %cst_21 {dimension_numbers = #tpu.dot_dimension_numbers<[1], [0], [0], [1], [0, 0, 1, 1], [], []>} : vector<64x64xbf16>, vector<64x32xbf16>, vector<64x32xf32> -> vector<64x32xf32>
    %c0_22 = arith.constant 0 : index
    %c0_23 = arith.constant 0 : index
    %62 = vector.load %arg20[%c0_22, %c0_23] : memref<128x128xf32, #tpu.memory_space<vmem>>, vector<64x32xf32>
    tpu.vector_store %arg20[%c0_22, %c0_23], %61 {strides = array<i32>} : memref<128x128xf32, #tpu.memory_space<vmem>>, vector<64x32xf32>,
    %63 = vector.extract_strided_slice %38 {offsets = [0, 32], sizes = [64, 32], strides = [1, 1]} : vector<64x128xbf16> to vector<64x32xbf16>
    %64 = vector.extract_strided_slice %39 {offsets = [0, 32], sizes = [64, 32], strides = [1, 1]} : vector<64x128xbf16> to vector<64x32xbf16>
    %65 = vector.extract_strided_slice %40 {offsets = [0, 32], sizes = [64, 32], strides = [1, 1]} : vector<64x128xbf16> to vector<64x32xbf16>
    %66 = tpu.transpose %64, [1, 0] : vector<64x32xbf16> -> vector<32x64xbf16>
    %cst_24 = arith.constant dense<0.000000e+00> : vector<64x64xf32>
    %67 = tpu.matmul %63, %66, %cst_24 {dimension_numbers = #tpu.dot_dimension_numbers<[1], [0], [0], [1], [0, 0, 1, 1], [], []>} : vector<64x32xbf16>, vector<32x64xbf16>, vector<64x64xf32> -> vector<64x64xf32>
    %cst_25 = arith.constant 0.0883883461 : f32
    %68 = vector.broadcast %cst_25 : f32 to vector<64x64xf32>
    %69 = arith.mulf %67, %68 : vector<64x64xf32>
    %cst_26 = arith.constant 0xFF800000 : f32
    %70 = vector.broadcast %cst_26 : f32 to vector<64x64xf32>
    %71 = arith.select %37, %69, %70 : vector<64x64xi1>, vector<64x64xf32>
    %cst_27 = arith.constant dense<0xFF800000> : vector<64xf32>
    %72 = vector.multi_reduction <maximumf>, %71, %cst_27 [1] : vector<64x64xf32> to vector<64xf32>
    %73 = vector.shape_cast %72 : vector<64xf32> to vector<64x1xf32>
    %74 = vector.broadcast %73 : vector<64x1xf32> to vector<64x64xf32>
    %75 = arith.subf %71, %74 : vector<64x64xf32>
    %76 = math.exp %75 : vector<64x64xf32>
    %cst_28 = arith.constant dense<0.000000e+00> : vector<64xf32>
    %77 = vector.multi_reduction <add>, %76, %cst_28 [1] : vector<64x64xf32> to vector<64xf32>
    %78 = vector.shape_cast %77 : vector<64xf32> to vector<64x1xf32>
    %79 = tpu.reciprocal %78 {approx = true} : vector<64x1xf32> -> vector<64x1xf32>
    %80 = vector.broadcast %79 : vector<64x1xf32> to vector<64x64xf32>
    %81 = arith.mulf %76, %80 : vector<64x64xf32>
    %82 = arith.truncf %81 : vector<64x64xf32> to vector<64x64xbf16>
    %cst_29 = arith.constant dense<0.000000e+00> : vector<64x32xf32>
    %83 = tpu.matmul %82, %65, %cst_29 {dimension_numbers = #tpu.dot_dimension_numbers<[1], [0], [0], [1], [0, 0, 1, 1], [], []>} : vector<64x64xbf16>, vector<64x32xbf16>, vector<64x32xf32> -> vector<64x32xf32>
    %c0_30 = arith.constant 0 : index
    %c32 = arith.constant 32 : index
    %84 = vector.load %arg20[%c0_30, %c32] : memref<128x128xf32, #tpu.memory_space<vmem>>, vector<64x32xf32>
    tpu.vector_store %arg20[%c0_30, %c32], %83 {strides = array<i32>} : memref<128x128xf32, #tpu.memory_space<vmem>>, vector<64x32xf32>,
    %85 = vector.extract_strided_slice %38 {offsets = [0, 64], sizes = [64, 32], strides = [1, 1]} : vector<64x128xbf16> to vector<64x32xbf16>
    %86 = vector.extract_strided_slice %39 {offsets = [0, 64], sizes = [64, 32], strides = [1, 1]} : vector<64x128xbf16> to vector<64x32xbf16>
    %87 = vector.extract_strided_slice %40 {offsets = [0, 64], sizes = [64, 32], strides = [1, 1]} : vector<64x128xbf16> to vector<64x32xbf16>
    %88 = tpu.transpose %86, [1, 0] : vector<64x32xbf16> -> vector<32x64xbf16>
    %cst_31 = arith.constant dense<0.000000e+00> : vector<64x64xf32>
    %89 = tpu.matmul %85, %88, %cst_31 {dimension_numbers = #tpu.dot_dimension_numbers<[1], [0], [0], [1], [0, 0, 1, 1], [], []>} : vector<64x32xbf16>, vector<32x64xbf16>, vector<64x64xf32> -> vector<64x64xf32>
    %cst_32 = arith.constant 0.0883883461 : f32
    %90 = vector.broadcast %cst_32 : f32 to vector<64x64xf32>
    %91 = arith.mulf %89, %90 : vector<64x64xf32>
    %cst_33 = arith.constant 0xFF800000 : f32
    %92 = vector.broadcast %cst_33 : f32 to vector<64x64xf32>
    %93 = arith.select %37, %91, %92 : vector<64x64xi1>, vector<64x64xf32>
    %cst_34 = arith.constant dense<0xFF800000> : vector<64xf32>
    %94 = vector.multi_reduction <maximumf>, %93, %cst_34 [1] : vector<64x64xf32> to vector<64xf32>
    %95 = vector.shape_cast %94 : vector<64xf32> to vector<64x1xf32>
    %96 = vector.broadcast %95 : vector<64x1xf32> to vector<64x64xf32>
    %97 = arith.subf %93, %96 : vector<64x64xf32>
    %98 = math.exp %97 : vector<64x64xf32>
    %cst_35 = arith.constant dense<0.000000e+00> : vector<64xf32>
    %99 = vector.multi_reduction <add>, %98, %cst_35 [1] : vector<64x64xf32> to vector<64xf32>
    %100 = vector.shape_cast %99 : vector<64xf32> to vector<64x1xf32>
    %101 = tpu.reciprocal %100 {approx = true} : vector<64x1xf32> -> vector<64x1xf32>
    %102 = vector.broadcast %101 : vector<64x1xf32> to vector<64x64xf32>
    %103 = arith.mulf %98, %102 : vector<64x64xf32>
    %104 = arith.truncf %103 : vector<64x64xf32> to vector<64x64xbf16>
    %cst_36 = arith.constant dense<0.000000e+00> : vector<64x32xf32>
    %105 = tpu.matmul %104, %87, %cst_36 {dimension_numbers = #tpu.dot_dimension_numbers<[1], [0], [0], [1], [0, 0, 1, 1], [], []>} : vector<64x64xbf16>, vector<64x32xbf16>, vector<64x32xf32> -> vector<64x32xf32>
    %c0_37 = arith.constant 0 : index
    %c64 = arith.constant 64 : index
    %106 = vector.load %arg20[%c0_37, %c64] : memref<128x128xf32, #tpu.memory_space<vmem>>, vector<64x32xf32>
    tpu.vector_store %arg20[%c0_37, %c64], %105 {strides = array<i32>} : memref<128x128xf32, #tpu.memory_space<vmem>>, vector<64x32xf32>,
    %107 = vector.extract_strided_slice %38 {offsets = [0, 96], sizes = [64, 32], strides = [1, 1]} : vector<64x128xbf16> to vector<64x32xbf16>
    %108 = vector.extract_strided_slice %39 {offsets = [0, 96], sizes = [64, 32], strides = [1, 1]} : vector<64x128xbf16> to vector<64x32xbf16>
    %109 = vector.extract_strided_slice %40 {offsets = [0, 96], sizes = [64, 32], strides = [1, 1]} : vector<64x128xbf16> to vector<64x32xbf16>
    %110 = tpu.transpose %108, [1, 0] : vector<64x32xbf16> -> vector<32x64xbf16>
    %cst_38 = arith.constant dense<0.000000e+00> : vector<64x64xf32>
    %111 = tpu.matmul %107, %110, %cst_38 {dimension_numbers = #tpu.dot_dimension_numbers<[1], [0], [0], [1], [0, 0, 1, 1], [], []>} : vector<64x32xbf16>, vector<32x64xbf16>, vector<64x64xf32> -> vector<64x64xf32>
    %cst_39 = arith.constant 0.0883883461 : f32
    %112 = vector.broadcast %cst_39 : f32 to vector<64x64xf32>
    %113 = arith.mulf %111, %112 : vector<64x64xf32>
    %cst_40 = arith.constant 0xFF800000 : f32
    %114 = vector.broadcast %cst_40 : f32 to vector<64x64xf32>
    %115 = arith.select %37, %113, %114 : vector<64x64xi1>, vector<64x64xf32>
    %cst_41 = arith.constant dense<0xFF800000> : vector<64xf32>
    %116 = vector.multi_reduction <maximumf>, %115, %cst_41 [1] : vector<64x64xf32> to vector<64xf32>
    %117 = vector.shape_cast %116 : vector<64xf32> to vector<64x1xf32>
    %118 = vector.broadcast %117 : vector<64x1xf32> to vector<64x64xf32>
    %119 = arith.subf %115, %118 : vector<64x64xf32>
    %120 = math.exp %119 : vector<64x64xf32>
    %cst_42 = arith.constant dense<0.000000e+00> : vector<64xf32>
    %121 = vector.multi_reduction <add>, %120, %cst_42 [1] : vector<64x64xf32> to vector<64xf32>
    %122 = vector.shape_cast %121 : vector<64xf32> to vector<64x1xf32>
    %123 = tpu.reciprocal %122 {approx = true} : vector<64x1xf32> -> vector<64x1xf32>
    %124 = vector.broadcast %123 : vector<64x1xf32> to vector<64x64xf32>
    %125 = arith.mulf %120, %124 : vector<64x64xf32>
    %126 = arith.truncf %125 : vector<64x64xf32> to vector<64x64xbf16>
    %cst_43 = arith.constant dense<0.000000e+00> : vector<64x32xf32>
    %127 = tpu.matmul %126, %109, %cst_43 {dimension_numbers = #tpu.dot_dimension_numbers<[1], [0], [0], [1], [0, 0, 1, 1], [], []>} : vector<64x64xbf16>, vector<64x32xbf16>, vector<64x32xf32> -> vector<64x32xf32>
    %c0_44 = arith.constant 0 : index
    %c96 = arith.constant 96 : index
    %128 = vector.load %arg20[%c0_44, %c96] : memref<128x128xf32, #tpu.memory_space<vmem>>, vector<64x32xf32>
    tpu.vector_store %arg20[%c0_44, %c96], %127 {strides = array<i32>} : memref<128x128xf32, #tpu.memory_space<vmem>>, vector<64x32xf32>,
    %129 = vector.extract_strided_slice %34 {offsets = [64, 0], sizes = [64, 128], strides = [1, 1]} : vector<128x384xbf16> to vector<64x128xbf16>
    %130 = vector.extract_strided_slice %34 {offsets = [64, 128], sizes = [64, 128], strides = [1, 1]} : vector<128x384xbf16> to vector<64x128xbf16>
    %131 = vector.extract_strided_slice %34 {offsets = [64, 256], sizes = [64, 128], strides = [1, 1]} : vector<128x384xbf16> to vector<64x128xbf16>
    %132 = vector.extract_strided_slice %129 {offsets = [0, 0], sizes = [64, 32], strides = [1, 1]} : vector<64x128xbf16> to vector<64x32xbf16>
    %133 = vector.extract_strided_slice %130 {offsets = [0, 0], sizes = [64, 32], strides = [1, 1]} : vector<64x128xbf16> to vector<64x32xbf16>
    %134 = vector.extract_strided_slice %131 {offsets = [0, 0], sizes = [64, 32], strides = [1, 1]} : vector<64x128xbf16> to vector<64x32xbf16>
    %135 = tpu.transpose %133, [1, 0] : vector<64x32xbf16> -> vector<32x64xbf16>
    %cst_45 = arith.constant dense<0.000000e+00> : vector<64x64xf32>
    %136 = tpu.matmul %132, %135, %cst_45 {dimension_numbers = #tpu.dot_dimension_numbers<[1], [0], [0], [1], [0, 0, 1, 1], [], []>} : vector<64x32xbf16>, vector<32x64xbf16>, vector<64x64xf32> -> vector<64x64xf32>
    %cst_46 = arith.constant 0.0883883461 : f32
    %137 = vector.broadcast %cst_46 : f32 to vector<64x64xf32>
    %138 = arith.mulf %136, %137 : vector<64x64xf32>
    %cst_47 = arith.constant 0xFF800000 : f32
    %139 = vector.broadcast %cst_47 : f32 to vector<64x64xf32>
    %140 = arith.select %37, %138, %139 : vector<64x64xi1>, vector<64x64xf32>
    %cst_48 = arith.constant dense<0xFF800000> : vector<64xf32>
    %141 = vector.multi_reduction <maximumf>, %140, %cst_48 [1] : vector<64x64xf32> to vector<64xf32>
    %142 = vector.shape_cast %141 : vector<64xf32> to vector<64x1xf32>
    %143 = vector.broadcast %142 : vector<64x1xf32> to vector<64x64xf32>
    %144 = arith.subf %140, %143 : vector<64x64xf32>
    %145 = math.exp %144 : vector<64x64xf32>
    %cst_49 = arith.constant dense<0.000000e+00> : vector<64xf32>
    %146 = vector.multi_reduction <add>, %145, %cst_49 [1] : vector<64x64xf32> to vector<64xf32>
    %147 = vector.shape_cast %146 : vector<64xf32> to vector<64x1xf32>
    %148 = tpu.reciprocal %147 {approx = true} : vector<64x1xf32> -> vector<64x1xf32>
    %149 = vector.broadcast %148 : vector<64x1xf32> to vector<64x64xf32>
    %150 = arith.mulf %145, %149 : vector<64x64xf32>
    %151 = arith.truncf %150 : vector<64x64xf32> to vector<64x64xbf16>
    %cst_50 = arith.constant dense<0.000000e+00> : vector<64x32xf32>
    %152 = tpu.matmul %151, %134, %cst_50 {dimension_numbers = #tpu.dot_dimension_numbers<[1], [0], [0], [1], [0, 0, 1, 1], [], []>} : vector<64x64xbf16>, vector<64x32xbf16>, vector<64x32xf32> -> vector<64x32xf32>
    %c64_51 = arith.constant 64 : index
    %c0_52 = arith.constant 0 : index
    %153 = vector.load %arg20[%c64_51, %c0_52] : memref<128x128xf32, #tpu.memory_space<vmem>>, vector<64x32xf32>
    tpu.vector_store %arg20[%c64_51, %c0_52], %152 {strides = array<i32>} : memref<128x128xf32, #tpu.memory_space<vmem>>, vector<64x32xf32>,
    %154 = vector.extract_strided_slice %129 {offsets = [0, 32], sizes = [64, 32], strides = [1, 1]} : vector<64x128xbf16> to vector<64x32xbf16>
    %155 = vector.extract_strided_slice %130 {offsets = [0, 32], sizes = [64, 32], strides = [1, 1]} : vector<64x128xbf16> to vector<64x32xbf16>
    %156 = vector.extract_strided_slice %131 {offsets = [0, 32], sizes = [64, 32], strides = [1, 1]} : vector<64x128xbf16> to vector<64x32xbf16>
    %157 = tpu.transpose %155, [1, 0] : vector<64x32xbf16> -> vector<32x64xbf16>
    %cst_53 = arith.constant dense<0.000000e+00> : vector<64x64xf32>
    %158 = tpu.matmul %154, %157, %cst_53 {dimension_numbers = #tpu.dot_dimension_numbers<[1], [0], [0], [1], [0, 0, 1, 1], [], []>} : vector<64x32xbf16>, vector<32x64xbf16>, vector<64x64xf32> -> vector<64x64xf32>
    %cst_54 = arith.constant 0.0883883461 : f32
    %159 = vector.broadcast %cst_54 : f32 to vector<64x64xf32>
    %160 = arith.mulf %158, %159 : vector<64x64xf32>
    %cst_55 = arith.constant 0xFF800000 : f32
    %161 = vector.broadcast %cst_55 : f32 to vector<64x64xf32>
    %162 = arith.select %37, %160, %161 : vector<64x64xi1>, vector<64x64xf32>
    %cst_56 = arith.constant dense<0xFF800000> : vector<64xf32>
    %163 = vector.multi_reduction <maximumf>, %162, %cst_56 [1] : vector<64x64xf32> to vector<64xf32>
    %164 = vector.shape_cast %163 : vector<64xf32> to vector<64x1xf32>
    %165 = vector.broadcast %164 : vector<64x1xf32> to vector<64x64xf32>
    %166 = arith.subf %162, %165 : vector<64x64xf32>
    %167 = math.exp %166 : vector<64x64xf32>
    %cst_57 = arith.constant dense<0.000000e+00> : vector<64xf32>
    %168 = vector.multi_reduction <add>, %167, %cst_57 [1] : vector<64x64xf32> to vector<64xf32>
    %169 = vector.shape_cast %168 : vector<64xf32> to vector<64x1xf32>
    %170 = tpu.reciprocal %169 {approx = true} : vector<64x1xf32> -> vector<64x1xf32>
    %171 = vector.broadcast %170 : vector<64x1xf32> to vector<64x64xf32>
    %172 = arith.mulf %167, %171 : vector<64x64xf32>
    %173 = arith.truncf %172 : vector<64x64xf32> to vector<64x64xbf16>
    %cst_58 = arith.constant dense<0.000000e+00> : vector<64x32xf32>
    %174 = tpu.matmul %173, %156, %cst_58 {dimension_numbers = #tpu.dot_dimension_numbers<[1], [0], [0], [1], [0, 0, 1, 1], [], []>} : vector<64x64xbf16>, vector<64x32xbf16>, vector<64x32xf32> -> vector<64x32xf32>
    %c64_59 = arith.constant 64 : index
    %c32_60 = arith.constant 32 : index
    %175 = vector.load %arg20[%c64_59, %c32_60] : memref<128x128xf32, #tpu.memory_space<vmem>>, vector<64x32xf32>
    tpu.vector_store %arg20[%c64_59, %c32_60], %174 {strides = array<i32>} : memref<128x128xf32, #tpu.memory_space<vmem>>, vector<64x32xf32>,
    %176 = vector.extract_strided_slice %129 {offsets = [0, 64], sizes = [64, 32], strides = [1, 1]} : vector<64x128xbf16> to vector<64x32xbf16>
    %177 = vector.extract_strided_slice %130 {offsets = [0, 64], sizes = [64, 32], strides = [1, 1]} : vector<64x128xbf16> to vector<64x32xbf16>
    %178 = vector.extract_strided_slice %131 {offsets = [0, 64], sizes = [64, 32], strides = [1, 1]} : vector<64x128xbf16> to vector<64x32xbf16>
    %179 = tpu.transpose %177, [1, 0] : vector<64x32xbf16> -> vector<32x64xbf16>
    %cst_61 = arith.constant dense<0.000000e+00> : vector<64x64xf32>
    %180 = tpu.matmul %176, %179, %cst_61 {dimension_numbers = #tpu.dot_dimension_numbers<[1], [0], [0], [1], [0, 0, 1, 1], [], []>} : vector<64x32xbf16>, vector<32x64xbf16>, vector<64x64xf32> -> vector<64x64xf32>
    %cst_62 = arith.constant 0.0883883461 : f32
    %181 = vector.broadcast %cst_62 : f32 to vector<64x64xf32>
    %182 = arith.mulf %180, %181 : vector<64x64xf32>
    %cst_63 = arith.constant 0xFF800000 : f32
    %183 = vector.broadcast %cst_63 : f32 to vector<64x64xf32>
    %184 = arith.select %37, %182, %183 : vector<64x64xi1>, vector<64x64xf32>
    %cst_64 = arith.constant dense<0xFF800000> : vector<64xf32>
    %185 = vector.multi_reduction <maximumf>, %184, %cst_64 [1] : vector<64x64xf32> to vector<64xf32>
    %186 = vector.shape_cast %185 : vector<64xf32> to vector<64x1xf32>
    %187 = vector.broadcast %186 : vector<64x1xf32> to vector<64x64xf32>
    %188 = arith.subf %184, %187 : vector<64x64xf32>
    %189 = math.exp %188 : vector<64x64xf32>
    %cst_65 = arith.constant dense<0.000000e+00> : vector<64xf32>
    %190 = vector.multi_reduction <add>, %189, %cst_65 [1] : vector<64x64xf32> to vector<64xf32>
    %191 = vector.shape_cast %190 : vector<64xf32> to vector<64x1xf32>
    %192 = tpu.reciprocal %191 {approx = true} : vector<64x1xf32> -> vector<64x1xf32>
    %193 = vector.broadcast %192 : vector<64x1xf32> to vector<64x64xf32>
    %194 = arith.mulf %189, %193 : vector<64x64xf32>
    %195 = arith.truncf %194 : vector<64x64xf32> to vector<64x64xbf16>
    %cst_66 = arith.constant dense<0.000000e+00> : vector<64x32xf32>
    %196 = tpu.matmul %195, %178, %cst_66 {dimension_numbers = #tpu.dot_dimension_numbers<[1], [0], [0], [1], [0, 0, 1, 1], [], []>} : vector<64x64xbf16>, vector<64x32xbf16>, vector<64x32xf32> -> vector<64x32xf32>
    %c64_67 = arith.constant 64 : index
    %c64_68 = arith.constant 64 : index
    %197 = vector.load %arg20[%c64_67, %c64_68] : memref<128x128xf32, #tpu.memory_space<vmem>>, vector<64x32xf32>
    tpu.vector_store %arg20[%c64_67, %c64_68], %196 {strides = array<i32>} : memref<128x128xf32, #tpu.memory_space<vmem>>, vector<64x32xf32>,
    %198 = vector.extract_strided_slice %129 {offsets = [0, 96], sizes = [64, 32], strides = [1, 1]} : vector<64x128xbf16> to vector<64x32xbf16>
    %199 = vector.extract_strided_slice %130 {offsets = [0, 96], sizes = [64, 32], strides = [1, 1]} : vector<64x128xbf16> to vector<64x32xbf16>
    %200 = vector.extract_strided_slice %131 {offsets = [0, 96], sizes = [64, 32], strides = [1, 1]} : vector<64x128xbf16> to vector<64x32xbf16>
    %201 = tpu.transpose %199, [1, 0] : vector<64x32xbf16> -> vector<32x64xbf16>
    %cst_69 = arith.constant dense<0.000000e+00> : vector<64x64xf32>
    %202 = tpu.matmul %198, %201, %cst_69 {dimension_numbers = #tpu.dot_dimension_numbers<[1], [0], [0], [1], [0, 0, 1, 1], [], []>} : vector<64x32xbf16>, vector<32x64xbf16>, vector<64x64xf32> -> vector<64x64xf32>
    %cst_70 = arith.constant 0.0883883461 : f32
    %203 = vector.broadcast %cst_70 : f32 to vector<64x64xf32>
    %204 = arith.mulf %202, %203 : vector<64x64xf32>
    %cst_71 = arith.constant 0xFF800000 : f32
    %205 = vector.broadcast %cst_71 : f32 to vector<64x64xf32>
    %206 = arith.select %37, %204, %205 : vector<64x64xi1>, vector<64x64xf32>
    %cst_72 = arith.constant dense<0xFF800000> : vector<64xf32>
    %207 = vector.multi_reduction <maximumf>, %206, %cst_72 [1] : vector<64x64xf32> to vector<64xf32>
    %208 = vector.shape_cast %207 : vector<64xf32> to vector<64x1xf32>
    %209 = vector.broadcast %208 : vector<64x1xf32> to vector<64x64xf32>
    %210 = arith.subf %206, %209 : vector<64x64xf32>
    %211 = math.exp %210 : vector<64x64xf32>
    %cst_73 = arith.constant dense<0.000000e+00> : vector<64xf32>
    %212 = vector.multi_reduction <add>, %211, %cst_73 [1] : vector<64x64xf32> to vector<64xf32>
    %213 = vector.shape_cast %212 : vector<64xf32> to vector<64x1xf32>
    %214 = tpu.reciprocal %213 {approx = true} : vector<64x1xf32> -> vector<64x1xf32>
    %215 = vector.broadcast %214 : vector<64x1xf32> to vector<64x64xf32>
    %216 = arith.mulf %211, %215 : vector<64x64xf32>
    %217 = arith.truncf %216 : vector<64x64xf32> to vector<64x64xbf16>
    %cst_74 = arith.constant dense<0.000000e+00> : vector<64x32xf32>
    %218 = tpu.matmul %217, %200, %cst_74 {dimension_numbers = #tpu.dot_dimension_numbers<[1], [0], [0], [1], [0, 0, 1, 1], [], []>} : vector<64x64xbf16>, vector<64x32xbf16>, vector<64x32xf32> -> vector<64x32xf32>
    %c64_75 = arith.constant 64 : index
    %c96_76 = arith.constant 96 : index
    %219 = vector.load %arg20[%c64_75, %c96_76] : memref<128x128xf32, #tpu.memory_space<vmem>>, vector<64x32xf32>
    tpu.vector_store %arg20[%c64_75, %c96_76], %218 {strides = array<i32>} : memref<128x128xf32, #tpu.memory_space<vmem>>, vector<64x32xf32>,
    %c0_77 = arith.constant 0 : index
    %c0_78 = arith.constant 0 : index
    %220 = vector.load %arg20[%c0_77, %c0_78] : memref<128x128xf32, #tpu.memory_space<vmem>>, vector<128x128xf32>
    %221 = arith.truncf %220 : vector<128x128xf32> to vector<128x128xbf16>
    %c0_79 = arith.constant 0 : index
    %c0_80 = arith.constant 0 : index
    %c0_81 = arith.constant 0 : index
    %222 = vector.load %arg6[%c0_79, %c0_80, %c0_81] : memref<1x128x128xbf16, #tpu.memory_space<vmem>>, vector<1x128x128xbf16>
    %223 = vector.shape_cast %222 : vector<1x128x128xbf16> to vector<128x128xbf16>
    %cst_82 = arith.constant dense<0.000000e+00> : vector<128x128xf32>
    %224 = tpu.matmul %221, %223, %cst_82 {dimension_numbers = #tpu.dot_dimension_numbers<[1], [0], [0], [1], [0, 0, 1, 1], [], []>} : vector<128x128xbf16>, vector<128x128xbf16>, vector<128x128xf32> -> vector<128x128xf32>
    %c0_83 = arith.constant 0 : index
    %c0_84 = arith.constant 0 : index
    %c0_85 = arith.constant 0 : index
    %225 = vector.load %arg7[%c0_83, %c0_84, %c0_85] : memref<1x1x128xf32, #tpu.memory_space<vmem>>, vector<1x1x128xf32>
    %226 = vector.shape_cast %225 : vector<1x1x128xf32> to vector<1x128xf32>
    %227 = vector.broadcast %226 : vector<1x128xf32> to vector<128x128xf32>
    %228 = arith.addf %224, %227 : vector<128x128xf32>
    %229 = arith.addf %3, %228 : vector<128x128xf32>
    %c0_86 = arith.constant 0 : index
    %c0_87 = arith.constant 0 : index
    %c0_88 = arith.constant 0 : index
    %230 = vector.load %arg8[%c0_86, %c0_87, %c0_88] : memref<1x1x128xf32, #tpu.memory_space<vmem>>, vector<1x1x128xf32>
    %231 = vector.shape_cast %230 : vector<1x1x128xf32> to vector<1x128xf32>
    %c0_89 = arith.constant 0 : index
    %c0_90 = arith.constant 0 : index
    %c0_91 = arith.constant 0 : index
    %232 = vector.load %arg9[%c0_89, %c0_90, %c0_91] : memref<1x1x128xf32, #tpu.memory_space<vmem>>, vector<1x1x128xf32>
    %233 = vector.shape_cast %232 : vector<1x1x128xf32> to vector<1x128xf32>
    %cst_92 = arith.constant dense<0.000000e+00> : vector<128xf32>
    %234 = vector.multi_reduction <add>, %229, %cst_92 [1] : vector<128x128xf32> to vector<128xf32>
    %235 = vector.shape_cast %234 : vector<128xf32> to vector<128x1xf32>
    %cst_93 = arith.constant 1.280000e+02 : f32
    %236 = vector.broadcast %cst_93 : f32 to vector<128x1xf32>
    %237 = arith.divf %235, %236 : vector<128x1xf32>
    %238 = vector.broadcast %237 : vector<128x1xf32> to vector<128x128xf32>
    %239 = arith.subf %229, %238 : vector<128x128xf32>
    %240 = arith.mulf %239, %239 : vector<128x128xf32>
    %cst_94 = arith.constant dense<0.000000e+00> : vector<128xf32>
    %241 = vector.multi_reduction <add>, %240, %cst_94 [1] : vector<128x128xf32> to vector<128xf32>
    %242 = vector.shape_cast %241 : vector<128xf32> to vector<128x1xf32>
    %cst_95 = arith.constant 1.280000e+02 : f32
    %243 = vector.broadcast %cst_95 : f32 to vector<128x1xf32>
    %244 = arith.divf %242, %243 : vector<128x1xf32>
    %245 = vector.broadcast %237 : vector<128x1xf32> to vector<128x128xf32>
    %246 = arith.subf %229, %245 : vector<128x128xf32>
    %cst_96 = arith.constant 9.99999974E-6 : f32
    %247 = vector.broadcast %cst_96 : f32 to vector<128x1xf32>
    %248 = arith.addf %244, %247 : vector<128x1xf32>
    %249 = math.rsqrt %248 : vector<128x1xf32>
    %250 = vector.broadcast %249 : vector<128x1xf32> to vector<128x128xf32>
    %251 = arith.mulf %246, %250 : vector<128x128xf32>
    %252 = vector.broadcast %231 : vector<1x128xf32> to vector<128x128xf32>
    %253 = arith.mulf %251, %252 : vector<128x128xf32>
    %254 = vector.broadcast %233 : vector<1x128xf32> to vector<128x128xf32>
    %255 = arith.addf %253, %254 : vector<128x128xf32>
    %256 = arith.truncf %255 : vector<128x128xf32> to vector<128x128xbf16>
    %c0_97 = arith.constant 0 : index
    %c0_98 = arith.constant 0 : index
    %c0_99 = arith.constant 0 : index
    %257 = vector.load %arg10[%c0_97, %c0_98, %c0_99] : memref<1x128x512xbf16, #tpu.memory_space<vmem>>, vector<1x128x512xbf16>
    %258 = vector.shape_cast %257 : vector<1x128x512xbf16> to vector<128x512xbf16>
    %cst_100 = arith.constant dense<0.000000e+00> : vector<128x512xf32>
    %259 = tpu.matmul %256, %258, %cst_100 {dimension_numbers = #tpu.dot_dimension_numbers<[1], [0], [0], [1], [0, 0, 1, 1], [], []>} : vector<128x128xbf16>, vector<128x512xbf16>, vector<128x512xf32> -> vector<128x512xf32>
    %c0_101 = arith.constant 0 : index
    %c0_102 = arith.constant 0 : index
    %c0_103 = arith.constant 0 : index
    %260 = vector.load %arg11[%c0_101, %c0_102, %c0_103] : memref<1x1x512xf32, #tpu.memory_space<vmem>>, vector<1x1x512xf32>
    %261 = vector.shape_cast %260 : vector<1x1x512xf32> to vector<1x512xf32>
    %262 = vector.broadcast %261 : vector<1x512xf32> to vector<128x512xf32>
    %263 = arith.addf %259, %262 : vector<128x512xf32>
    %cst_104 = arith.constant 0.000000e+00 : f32
    %264 = vector.broadcast %cst_104 : f32 to vector<128x512xf32>
    %265 = arith.maximumf %263, %264 : vector<128x512xf32>
    %266 = arith.truncf %265 : vector<128x512xf32> to vector<128x512xbf16>
    %c0_105 = arith.constant 0 : index
    %c0_106 = arith.constant 0 : index
    %c0_107 = arith.constant 0 : index
    %267 = vector.load %arg12[%c0_105, %c0_106, %c0_107] : memref<1x512x128xbf16, #tpu.memory_space<vmem>>, vector<1x512x128xbf16>
    %268 = vector.shape_cast %267 : vector<1x512x128xbf16> to vector<512x128xbf16>
    %cst_108 = arith.constant dense<0.000000e+00> : vector<128x128xf32>
    %269 = tpu.matmul %266, %268, %cst_108 {dimension_numbers = #tpu.dot_dimension_numbers<[1], [0], [0], [1], [0, 0, 1, 1], [], []>} : vector<128x512xbf16>, vector<512x128xbf16>, vector<128x128xf32> -> vector<128x128xf32>
    %c0_109 = arith.constant 0 : index
    %c0_110 = arith.constant 0 : index
    %c0_111 = arith.constant 0 : index
    %270 = vector.load %arg13[%c0_109, %c0_110, %c0_111] : memref<1x1x128xf32, #tpu.memory_space<vmem>>, vector<1x1x128xf32>
    %271 = vector.shape_cast %270 : vector<1x1x128xf32> to vector<1x128xf32>
    %272 = vector.broadcast %271 : vector<1x128xf32> to vector<128x128xf32>
    %273 = arith.addf %269, %272 : vector<128x128xf32>
    %274 = arith.addf %229, %273 : vector<128x128xf32>
    %c0_112 = arith.constant 0 : index
    %c0_113 = arith.constant 0 : index
    %275 = vector.load %arg19[%c0_112, %c0_113] : memref<128x128xf32, #tpu.memory_space<vmem>>, vector<128x128xf32>
    tpu.vector_store %arg19[%c0_112, %c0_113], %274 {strides = array<i32>} : memref<128x128xf32, #tpu.memory_space<vmem>>, vector<128x128xf32>,
    %c1_i32 = arith.constant 1 : i32
    %276 = arith.cmpi eq, %arg0, %c1_i32 : i32
    %277 = arith.extui %276 : i1 to i32
    %c0_i32_114 = arith.constant 0 : i32
    %278 = arith.cmpi ne, %277, %c0_i32_114 : i32
    scf.if %278 {
      %c0_115 = arith.constant 0 : index
      %c0_116 = arith.constant 0 : index
      %279 = vector.load %arg19[%c0_115, %c0_116] : memref<128x128xf32, #tpu.memory_space<vmem>>, vector<128x128xf32>
      %c0_117 = arith.constant 0 : index
      %c0_118 = arith.constant 0 : index
      %280 = vector.load %arg14[%c0_117, %c0_118] : memref<1x128xf32, #tpu.memory_space<vmem>>, vector<1x128xf32>
      %c0_119 = arith.constant 0 : index
      %c0_120 = arith.constant 0 : index
      %281 = vector.load %arg15[%c0_119, %c0_120] : memref<1x128xf32, #tpu.memory_space<vmem>>, vector<1x128xf32>
      %cst_121 = arith.constant dense<0.000000e+00> : vector<128xf32>
      %282 = vector.multi_reduction <add>, %279, %cst_121 [1] : vector<128x128xf32> to vector<128xf32>
      %283 = vector.shape_cast %282 : vector<128xf32> to vector<128x1xf32>
      %cst_122 = arith.constant 1.280000e+02 : f32
      %284 = vector.broadcast %cst_122 : f32 to vector<128x1xf32>
      %285 = arith.divf %283, %284 : vector<128x1xf32>
      %286 = vector.broadcast %285 : vector<128x1xf32> to vector<128x128xf32>
      %287 = arith.subf %279, %286 : vector<128x128xf32>
      %288 = arith.mulf %287, %287 : vector<128x128xf32>
      %cst_123 = arith.constant dense<0.000000e+00> : vector<128xf32>
      %289 = vector.multi_reduction <add>, %288, %cst_123 [1] : vector<128x128xf32> to vector<128xf32>
      %290 = vector.shape_cast %289 : vector<128xf32> to vector<128x1xf32>
      %cst_124 = arith.constant 1.280000e+02 : f32
      %291 = vector.broadcast %cst_124 : f32 to vector<128x1xf32>
      %292 = arith.divf %290, %291 : vector<128x1xf32>
      %293 = vector.broadcast %285 : vector<128x1xf32> to vector<128x128xf32>
      %294 = arith.subf %279, %293 : vector<128x128xf32>
      %cst_125 = arith.constant 9.99999974E-6 : f32
      %295 = vector.broadcast %cst_125 : f32 to vector<128x1xf32>
      %296 = arith.addf %292, %295 : vector<128x1xf32>
      %297 = math.rsqrt %296 : vector<128x1xf32>
      %298 = vector.broadcast %297 : vector<128x1xf32> to vector<128x128xf32>
      %299 = arith.mulf %294, %298 : vector<128x128xf32>
      %300 = vector.broadcast %280 : vector<1x128xf32> to vector<128x128xf32>
      %301 = arith.mulf %299, %300 : vector<128x128xf32>
      %302 = vector.broadcast %281 : vector<1x128xf32> to vector<128x128xf32>
      %303 = arith.addf %301, %302 : vector<128x128xf32>
      %304 = arith.truncf %303 : vector<128x128xf32> to vector<128x128xbf16>
      %c0_126 = arith.constant 0 : index
      %c0_127 = arith.constant 0 : index
      %305 = vector.load %arg16[%c0_126, %c0_127] : memref<128x128xbf16, #tpu.memory_space<vmem>>, vector<128x128xbf16>
      %cst_128 = arith.constant dense<0.000000e+00> : vector<128x128xf32>
      %306 = tpu.matmul %304, %305, %cst_128 {dimension_numbers = #tpu.dot_dimension_numbers<[1], [0], [0], [1], [0, 0, 1, 1], [], []>} : vector<128x128xbf16>, vector<128x128xbf16>, vector<128x128xf32> -> vector<128x128xf32>
      %c0_129 = arith.constant 0 : index
      %c0_130 = arith.constant 0 : index
      %307 = vector.load %arg17[%c0_129, %c0_130] : memref<1x128xf32, #tpu.memory_space<vmem>>, vector<1x128xf32>
      %308 = vector.broadcast %307 : vector<1x128xf32> to vector<128x128xf32>
      %309 = arith.addf %306, %308 : vector<128x128xf32>
      %c0_131 = arith.constant 0 : index
      %c0_132 = arith.constant 0 : index
      %310 = vector.load %arg18[%c0_131, %c0_132] : memref<128x128xf32, #tpu.memory_space<vmem>>, vector<128x128xf32>
      tpu.vector_store %arg18[%c0_131, %c0_132], %309 {strides = array<i32>} : memref<128x128xf32, #tpu.memory_space<vmem>>, vector<128x128xf32>,
    } else {
    }
    return
  }
  func.func @transform_0(%arg0: i32) -> (i32, i32) {
    %c0_i32 = arith.constant 0 : i32
    %c0_i32_0 = arith.constant 0 : i32
    %c0_i32_1 = arith.constant 0 : i32
    return %c0_i32, %c0_i32_0 : i32, i32
  }
  func.func @transform_1(%arg0: i32) -> (i32, i32) {
    %c0_i32 = arith.constant 0 : i32
    %c0_i32_0 = arith.constant 0 : i32
    %c0_i32_1 = arith.constant 0 : i32
    return %c0_i32, %c0_i32_0 : i32, i32
  }
  func.func @transform_2(%arg0: i32) -> (i32, i32, i32) {
    %c0_i32 = arith.constant 0 : i32
    %c0_i32_0 = arith.constant 0 : i32
    %c0_i32_1 = arith.constant 0 : i32
    return %arg0, %c0_i32, %c0_i32_0 : i32, i32, i32
  }
  func.func @transform_3(%arg0: i32) -> (i32, i32, i32) {
    %c0_i32 = arith.constant 0 : i32
    %c0_i32_0 = arith.constant 0 : i32
    %c0_i32_1 = arith.constant 0 : i32
    return %arg0, %c0_i32, %c0_i32_0 : i32, i32, i32
  }
  func.func @transform_4(%arg0: i32) -> (i32, i32, i32) {
    %c0_i32 = arith.constant 0 : i32
    %c0_i32_0 = arith.constant 0 : i32
    %c0_i32_1 = arith.constant 0 : i32
    return %arg0, %c0_i32, %c0_i32_0 : i32, i32, i32
  }
  func.func @transform_5(%arg0: i32) -> (i32, i32, i32) {
    %c0_i32 = arith.constant 0 : i32
    %c0_i32_0 = arith.constant 0 : i32
    %c0_i32_1 = arith.constant 0 : i32
    return %arg0, %c0_i32, %c0_i32_0 : i32, i32, i32
  }
  func.func @transform_6(%arg0: i32) -> (i32, i32, i32) {
    %c0_i32 = arith.constant 0 : i32
    %c0_i32_0 = arith.constant 0 : i32
    %c0_i32_1 = arith.constant 0 : i32
    return %arg0, %c0_i32, %c0_i32_0 : i32, i32, i32
  }
  func.func @transform_7(%arg0: i32) -> (i32, i32, i32) {
    %c0_i32 = arith.constant 0 : i32
    %c0_i32_0 = arith.constant 0 : i32
    %c0_i32_1 = arith.constant 0 : i32
    return %arg0, %c0_i32, %c0_i32_0 : i32, i32, i32
  }
  func.func @transform_8(%arg0: i32) -> (i32, i32, i32) {
    %c0_i32 = arith.constant 0 : i32
    %c0_i32_0 = arith.constant 0 : i32
    %c0_i32_1 = arith.constant 0 : i32
    return %arg0, %c0_i32, %c0_i32_0 : i32, i32, i32
  }
  func.func @transform_9(%arg0: i32) -> (i32, i32, i32) {
    %c0_i32 = arith.constant 0 : i32
    %c0_i32_0 = arith.constant 0 : i32
    %c0_i32_1 = arith.constant 0 : i32
    return %arg0, %c0_i32, %c0_i32_0 : i32, i32, i32
  }
  func.func @transform_10(%arg0: i32) -> (i32, i32, i32) {
    %c0_i32 = arith.constant 0 : i32
    %c0_i32_0 = arith.constant 0 : i32
    %c0_i32_1 = arith.constant 0 : i32
    return %arg0, %c0_i32, %c0_i32_0 : i32, i32, i32
  }
  func.func @transform_11(%arg0: i32) -> (i32, i32, i32) {
    %c0_i32 = arith.constant 0 : i32
    %c0_i32_0 = arith.constant 0 : i32
    %c0_i32_1 = arith.constant 0 : i32
    return %arg0, %c0_i32, %c0_i32_0 : i32, i32, i32
  }
  func.func @transform_12(%arg0: i32) -> (i32, i32, i32) {
    %c0_i32 = arith.constant 0 : i32
    %c0_i32_0 = arith.constant 0 : i32
    %c0_i32_1 = arith.constant 0 : i32
    return %arg0, %c0_i32, %c0_i32_0 : i32, i32, i32
  }
  func.func @transform_13(%arg0: i32) -> (i32, i32) {
    %c0_i32 = arith.constant 0 : i32
    %c0_i32_0 = arith.constant 0 : i32
    %c0_i32_1 = arith.constant 0 : i32
    return %c0_i32, %c0_i32_0 : i32, i32
  }
  func.func @transform_14(%arg0: i32) -> (i32, i32) {
    %c0_i32 = arith.constant 0 : i32
    %c0_i32_0 = arith.constant 0 : i32
    %c0_i32_1 = arith.constant 0 : i32
    return %c0_i32, %c0_i32_0 : i32, i32
  }
  func.func @transform_15(%arg0: i32) -> (i32, i32) {
    %c0_i32 = arith.constant 0 : i32
    %c0_i32_0 = arith.constant 0 : i32
    %c0_i32_1 = arith.constant 0 : i32
    return %c0_i32, %c0_i32_0 : i32, i32
  }
  func.func @transform_16(%arg0: i32) -> (i32, i32) {
    %c0_i32 = arith.constant 0 : i32
    %c0_i32_0 = arith.constant 0 : i32
    %c0_i32_1 = arith.constant 0 : i32
    return %c0_i32, %c0_i32_0 : i32, i32
  }
  func.func @transform_17(%arg0: i32) -> (i32, i32) {
    %c0_i32 = arith.constant 0 : i32
    %c0_i32_0 = arith.constant 0 : i32
    %c0_i32_1 = arith.constant 0 : i32
    return %c0_i32, %c0_i32_0 : i32, i32
  }
}

</mosaic_0001>

<llo_original>
// kernel: forward.1
$region0: #{forward.1}
  #allocation0 [shape = 'u32[]', space=smem, size = 0x4, offset = 0x4, fixed_abs, tag = 'smem constant byte address 0x4 - core index']
  #allocation1 [shape = 'u32[72,128]{1,0:T(1,128)}', space=vmem, size = 0x9000, scoped, tag = 'internal scratch']
  #allocation2 [shape = 'f32[128,128]{1,0:T(8,128)}', space=vmem, size = 0x10000, scoped, tag = 'scratch operand']
  #allocation3 [shape = 'f32[128,128]{1,0:T(8,128)}', space=vmem, size = 0x10000, scoped, tag = 'scratch operand']
  %s0 = inlined_call_operand.vmem [shape: f32[128,128], index: 0, kind: input, shape index: {}]
  %s1 = inlined_call_operand.vmem [shape: f32[64,128], index: 1, kind: input, shape index: {}]
  %s2 = inlined_call_operand.vmem [shape: f32[2,1,128], index: 2, kind: input, shape index: {}]
  %s3 = inlined_call_operand.vmem [shape: f32[2,1,128], index: 3, kind: input, shape index: {}]
  %s4 = inlined_call_operand.vmem [shape: bf16[2,128,384], index: 4, kind: input, shape index: {}]
  %s5 = inlined_call_operand.vmem [shape: bf16[2,128,128], index: 5, kind: input, shape index: {}]
  %s6 = inlined_call_operand.vmem [shape: f32[2,1,128], index: 6, kind: input, shape index: {}]
  %s7 = inlined_call_operand.vmem [shape: f32[2,1,128], index: 7, kind: input, shape index: {}]
  %s8 = inlined_call_operand.vmem [shape: f32[2,1,128], index: 8, kind: input, shape index: {}]
  %s9 = inlined_call_operand.vmem [shape: bf16[2,128,512], index: 9, kind: input, shape index: {}]
  %s10 = inlined_call_operand.vmem [shape: f32[2,1,512], index: 10, kind: input, shape index: {}]
  %s11 = inlined_call_operand.vmem [shape: bf16[2,512,128], index: 11, kind: input, shape index: {}]
  %s12 = inlined_call_operand.vmem [shape: f32[2,1,128], index: 12, kind: input, shape index: {}]
  %s13 = inlined_call_operand.vmem [shape: f32[1,128], index: 13, kind: input, shape index: {}]
  %s14 = inlined_call_operand.vmem [shape: f32[1,128], index: 14, kind: input, shape index: {}]
  %s15 = inlined_call_operand.vmem [shape: bf16[128,128], index: 15, kind: input, shape index: {}]
  %s16 = inlined_call_operand.vmem [shape: f32[1,128], index: 16, kind: input, shape index: {}]
  %s17 = inlined_call_operand.hbm [shape: f32[128,128], index: 17, kind: output, shape index: {}]
  %s18 = sld [smem:[#allocation0]]
  $region109: #{forward.1} parent=0
    _
  %s20 = ssub.s32 1, %s18
  %s21 = scalar_select 0, %s20, %s18
  $region1: #{forward.1} parent=0
    #allocation4 [shape = 'u8[65536]{0}', space=vmem, size = 0x10000, scoped, tag = 'output window, operand 0, single buffered']
    #allocation5 [shape = 's32[2]{0}', space=sflag, size = 0x8, scoped, tag = 'scoped memory for forward.1']
    %22 = vsyncpa [#allocation5], 0
    loop: start=0, step=1, limit=4
    $region2: #{forward.1} parent=1 // loop_pre_header
      _
    $region3: #{forward.1} parent=1 // loop_header
      %s24 = sphi 0, %s28
      %p25 = scmp.ge.s32.totalorder %s24, 4
      %s32 = sphi 0, %s32
      %s34 = sphi 0, %s32
      %s35 = sphi 0, %s34
      %s49 = sphi 0, %s35
      %s53 = sphi 0, %s53
      %s55 = sphi 0, %s53
      %s56 = sphi 0, %s55
      %s70 = sphi 0, %s56
      %s76 = sphi 0, %s78
      %s79 = sphi 0, %s76
      %s80 = sphi 0, %s79
      %s96 = sphi 0, %s80
      %s102 = sphi 0, %s104
      %s105 = sphi 0, %s102
      %s106 = sphi 0, %s105
      %s122 = sphi 0, %s106
      %s128 = sphi 0, %s130
      %s131 = sphi 0, %s128
      %s132 = sphi 0, %s131
      %s148 = sphi 0, %s132
      %s154 = sphi 0, %s156
      %s157 = sphi 0, %s154
      %s158 = sphi 0, %s157
      %s174 = sphi 0, %s158
      %s180 = sphi 0, %s182
      %s183 = sphi 0, %s180
      %s184 = sphi 0, %s183
      %s200 = sphi 0, %s184
      %s206 = sphi 0, %s208
      %s209 = sphi 0, %s206
      %s210 = sphi 0, %s209
      %s226 = sphi 0, %s210
      %s232 = sphi 0, %s234
      %s235 = sphi 0, %s232
      %s236 = sphi 0, %s235
      %s252 = sphi 0, %s236
      %s258 = sphi 0, %s260
      %s261 = sphi 0, %s258
      %s262 = sphi 0, %s261
      %s278 = sphi 0, %s262
      %s284 = sphi 0, %s286
      %s287 = sphi 0, %s284
      %s288 = sphi 0, %s287
      %s304 = sphi 0, %s288
      %s310 = sphi 0, %s312
      %s313 = sphi 0, %s310
      %s314 = sphi 0, %s313
      %s330 = sphi 0, %s314
      %s336 = sphi 0, %s338
      %s339 = sphi 0, %s336
      %s340 = sphi 0, %s339
      %s356 = sphi 0, %s340
      %s360 = sphi 0, %s360
      %s362 = sphi 0, %s360
      %s363 = sphi 0, %s362
      %s377 = sphi 0, %s363
      %s381 = sphi 0, %s381
      %s383 = sphi 0, %s381
      %s384 = sphi 0, %s383
      %s398 = sphi 0, %s384
      %s402 = sphi 0, %s402
      %s404 = sphi 0, %s402
      %s405 = sphi 0, %s404
      %s419 = sphi 0, %s405
      %s423 = sphi 0, %s423
      %s425 = sphi 0, %s423
      %s426 = sphi 0, %s425
      %s440 = sphi 0, %s426
      %s444 = sphi 0, %s444
      %s446 = sphi 0, %s444
      %s447 = sphi 0, %s446
      %s461 = sphi 0, %s447
    $region4: #{forward.1} parent=1 // loop_header_branch
      %27 = sbr.rel (%p25) target = $region8
    $region5: #{forward.1} parent=1 // loop_body
      %s29 = ssub.s32 %s24, 1
      %s30 = ssub.s32 %s24, 2
      %s31 = sadd.s32 %s24, 1
      %s33 = sadd.s32 %s32, 1
      %p36 = scmp.eq.s32.totalorder %s24, 1
      %p37 = scmp.ne.s32.totalorder %s32, %s34
      %p38 = scmp.eq.s32.totalorder %s24, 0
      %p39 = por %p37, %p38
      %p40 = scmp.ne.s32.totalorder %s32, %s34
      %p41 = scmp.eq.s32.totalorder %s29, 1
      %p42 = por %p40, %p41
      %p43 = scmp.ne.s32.totalorder %s34, %s35
      %p44 = scmp.eq.s32.totalorder %s29, 0
      %p45 = por %p43, %p44
      %p46 = scmp.ne.s32.totalorder %s34, %s35
      %p47 = scmp.eq.s32.totalorder %s30, 1
      %p48 = por %p46, %p47
      %p50 = scmp.ne.s32.totalorder %s35, %s49
      %p51 = scmp.eq.s32.totalorder %s30, 0
      %p52 = por %p50, %p51
      %s54 = sadd.s32 %s53, 1
      %p57 = scmp.eq.s32.totalorder %s24, 1
      %p58 = scmp.ne.s32.totalorder %s53, %s55
      %p59 = scmp.eq.s32.totalorder %s24, 0
      %p60 = por %p58, %p59
      %p61 = scmp.ne.s32.totalorder %s53, %s55
      %p62 = scmp.eq.s32.totalorder %s29, 1
      %p63 = por %p61, %p62
      %p64 = scmp.ne.s32.totalorder %s55, %s56
      %p65 = scmp.eq.s32.totalorder %s29, 0
      %p66 = por %p64, %p65
      %p67 = scmp.ne.s32.totalorder %s55, %s56
      %p68 = scmp.eq.s32.totalorder %s30, 1
      %p69 = por %p67, %p68
      %p71 = scmp.ne.s32.totalorder %s56, %s70
      %p72 = scmp.eq.s32.totalorder %s30, 0
      %p73 = por %p71, %p72
      %s74 = ssub.s32 %s24, %s31
      %p75 = scmp.eq.s32.totalorder %s74, 0
      %s77 = sadd.s32 %s76, 1
      %s78 = scalar_select %p75, %s76, %s77
      %p81 = pneg %p75
      %p82 = scmp.eq.s32.totalorder %s24, 1
      %p83 = por %p81, %p82
      %p84 = scmp.ne.s32.totalorder %s76, %s79
      %p85 = scmp.eq.s32.totalorder %s24, 0
      %p86 = por %p84, %p85
      %p87 = scmp.ne.s32.totalorder %s76, %s79
      %p88 = scmp.eq.s32.totalorder %s29, 1
      %p89 = por %p87, %p88
      %p90 = scmp.ne.s32.totalorder %s79, %s80
      %p91 = scmp.eq.s32.totalorder %s29, 0
      %p92 = por %p90, %p91
      %p93 = scmp.ne.s32.totalorder %s79, %s80
      %p94 = scmp.eq.s32.totalorder %s30, 1
      %p95 = por %p93, %p94
      %p97 = scmp.ne.s32.totalorder %s80, %s96
      %p98 = scmp.eq.s32.totalorder %s30, 0
      %p99 = por %p97, %p98
      %s100 = ssub.s32 %s24, %s31
      %p101 = scmp.eq.s32.totalorder %s100, 0
      %s103 = sadd.s32 %s102, 1
      %s104 = scalar_select %p101, %s102, %s103
      %p107 = pneg %p101
      %p108 = scmp.eq.s32.totalorder %s24, 1
      %p109 = por %p107, %p108
      %p110 = scmp.ne.s32.totalorder %s102, %s105
      %p111 = scmp.eq.s32.totalorder %s24, 0
      %p112 = por %p110, %p111
      %p113 = scmp.ne.s32.totalorder %s102, %s105
      %p114 = scmp.eq.s32.totalorder %s29, 1
      %p115 = por %p113, %p114
      %p116 = scmp.ne.s32.totalorder %s105, %s106
      %p117 = scmp.eq.s32.totalorder %s29, 0
      %p118 = por %p116, %p117
      %p119 = scmp.ne.s32.totalorder %s105, %s106
      %p120 = scmp.eq.s32.totalorder %s30, 1
      %p121 = por %p119, %p120
      %p123 = scmp.ne.s32.totalorder %s106, %s122
      %p124 = scmp.eq.s32.totalorder %s30, 0
      %p125 = por %p123, %p124
      %s126 = ssub.s32 %s24, %s31
      %p127 = scmp.eq.s32.totalorder %s126, 0
      %s129 = sadd.s32 %s128, 1
      %s130 = scalar_select %p127, %s128, %s129
      %p133 = pneg %p127
      %p134 = scmp.eq.s32.totalorder %s24, 1
      %p135 = por %p133, %p134
      %p136 = scmp.ne.s32.totalorder %s128, %s131
      %p137 = scmp.eq.s32.totalorder %s24, 0
      %p138 = por %p136, %p137
      %p139 = scmp.ne.s32.totalorder %s128, %s131
      %p140 = scmp.eq.s32.totalorder %s29, 1
      %p141 = por %p139, %p140
      %p142 = scmp.ne.s32.totalorder %s131, %s132
      %p143 = scmp.eq.s32.totalorder %s29, 0
      %p144 = por %p142, %p143
      %p145 = scmp.ne.s32.totalorder %s131, %s132
      %p146 = scmp.eq.s32.totalorder %s30, 1
      %p147 = por %p145, %p146
      %p149 = scmp.ne.s32.totalorder %s132, %s148
      %p150 = scmp.eq.s32.totalorder %s30, 0
      %p151 = por %p149, %p150
      %s152 = ssub.s32 %s24, %s31
      %p153 = scmp.eq.s32.totalorder %s152, 0
      %s155 = sadd.s32 %s154, 1
      %s156 = scalar_select %p153, %s154, %s155
      %p159 = pneg %p153
      %p160 = scmp.eq.s32.totalorder %s24, 1
      %p161 = por %p159, %p160
      %p162 = scmp.ne.s32.totalorder %s154, %s157
      %p163 = scmp.eq.s32.totalorder %s24, 0
      %p164 = por %p162, %p163
      %p165 = scmp.ne.s32.totalorder %s154, %s157
      %p166 = scmp.eq.s32.totalorder %s29, 1
      %p167 = por %p165, %p166
      %p168 = scmp.ne.s32.totalorder %s157, %s158
      %p169 = scmp.eq.s32.totalorder %s29, 0
      %p170 = por %p168, %p169
      %p171 = scmp.ne.s32.totalorder %s157, %s158
      %p172 = scmp.eq.s32.totalorder %s30, 1
      %p173 = por %p171, %p172
      %p175 = scmp.ne.s32.totalorder %s158, %s174
      %p176 = scmp.eq.s32.totalorder %s30, 0
      %p177 = por %p175, %p176
      %s178 = ssub.s32 %s24, %s31
      %p179 = scmp.eq.s32.totalorder %s178, 0
      %s181 = sadd.s32 %s180, 1
      %s182 = scalar_select %p179, %s180, %s181
      %p185 = pneg %p179
      %p186 = scmp.eq.s32.totalorder %s24, 1
      %p187 = por %p185, %p186
      %p188 = scmp.ne.s32.totalorder %s180, %s183
      %p189 = scmp.eq.s32.totalorder %s24, 0
      %p190 = por %p188, %p189
      %p191 = scmp.ne.s32.totalorder %s180, %s183
      %p192 = scmp.eq.s32.totalorder %s29, 1
      %p193 = por %p191, %p192
      %p194 = scmp.ne.s32.totalorder %s183, %s184
      %p195 = scmp.eq.s32.totalorder %s29, 0
      %p196 = por %p194, %p195
      %p197 = scmp.ne.s32.totalorder %s183, %s184
      %p198 = scmp.eq.s32.totalorder %s30, 1
      %p199 = por %p197, %p198
      %p201 = scmp.ne.s32.totalorder %s184, %s200
      %p202 = scmp.eq.s32.totalorder %s30, 0
      %p203 = por %p201, %p202
      %s204 = ssub.s32 %s24, %s31
      %p205 = scmp.eq.s32.totalorder %s204, 0
      %s207 = sadd.s32 %s206, 1
      %s208 = scalar_select %p205, %s206, %s207
      %p211 = pneg %p205
      %p212 = scmp.eq.s32.totalorder %s24, 1
      %p213 = por %p211, %p212
      %p214 = scmp.ne.s32.totalorder %s206, %s209
      %p215 = scmp.eq.s32.totalorder %s24, 0
      %p216 = por %p214, %p215
      %p217 = scmp.ne.s32.totalorder %s206, %s209
      %p218 = scmp.eq.s32.totalorder %s29, 1
      %p219 = por %p217, %p218
      %p220 = scmp.ne.s32.totalorder %s209, %s210
      %p221 = scmp.eq.s32.totalorder %s29, 0
      %p222 = por %p220, %p221
      %p223 = scmp.ne.s32.totalorder %s209, %s210
      %p224 = scmp.eq.s32.totalorder %s30, 1
      %p225 = por %p223, %p224
      %p227 = scmp.ne.s32.totalorder %s210, %s226
      %p228 = scmp.eq.s32.totalorder %s30, 0
      %p229 = por %p227, %p228
      %s230 = ssub.s32 %s24, %s31
      %p231 = scmp.eq.s32.totalorder %s230, 0
      %s233 = sadd.s32 %s232, 1
      %s234 = scalar_select %p231, %s232, %s233
      %p237 = pneg %p231
      %p238 = scmp.eq.s32.totalorder %s24, 1
      %p239 = por %p237, %p238
      %p240 = scmp.ne.s32.totalorder %s232, %s235
      %p241 = scmp.eq.s32.totalorder %s24, 0
      %p242 = por %p240, %p241
      %p243 = scmp.ne.s32.totalorder %s232, %s235
      %p244 = scmp.eq.s32.totalorder %s29, 1
      %p245 = por %p243, %p244
      %p246 = scmp.ne.s32.totalorder %s235, %s236
      %p247 = scmp.eq.s32.totalorder %s29, 0
      %p248 = por %p246, %p247
      %p249 = scmp.ne.s32.totalorder %s235, %s236
      %p250 = scmp.eq.s32.totalorder %s30, 1
      %p251 = por %p249, %p250
      %p253 = scmp.ne.s32.totalorder %s236, %s252
      %p254 = scmp.eq.s32.totalorder %s30, 0
      %p255 = por %p253, %p254
      %s256 = ssub.s32 %s24, %s31
      %p257 = scmp.eq.s32.totalorder %s256, 0
      %s259 = sadd.s32 %s258, 1
      %s260 = scalar_select %p257, %s258, %s259
      %p263 = pneg %p257
      %p264 = scmp.eq.s32.totalorder %s24, 1
      %p265 = por %p263, %p264
      %p266 = scmp.ne.s32.totalorder %s258, %s261
      %p267 = scmp.eq.s32.totalorder %s24, 0
      %p268 = por %p266, %p267
      %p269 = scmp.ne.s32.totalorder %s258, %s261
      %p270 = scmp.eq.s32.totalorder %s29, 1
      %p271 = por %p269, %p270
      %p272 = scmp.ne.s32.totalorder %s261, %s262
      %p273 = scmp.eq.s32.totalorder %s29, 0
      %p274 = por %p272, %p273
      %p275 = scmp.ne.s32.totalorder %s261, %s262
      %p276 = scmp.eq.s32.totalorder %s30, 1
      %p277 = por %p275, %p276
      %p279 = scmp.ne.s32.totalorder %s262, %s278
      %p280 = scmp.eq.s32.totalorder %s30, 0
      %p281 = por %p279, %p280
      %s282 = ssub.s32 %s24, %s31
      %p283 = scmp.eq.s32.totalorder %s282, 0
      %s285 = sadd.s32 %s284, 1
      %s286 = scalar_select %p283, %s284, %s285
      %p289 = pneg %p283
      %p290 = scmp.eq.s32.totalorder %s24, 1
      %p291 = por %p289, %p290
      %p292 = scmp.ne.s32.totalorder %s284, %s287
      %p293 = scmp.eq.s32.totalorder %s24, 0
      %p294 = por %p292, %p293
      %p295 = scmp.ne.s32.totalorder %s284, %s287
      %p296 = scmp.eq.s32.totalorder %s29, 1
      %p297 = por %p295, %p296
      %p298 = scmp.ne.s32.totalorder %s287, %s288
      %p299 = scmp.eq.s32.totalorder %s29, 0
      %p300 = por %p298, %p299
      %p301 = scmp.ne.s32.totalorder %s287, %s288
      %p302 = scmp.eq.s32.totalorder %s30, 1
      %p303 = por %p301, %p302
      %p305 = scmp.ne.s32.totalorder %s288, %s304
      %p306 = scmp.eq.s32.totalorder %s30, 0
      %p307 = por %p305, %p306
      %s308 = ssub.s32 %s24, %s31
      %p309 = scmp.eq.s32.totalorder %s308, 0
      %s311 = sadd.s32 %s310, 1
      %s312 = scalar_select %p309, %s310, %s311
      %p315 = pneg %p309
      %p316 = scmp.eq.s32.totalorder %s24, 1
      %p317 = por %p315, %p316
      %p318 = scmp.ne.s32.totalorder %s310, %s313
      %p319 = scmp.eq.s32.totalorder %s24, 0
      %p320 = por %p318, %p319
      %p321 = scmp.ne.s32.totalorder %s310, %s313
      %p322 = scmp.eq.s32.totalorder %s29, 1
      %p323 = por %p321, %p322
      %p324 = scmp.ne.s32.totalorder %s313, %s314
      %p325 = scmp.eq.s32.totalorder %s29, 0
      %p326 = por %p324, %p325
      %p327 = scmp.ne.s32.totalorder %s313, %s314
      %p328 = scmp.eq.s32.totalorder %s30, 1
      %p329 = por %p327, %p328
      %p331 = scmp.ne.s32.totalorder %s314, %s330
      %p332 = scmp.eq.s32.totalorder %s30, 0
      %p333 = por %p331, %p332
      %s334 = ssub.s32 %s24, %s31
      %p335 = scmp.eq.s32.totalorder %s334, 0
      %s337 = sadd.s32 %s336, 1
      %s338 = scalar_select %p335, %s336, %s337
      %p341 = pneg %p335
      %p342 = scmp.eq.s32.totalorder %s24, 1
      %p343 = por %p341, %p342
      %p344 = scmp.ne.s32.totalorder %s336, %s339
      %p345 = scmp.eq.s32.totalorder %s24, 0
      %p346 = por %p344, %p345
      %p347 = scmp.ne.s32.totalorder %s336, %s339
      %p348 = scmp.eq.s32.totalorder %s29, 1
      %p349 = por %p347, %p348
      %p350 = scmp.ne.s32.totalorder %s339, %s340
      %p351 = scmp.eq.s32.totalorder %s29, 0
      %p352 = por %p350, %p351
      %p353 = scmp.ne.s32.totalorder %s339, %s340
      %p354 = scmp.eq.s32.totalorder %s30, 1
      %p355 = por %p353, %p354
      %p357 = scmp.ne.s32.totalorder %s340, %s356
      %p358 = scmp.eq.s32.totalorder %s30, 0
      %p359 = por %p357, %p358
      %s361 = sadd.s32 %s360, 1
      %p364 = scmp.eq.s32.totalorder %s24, 1
      %p365 = scmp.ne.s32.totalorder %s360, %s362
      %p366 = scmp.eq.s32.totalorder %s24, 0
      %p367 = por %p365, %p366
      %p368 = scmp.ne.s32.totalorder %s360, %s362
      %p369 = scmp.eq.s32.totalorder %s29, 1
      %p370 = por %p368, %p369
      %p371 = scmp.ne.s32.totalorder %s362, %s363
      %p372 = scmp.eq.s32.totalorder %s29, 0
      %p373 = por %p371, %p372
      %p374 = scmp.ne.s32.totalorder %s362, %s363
      %p375 = scmp.eq.s32.totalorder %s30, 1
      %p376 = por %p374, %p375
      %p378 = scmp.ne.s32.totalorder %s363, %s377
      %p379 = scmp.eq.s32.totalorder %s30, 0
      %p380 = por %p378, %p379
      %s382 = sadd.s32 %s381, 1
      %p385 = scmp.eq.s32.totalorder %s24, 1
      %p386 = scmp.ne.s32.totalorder %s381, %s383
      %p387 = scmp.eq.s32.totalorder %s24, 0
      %p388 = por %p386, %p387
      %p389 = scmp.ne.s32.totalorder %s381, %s383
      %p390 = scmp.eq.s32.totalorder %s29, 1
      %p391 = por %p389, %p390
      %p392 = scmp.ne.s32.totalorder %s383, %s384
      %p393 = scmp.eq.s32.totalorder %s29, 0
      %p394 = por %p392, %p393
      %p395 = scmp.ne.s32.totalorder %s383, %s384
      %p396 = scmp.eq.s32.totalorder %s30, 1
      %p397 = por %p395, %p396
      %p399 = scmp.ne.s32.totalorder %s384, %s398
      %p400 = scmp.eq.s32.totalorder %s30, 0
      %p401 = por %p399, %p400
      %s403 = sadd.s32 %s402, 1
      %p406 = scmp.eq.s32.totalorder %s24, 1
      %p407 = scmp.ne.s32.totalorder %s402, %s404
      %p408 = scmp.eq.s32.totalorder %s24, 0
      %p409 = por %p407, %p408
      %p410 = scmp.ne.s32.totalorder %s402, %s404
      %p411 = scmp.eq.s32.totalorder %s29, 1
      %p412 = por %p410, %p411
      %p413 = scmp.ne.s32.totalorder %s404, %s405
      %p414 = scmp.eq.s32.totalorder %s29, 0
      %p415 = por %p413, %p414
      %p416 = scmp.ne.s32.totalorder %s404, %s405
      %p417 = scmp.eq.s32.totalorder %s30, 1
      %p418 = por %p416, %p417
      %p420 = scmp.ne.s32.totalorder %s405, %s419
      %p421 = scmp.eq.s32.totalorder %s30, 0
      %p422 = por %p420, %p421
      %s424 = sadd.s32 %s423, 1
      %p427 = scmp.eq.s32.totalorder %s24, 1
      %p428 = scmp.ne.s32.totalorder %s423, %s425
      %p429 = scmp.eq.s32.totalorder %s24, 0
      %p430 = por %p428, %p429
      %p431 = scmp.ne.s32.totalorder %s423, %s425
      %p432 = scmp.eq.s32.totalorder %s29, 1
      %p433 = por %p431, %p432
      %p434 = scmp.ne.s32.totalorder %s425, %s426
      %p435 = scmp.eq.s32.totalorder %s29, 0
      %p436 = por %p434, %p435
      %p437 = scmp.ne.s32.totalorder %s425, %s426
      %p438 = scmp.eq.s32.totalorder %s30, 1
      %p439 = por %p437, %p438
      %p441 = scmp.ne.s32.totalorder %s426, %s440
      %p442 = scmp.eq.s32.totalorder %s30, 0
      %p443 = por %p441, %p442
      %s445 = sadd.s32 %s444, 1
      %p448 = scmp.eq.s32.totalorder %s24, 1
      %p449 = scmp.ne.s32.totalorder %s444, %s446
      %p450 = scmp.eq.s32.totalorder %s24, 0
      %p451 = por %p449, %p450
      %p452 = scmp.ne.s32.totalorder %s444, %s446
      %p453 = scmp.eq.s32.totalorder %s29, 1
      %p454 = por %p452, %p453
      %p455 = scmp.ne.s32.totalorder %s446, %s447
      %p456 = scmp.eq.s32.totalorder %s29, 0
      %p457 = por %p455, %p456
      %p458 = scmp.ne.s32.totalorder %s446, %s447
      %p459 = scmp.eq.s32.totalorder %s30, 1
      %p460 = por %p458, %p459
      %p462 = scmp.ne.s32.totalorder %s447, %s461
      %p463 = scmp.eq.s32.totalorder %s30, 0
      %p464 = por %p462, %p463
      %p465 = scmp.le.s32.totalorder 1, %s24
      %p466 = scmp.lt.s32.totalorder %s24, 3
      %p467 = pnand %p465, %p466
      %p468 = pneg %p467
      // Predicated region
      $region9: #{forward.1} parent=5 // pred_check
        _
      $region10: #{forward.1} parent=5 // pred_check_branch
        %470 = sbr.rel (%p467) target = $region12
      $region11: #{forward.1} parent=5 // pred_region
        %s471 = ssub.s32 %s24, 1
        // Predicated region
        $region13: #{forward.1} parent=11 // pred_check
          %p472 = pneg %p45
        $region14: #{forward.1} parent=11 // pred_check_branch
          %474 = sbr.rel (%p472) target = $region16
        $region15: #{forward.1} parent=11 // pred_region
          _
        $region16: #{forward.1} parent=11 // pred_fallthru
          _
        // Predicated region
        $region17: #{forward.1} parent=11 // pred_check
          %p475 = pneg %p66
        $region18: #{forward.1} parent=11 // pred_check_branch
          %477 = sbr.rel (%p475) target = $region20
        $region19: #{forward.1} parent=11 // pred_region
          _
        $region20: #{forward.1} parent=11 // pred_fallthru
          _
        // Predicated region
        $region21: #{forward.1} parent=11 // pred_check
          %p478 = pneg %p373
        $region22: #{forward.1} parent=11 // pred_check_branch
          %480 = sbr.rel (%p478) target = $region24
        $region23: #{forward.1} parent=11 // pred_region
          _
        $region24: #{forward.1} parent=11 // pred_fallthru
          _
        // Predicated region
        $region25: #{forward.1} parent=11 // pred_check
          %p481 = pneg %p394
        $region26: #{forward.1} parent=11 // pred_check_branch
          %483 = sbr.rel (%p481) target = $region28
        $region27: #{forward.1} parent=11 // pred_region
          _
        $region28: #{forward.1} parent=11 // pred_fallthru
          _
        // Predicated region
        $region29: #{forward.1} parent=11 // pred_check
          %p484 = pneg %p415
        $region30: #{forward.1} parent=11 // pred_check_branch
          %486 = sbr.rel (%p484) target = $region32
        $region31: #{forward.1} parent=11 // pred_region
          _
        $region32: #{forward.1} parent=11 // pred_fallthru
          _
        // Predicated region
        $region33: #{forward.1} parent=11 // pred_check
          %p487 = pneg %p436
        $region34: #{forward.1} parent=11 // pred_check_branch
          %489 = sbr.rel (%p487) target = $region36
        $region35: #{forward.1} parent=11 // pred_region
          _
        $region36: #{forward.1} parent=11 // pred_fallthru
          _
      $region12: #{forward.1} parent=5 // pred_fallthru
        _
      %p490 = scmp.lt.s32.totalorder %s24, 2
      // Predicated region
      $region37: #{forward.1} parent=5 // pred_check
        %p491 = pneg %p490
      $region38: #{forward.1} parent=5 // pred_check_branch
        %493 = sbr.rel (%p491) target = $region40
      $region39: #{forward.1} parent=5 // pred_region
        // Predicated region
        $region41: #{forward.1} parent=39 // pred_check
          %p494 = pneg %p86
        $region42: #{forward.1} parent=39 // pred_check_branch
          %496 = sbr.rel (%p494) target = $region44
        $region43: #{forward.1} parent=39 // pred_region
          %p497 = scmp.lt.s32.totalorder %s24, 1
          %s498 = scalar_select %p497, %s24, 1
          %s499 = scalar_lea.vmem %s2, %s498
        $region44: #{forward.1} parent=39 // pred_fallthru
          _
        // Predicated region
        $region45: #{forward.1} parent=39 // pred_check
          %p500 = pneg %p112
        $region46: #{forward.1} parent=39 // pred_check_branch
          %502 = sbr.rel (%p500) target = $region48
        $region47: #{forward.1} parent=39 // pred_region
          %p503 = scmp.lt.s32.totalorder %s24, 1
          %s504 = scalar_select %p503, %s24, 1
          %s505 = scalar_lea.vmem %s3, %s504
        $region48: #{forward.1} parent=39 // pred_fallthru
          _
        // Predicated region
        $region49: #{forward.1} parent=39 // pred_check
          %p506 = pneg %p138
        $region50: #{forward.1} parent=39 // pred_check_branch
          %508 = sbr.rel (%p506) target = $region52
        $region51: #{forward.1} parent=39 // pred_region
          %p509 = scmp.lt.s32.totalorder %s24, 1
          %s510 = scalar_select %p509, %s24, 1
          %s511 = smul.addr %s510, 48
          %s512 = smul.addr %s511, 4
          %s513 = scalar_lea.vmem %s4, %s512
        $region52: #{forward.1} parent=39 // pred_fallthru
          _
        // Predicated region
        $region53: #{forward.1} parent=39 // pred_check
          %p514 = pneg %p164
        $region54: #{forward.1} parent=39 // pred_check_branch
          %516 = sbr.rel (%p514) target = $region56
        $region55: #{forward.1} parent=39 // pred_region
          %p517 = scmp.lt.s32.totalorder %s24, 1
          %s518 = scalar_select %p517, %s24, 1
          %s519 = smul.addr %s518, 16
          %s520 = smul.addr %s519, 4
          %s521 = scalar_lea.vmem %s5, %s520
        $region56: #{forward.1} parent=39 // pred_fallthru
          _
        // Predicated region
        $region57: #{forward.1} parent=39 // pred_check
          %p522 = pneg %p190
        $region58: #{forward.1} parent=39 // pred_check_branch
          %524 = sbr.rel (%p522) target = $region60
        $region59: #{forward.1} parent=39 // pred_region
          %p525 = scmp.lt.s32.totalorder %s24, 1
          %s526 = scalar_select %p525, %s24, 1
          %s527 = scalar_lea.vmem %s6, %s526
        $region60: #{forward.1} parent=39 // pred_fallthru
          _
        // Predicated region
        $region61: #{forward.1} parent=39 // pred_check
          %p528 = pneg %p216
        $region62: #{forward.1} parent=39 // pred_check_branch
          %530 = sbr.rel (%p528) target = $region64
        $region63: #{forward.1} parent=39 // pred_region
          %p531 = scmp.lt.s32.totalorder %s24, 1
          %s532 = scalar_select %p531, %s24, 1
          %s533 = scalar_lea.vmem %s7, %s532
        $region64: #{forward.1} parent=39 // pred_fallthru
          _
        // Predicated region
        $region65: #{forward.1} parent=39 // pred_check
          %p534 = pneg %p242
        $region66: #{forward.1} parent=39 // pred_check_branch
          %536 = sbr.rel (%p534) target = $region68
        $region67: #{forward.1} parent=39 // pred_region
          %p537 = scmp.lt.s32.totalorder %s24, 1
          %s538 = scalar_select %p537, %s24, 1
          %s539 = scalar_lea.vmem %s8, %s538
        $region68: #{forward.1} parent=39 // pred_fallthru
          _
        // Predicated region
        $region69: #{forward.1} parent=39 // pred_check
          %p540 = pneg %p268
        $region70: #{forward.1} parent=39 // pred_check_branch
          %542 = sbr.rel (%p540) target = $region72
        $region71: #{forward.1} parent=39 // pred_region
          %p543 = scmp.lt.s32.totalorder %s24, 1
          %s544 = scalar_select %p543, %s24, 1
          %s545 = smul.addr %s544, 64
          %s546 = smul.addr %s545, 4
          %s547 = scalar_lea.vmem %s9, %s546
        $region72: #{forward.1} parent=39 // pred_fallthru
          _
        // Predicated region
        $region73: #{forward.1} parent=39 // pred_check
          %p548 = pneg %p294
        $region74: #{forward.1} parent=39 // pred_check_branch
          %550 = sbr.rel (%p548) target = $region76
        $region75: #{forward.1} parent=39 // pred_region
          %p551 = scmp.lt.s32.totalorder %s24, 1
          %s552 = scalar_select %p551, %s24, 1
          %s553 = smul.addr %s552, 4
          %s554 = scalar_lea.vmem %s10, %s553
        $region76: #{forward.1} parent=39 // pred_fallthru
          _
        // Predicated region
        $region77: #{forward.1} parent=39 // pred_check
          %p555 = pneg %p320
        $region78: #{forward.1} parent=39 // pred_check_branch
          %557 = sbr.rel (%p555) target = $region80
        $region79: #{forward.1} parent=39 // pred_region
          %p558 = scmp.lt.s32.totalorder %s24, 1
          %s559 = scalar_select %p558, %s24, 1
          %s560 = smul.addr %s559, 64
          %s561 = smul.addr %s560, 4
          %s562 = scalar_lea.vmem %s11, %s561
        $region80: #{forward.1} parent=39 // pred_fallthru
          _
        // Predicated region
        $region81: #{forward.1} parent=39 // pred_check
          %p563 = pneg %p346
        $region82: #{forward.1} parent=39 // pred_check_branch
          %565 = sbr.rel (%p563) target = $region84
        $region83: #{forward.1} parent=39 // pred_region
          %p566 = scmp.lt.s32.totalorder %s24, 1
          %s567 = scalar_select %p566, %s24, 1
          %s568 = scalar_lea.vmem %s12, %s567
        $region84: #{forward.1} parent=39 // pred_fallthru
          _
      $region40: #{forward.1} parent=5 // pred_fallthru
        _
      %p569 = scmp.le.s32.totalorder 1, %s24
      %p570 = scmp.lt.s32.totalorder %s24, 3
      %p571 = pnand %p569, %p570
      %p572 = pneg %p571
      // Predicated region
      $region85: #{forward.1} parent=5 // pred_check
        _
      $region86: #{forward.1} parent=5 // pred_check_branch
        %574 = sbr.rel (%p571) target = $region88
      $region87: #{forward.1} parent=5 // pred_region
        %s575 = ssub.s32 %s24, 1
        %p576 = pneg %p45
        %p577 = pneg %p42
        %p578 = pneg %p66
        %p579 = pneg %p63
        %p580 = scmp.lt.s32.totalorder %s29, 1
        %s581 = scalar_select %p580, %s29, 1
        %s582 = scalar_lea.vmem %s2, %s581
        %p583 = pneg %p92
        %p584 = pneg %p89
        %p585 = scmp.lt.s32.totalorder %s29, 1
        %s586 = scalar_select %p585, %s29, 1
        %s587 = scalar_lea.vmem %s3, %s586
        %p588 = pneg %p118
        %p589 = pneg %p115
        %p590 = scmp.lt.s32.totalorder %s29, 1
        %s591 = scalar_select %p590, %s29, 1
        %s592 = smul.addr %s591, 48
        %s593 = smul.addr %s592, 4
        %s594 = scalar_lea.vmem %s4, %s593
        %p595 = pneg %p144
        %p596 = pneg %p141
        %p597 = scmp.lt.s32.totalorder %s29, 1
        %s598 = scalar_select %p597, %s29, 1
        %s599 = smul.addr %s598, 16
        %s600 = smul.addr %s599, 4
        %s601 = scalar_lea.vmem %s5, %s600
        %p602 = pneg %p170
        %p603 = pneg %p167
        %p604 = scmp.lt.s32.totalorder %s29, 1
        %s605 = scalar_select %p604, %s29, 1
        %s606 = scalar_lea.vmem %s6, %s605
        %p607 = pneg %p196
        %p608 = pneg %p193
        %p609 = scmp.lt.s32.totalorder %s29, 1
        %s610 = scalar_select %p609, %s29, 1
        %s611 = scalar_lea.vmem %s7, %s610
        %p612 = pneg %p222
        %p613 = pneg %p219
        %p614 = scmp.lt.s32.totalorder %s29, 1
        %s615 = scalar_select %p614, %s29, 1
        %s616 = scalar_lea.vmem %s8, %s615
        %p617 = pneg %p248
        %p618 = pneg %p245
        %p619 = scmp.lt.s32.totalorder %s29, 1
        %s620 = scalar_select %p619, %s29, 1
        %s621 = smul.addr %s620, 64
        %s622 = smul.addr %s621, 4
        %s623 = scalar_lea.vmem %s9, %s622
        %p624 = pneg %p274
        %p625 = pneg %p271
        %p626 = scmp.lt.s32.totalorder %s29, 1
        %s627 = scalar_select %p626, %s29, 1
        %s628 = smul.addr %s627, 4
        %s629 = scalar_lea.vmem %s10, %s628
        %p630 = pneg %p300
        %p631 = pneg %p297
        %p632 = scmp.lt.s32.totalorder %s29, 1
        %s633 = scalar_select %p632, %s29, 1
        %s634 = smul.addr %s633, 64
        %s635 = smul.addr %s634, 4
        %s636 = scalar_lea.vmem %s11, %s635
        %p637 = pneg %p326
        %p638 = pneg %p323
        %p639 = scmp.lt.s32.totalorder %s29, 1
        %s640 = scalar_select %p639, %s29, 1
        %s641 = scalar_lea.vmem %s12, %s640
        %p642 = pneg %p352
        %p643 = pneg %p349
        %p644 = pneg %p373
        %p645 = pneg %p370
        %p646 = pneg %p394
        %p647 = pneg %p391
        %p648 = pneg %p415
        %p649 = pneg %p412
        %p650 = pneg %p436
        %p651 = pneg %p433
        %p652 = pneg %p457
        %p653 = pneg %p454
        %p654 = scmp.lt.s32.totalorder %s29, 1
        %s655 = scalar_select %p654, %s29, 1
        %s656 = scalar_lea.vmem %s2, %s655
        %p657 = scmp.lt.s32.totalorder %s29, 1
        %s658 = scalar_select %p657, %s29, 1
        %s659 = scalar_lea.vmem %s3, %s658
        %p660 = scmp.lt.s32.totalorder %s29, 1
        %s661 = scalar_select %p660, %s29, 1
        %s662 = smul.addr %s661, 48
        %s663 = smul.addr %s662, 4
        %s664 = scalar_lea.vmem %s4, %s663
        %p665 = scmp.lt.s32.totalorder %s29, 1
        %s666 = scalar_select %p665, %s29, 1
        %s667 = smul.addr %s666, 16
        %s668 = smul.addr %s667, 4
        %s669 = scalar_lea.vmem %s5, %s668
        %p670 = scmp.lt.s32.totalorder %s29, 1
        %s671 = scalar_select %p670, %s29, 1
        %s672 = scalar_lea.vmem %s6, %s671
        %p673 = scmp.lt.s32.totalorder %s29, 1
        %s674 = scalar_select %p673, %s29, 1
        %s675 = scalar_lea.vmem %s7, %s674
        %p676 = scmp.lt.s32.totalorder %s29, 1
        %s677 = scalar_select %p676, %s29, 1
        %s678 = scalar_lea.vmem %s8, %s677
        %p679 = scmp.lt.s32.totalorder %s29, 1
        %s680 = scalar_select %p679, %s29, 1
        %s681 = smul.addr %s680, 64
        %s682 = smul.addr %s681, 4
        %s683 = scalar_lea.vmem %s9, %s682
        %p684 = scmp.lt.s32.totalorder %s29, 1
        %s685 = scalar_select %p684, %s29, 1
        %s686 = smul.addr %s685, 4
        %s687 = scalar_lea.vmem %s10, %s686
        %p688 = scmp.lt.s32.totalorder %s29, 1
        %s689 = scalar_select %p688, %s29, 1
        %s690 = smul.addr %s689, 64
        %s691 = smul.addr %s690, 4
        %s692 = scalar_lea.vmem %s11, %s691
        %p693 = scmp.lt.s32.totalorder %s29, 1
        %s694 = scalar_select %p693, %s29, 1
        %s695 = scalar_lea.vmem %s12, %s694
        %p697 = scmp.eq.s32.totalorder %s29, 0
        // Predicated region
        $region89: #{forward.1} parent=87 // pred_check
          %p698 = pneg %p697
        $region90: #{forward.1} parent=87 // pred_check_branch
          %700 = sbr.rel (%p698) target = $region92
        $region91: #{forward.1} parent=87 // pred_region
          %v701 = vld [vmem:[%s0] sm:$0xff]
          %v702 = vld [vmem:[%s0 + $0x8] sm:$0xff]
          %v703 = vld [vmem:[%s0 + $0x10] sm:$0xff]
          %v704 = vld [vmem:[%s0 + $0x18] sm:$0xff]
          %v705 = vld [vmem:[%s0 + $0x20] sm:$0xff]
          %v706 = vld [vmem:[%s0 + $0x28] sm:$0xff]
          %v707 = vld [vmem:[%s0 + $0x30] sm:$0xff]
          %v708 = vld [vmem:[%s0 + $0x38] sm:$0xff]
          %v709 = vld [vmem:[%s0 + $0x40] sm:$0xff]
          %v710 = vld [vmem:[%s0 + $0x48] sm:$0xff]
          %v711 = vld [vmem:[%s0 + $0x50] sm:$0xff]
          %v712 = vld [vmem:[%s0 + $0x58] sm:$0xff]
          %v713 = vld [vmem:[%s0 + $0x60] sm:$0xff]
          %v714 = vld [vmem:[%s0 + $0x68] sm:$0xff]
          %v715 = vld [vmem:[%s0 + $0x70] sm:$0xff]
          %v716 = vld [vmem:[%s0 + $0x78] sm:$0xff]
          %v717 = vld [vmem:[%s1] sm:$0xff]
          %v718 = vld [vmem:[%s1 + $0x8] sm:$0xff]
          %v719 = vld [vmem:[%s1 + $0x10] sm:$0xff]
          %v720 = vld [vmem:[%s1 + $0x18] sm:$0xff]
          %v721 = vld [vmem:[%s1 + $0x20] sm:$0xff]
          %v722 = vld [vmem:[%s1 + $0x28] sm:$0xff]
          %v723 = vld [vmem:[%s1 + $0x30] sm:$0xff]
          %v724 = vld [vmem:[%s1 + $0x38] sm:$0xff]
          %v725 = vadd.f32 %v701, %v717
          %v726 = vadd.f32 %v702, %v718
          %v727 = vadd.f32 %v703, %v719
          %v728 = vadd.f32 %v704, %v720
          %v729 = vadd.f32 %v705, %v721
          %v730 = vadd.f32 %v706, %v722
          %v731 = vadd.f32 %v707, %v723
          %v732 = vadd.f32 %v708, %v724
          %733 = vst [vmem:[#allocation2] sm:$0xff] %v725
          %734 = vst [vmem:[#allocation2 + $0x8] sm:$0xff] %v726
          %735 = vst [vmem:[#allocation2 + $0x10] sm:$0xff] %v727
          %736 = vst [vmem:[#allocation2 + $0x18] sm:$0xff] %v728
          %737 = vst [vmem:[#allocation2 + $0x20] sm:$0xff] %v729
          %738 = vst [vmem:[#allocation2 + $0x28] sm:$0xff] %v730
          %739 = vst [vmem:[#allocation2 + $0x30] sm:$0xff] %v731
          %740 = vst [vmem:[#allocation2 + $0x38] sm:$0xff] %v732
          %v741 = vadd.f32 %v709, %v717
          %v742 = vadd.f32 %v710, %v718
          %v743 = vadd.f32 %v711, %v719
          %v744 = vadd.f32 %v712, %v720
          %v745 = vadd.f32 %v713, %v721
          %v746 = vadd.f32 %v714, %v722
          %v747 = vadd.f32 %v715, %v723
          %v748 = vadd.f32 %v716, %v724
          %749 = vst [vmem:[#allocation2 + $0x40] sm:$0xff] %v741
          %750 = vst [vmem:[#allocation2 + $0x48] sm:$0xff] %v742
          %751 = vst [vmem:[#allocation2 + $0x50] sm:$0xff] %v743
          %752 = vst [vmem:[#allocation2 + $0x58] sm:$0xff] %v744
          %753 = vst [vmem:[#allocation2 + $0x60] sm:$0xff] %v745
          %754 = vst [vmem:[#allocation2 + $0x68] sm:$0xff] %v746
          %755 = vst [vmem:[#allocation2 + $0x70] sm:$0xff] %v747
          %756 = vst [vmem:[#allocation2 + $0x78] sm:$0xff] %v748
        $region92: #{forward.1} parent=87 // pred_fallthru
          _
        %v757 = vld [vmem:[#allocation2] sm:$0xff]
        %v758 = vld [vmem:[#allocation2 + $0x8] sm:$0xff]
        %v759 = vld [vmem:[#allocation2 + $0x10] sm:$0xff]
        %v760 = vld [vmem:[#allocation2 + $0x18] sm:$0xff]
        %v761 = vld [vmem:[#allocation2 + $0x20] sm:$0xff]
        %v762 = vld [vmem:[#allocation2 + $0x28] sm:$0xff]
        %v763 = vld [vmem:[#allocation2 + $0x30] sm:$0xff]
        %v764 = vld [vmem:[#allocation2 + $0x38] sm:$0xff]
        %v765 = vld [vmem:[#allocation2 + $0x40] sm:$0xff]
        %v766 = vld [vmem:[#allocation2 + $0x48] sm:$0xff]
        %v767 = vld [vmem:[#allocation2 + $0x50] sm:$0xff]
        %v768 = vld [vmem:[#allocation2 + $0x58] sm:$0xff]
        %v769 = vld [vmem:[#allocation2 + $0x60] sm:$0xff]
        %v770 = vld [vmem:[#allocation2 + $0x68] sm:$0xff]
        %v771 = vld [vmem:[#allocation2 + $0x70] sm:$0xff]
        %v772 = vld [vmem:[#allocation2 + $0x78] sm:$0xff]
        %v773 = vld [vmem:[%s656] sm:$0x1]
        %v774 = vld [vmem:[%s659] sm:$0x1]
        %775 = vadd.xlane.f32.xlu0 %v757
        %v776 = vpop.xlane.xlu0 %775
        %777 = vadd.xlane.f32.xlu0 %v758
        %v778 = vpop.xlane.xlu0 %777
        %779 = vadd.xlane.f32.xlu0 %v759
        %v780 = vpop.xlane.xlu0 %779
        %781 = vadd.xlane.f32.xlu0 %v760
        %v782 = vpop.xlane.xlu0 %781
        %783 = vadd.xlane.f32.xlu0 %v761
        %v784 = vpop.xlane.xlu0 %783
        %785 = vadd.xlane.f32.xlu0 %v762
        %v786 = vpop.xlane.xlu0 %785
        %787 = vadd.xlane.f32.xlu0 %v763
        %v788 = vpop.xlane.xlu0 %787
        %789 = vadd.xlane.f32.xlu0 %v764
        %v790 = vpop.xlane.xlu0 %789
        %791 = vadd.xlane.f32.xlu0 %v765
        %v792 = vpop.xlane.xlu0 %791
        %793 = vadd.xlane.f32.xlu0 %v766
        %v794 = vpop.xlane.xlu0 %793
        %795 = vadd.xlane.f32.xlu0 %v767
        %v796 = vpop.xlane.xlu0 %795
        %797 = vadd.xlane.f32.xlu0 %v768
        %v798 = vpop.xlane.xlu0 %797
        %799 = vadd.xlane.f32.xlu0 %v769
        %v800 = vpop.xlane.xlu0 %799
        %801 = vadd.xlane.f32.xlu0 %v770
        %v802 = vpop.xlane.xlu0 %801
        %803 = vadd.xlane.f32.xlu0 %v771
        %v804 = vpop.xlane.xlu0 %803
        %805 = vadd.xlane.f32.xlu0 %v772
        %v806 = vpop.xlane.xlu0 %805
        %v807 = vrcp.pop 128.0
        %v808 = vmul.f32 128.0, %v807
        %v809 = vsub.f32 1.0, %v808
        %v810 = vmul.f32 %v807, %v809
        %v811 = vadd.f32 %v807, %v810
        %vm812 = vweird.f32 %v807
        %v813 = vsel %vm812, %v807, %v811
        %v814 = vmul.f32 %v776, %v813
        %v815 = vmul.f32 %v778, %v813
        %v816 = vmul.f32 %v780, %v813
        %v817 = vmul.f32 %v782, %v813
        %v818 = vmul.f32 %v784, %v813
        %v819 = vmul.f32 %v786, %v813
        %v820 = vmul.f32 %v788, %v813
        %v821 = vmul.f32 %v790, %v813
        %v822 = vmul.f32 %v792, %v813
        %v823 = vmul.f32 %v794, %v813
        %v824 = vmul.f32 %v796, %v813
        %v825 = vmul.f32 %v798, %v813
        %v826 = vmul.f32 %v800, %v813
        %v827 = vmul.f32 %v802, %v813
        %v828 = vmul.f32 %v804, %v813
        %v829 = vmul.f32 %v806, %v813
        %v830 = vsub.f32 %v757, %v814
        %v831 = vsub.f32 %v758, %v815
        %v832 = vsub.f32 %v759, %v816
        %v833 = vsub.f32 %v760, %v817
        %v834 = vsub.f32 %v761, %v818
        %v835 = vsub.f32 %v762, %v819
        %v836 = vsub.f32 %v763, %v820
        %v837 = vsub.f32 %v764, %v821
        %v838 = vsub.f32 %v765, %v822
        %v839 = vsub.f32 %v766, %v823
        %v840 = vsub.f32 %v767, %v824
        %v841 = vsub.f32 %v768, %v825
        %v842 = vsub.f32 %v769, %v826
        %v843 = vsub.f32 %v770, %v827
        %v844 = vsub.f32 %v771, %v828
        %v845 = vsub.f32 %v772, %v829
        %v846 = vmul.f32 %v830, %v830
        %v847 = vmul.f32 %v831, %v831
        %v848 = vmul.f32 %v832, %v832
        %v849 = vmul.f32 %v833, %v833
        %v850 = vmul.f32 %v834, %v834
        %v851 = vmul.f32 %v835, %v835
        %v852 = vmul.f32 %v836, %v836
        %v853 = vmul.f32 %v837, %v837
        %v854 = vmul.f32 %v838, %v838
        %v855 = vmul.f32 %v839, %v839
        %v856 = vmul.f32 %v840, %v840
        %v857 = vmul.f32 %v841, %v841
        %v858 = vmul.f32 %v842, %v842
        %v859 = vmul.f32 %v843, %v843
        %v860 = vmul.f32 %v844, %v844
        %v861 = vmul.f32 %v845, %v845
        %862 = vadd.xlane.f32.xlu0 %v846
        %v863 = vpop.xlane.xlu0 %862
        %864 = vadd.xlane.f32.xlu0 %v847
        %v865 = vpop.xlane.xlu0 %864
        %866 = vadd.xlane.f32.xlu0 %v848
        %v867 = vpop.xlane.xlu0 %866
        %868 = vadd.xlane.f32.xlu0 %v849
        %v869 = vpop.xlane.xlu0 %868
        %870 = vadd.xlane.f32.xlu0 %v850
        %v871 = vpop.xlane.xlu0 %870
        %872 = vadd.xlane.f32.xlu0 %v851
        %v873 = vpop.xlane.xlu0 %872
        %874 = vadd.xlane.f32.xlu0 %v852
        %v875 = vpop.xlane.xlu0 %874
        %876 = vadd.xlane.f32.xlu0 %v853
        %v877 = vpop.xlane.xlu0 %876
        %878 = vadd.xlane.f32.xlu0 %v854
        %v879 = vpop.xlane.xlu0 %878
        %880 = vadd.xlane.f32.xlu0 %v855
        %v881 = vpop.xlane.xlu0 %880
        %882 = vadd.xlane.f32.xlu0 %v856
        %v883 = vpop.xlane.xlu0 %882
        %884 = vadd.xlane.f32.xlu0 %v857
        %v885 = vpop.xlane.xlu0 %884
        %886 = vadd.xlane.f32.xlu0 %v858
        %v887 = vpop.xlane.xlu0 %886
        %888 = vadd.xlane.f32.xlu0 %v859
        %v889 = vpop.xlane.xlu0 %888
        %890 = vadd.xlane.f32.xlu0 %v860
        %v891 = vpop.xlane.xlu0 %890
        %892 = vadd.xlane.f32.xlu0 %v861
        %v893 = vpop.xlane.xlu0 %892
        %v894 = vmul.f32 %v863, %v813
        %v895 = vmul.f32 %v865, %v813
        %v896 = vmul.f32 %v867, %v813
        %v897 = vmul.f32 %v869, %v813
        %v898 = vmul.f32 %v871, %v813
        %v899 = vmul.f32 %v873, %v813
        %v900 = vmul.f32 %v875, %v813
        %v901 = vmul.f32 %v877, %v813
        %v902 = vmul.f32 %v879, %v813
        %v903 = vmul.f32 %v881, %v813
        %v904 = vmul.f32 %v883, %v813
        %v905 = vmul.f32 %v885, %v813
        %v906 = vmul.f32 %v887, %v813
        %v907 = vmul.f32 %v889, %v813
        %v908 = vmul.f32 %v891, %v813
        %v909 = vmul.f32 %v893, %v813
        %v910 = vadd.f32 %v894, 1e-05
        %v911 = vadd.f32 %v895, 1e-05
        %v912 = vadd.f32 %v896, 1e-05
        %v913 = vadd.f32 %v897, 1e-05
        %v914 = vadd.f32 %v898, 1e-05
        %v915 = vadd.f32 %v899, 1e-05
        %v916 = vadd.f32 %v900, 1e-05
        %v917 = vadd.f32 %v901, 1e-05
        %v918 = vadd.f32 %v902, 1e-05
        %v919 = vadd.f32 %v903, 1e-05
        %v920 = vadd.f32 %v904, 1e-05
        %v921 = vadd.f32 %v905, 1e-05
        %v922 = vadd.f32 %v906, 1e-05
        %v923 = vadd.f32 %v907, 1e-05
        %v924 = vadd.f32 %v908, 1e-05
        %v925 = vadd.f32 %v909, 1e-05
        %v926 = vrsqrt.pop %v910
        %v927 = vmul.f32 %v926, %v910
        %v928 = vmul.f32 %v927, %v926
        %v929 = vmul.f32 0.5, %v928
        %v930 = vsub.f32 1.5, %v929
        %v931 = vmul.f32 %v926, %v930
        %vm932 = vweird.f32 %v910
        %vm933 = vweird.f32 %v926
        %vm934 = vmor %vm932, %vm933
        %v935 = vsel %vm934, %v926, %v931
        %v936 = vrsqrt.pop %v911
        %v937 = vmul.f32 %v936, %v911
        %v938 = vmul.f32 %v937, %v936
        %v939 = vmul.f32 0.5, %v938
        %v940 = vsub.f32 1.5, %v939
        %v941 = vmul.f32 %v936, %v940
        %vm942 = vweird.f32 %v911
        %vm943 = vweird.f32 %v936
        %vm944 = vmor %vm942, %vm943
        %v945 = vsel %vm944, %v936, %v941
        %v946 = vrsqrt.pop %v912
        %v947 = vmul.f32 %v946, %v912
        %v948 = vmul.f32 %v947, %v946
        %v949 = vmul.f32 0.5, %v948
        %v950 = vsub.f32 1.5, %v949
        %v951 = vmul.f32 %v946, %v950
        %vm952 = vweird.f32 %v912
        %vm953 = vweird.f32 %v946
        %vm954 = vmor %vm952, %vm953
        %v955 = vsel %vm954, %v946, %v951
        %v956 = vrsqrt.pop %v913
        %v957 = vmul.f32 %v956, %v913
        %v958 = vmul.f32 %v957, %v956
        %v959 = vmul.f32 0.5, %v958
        %v960 = vsub.f32 1.5, %v959
        %v961 = vmul.f32 %v956, %v960
        %vm962 = vweird.f32 %v913
        %vm963 = vweird.f32 %v956
        %vm964 = vmor %vm962, %vm963
        %v965 = vsel %vm964, %v956, %v961
        %v966 = vrsqrt.pop %v914
        %v967 = vmul.f32 %v966, %v914
        %v968 = vmul.f32 %v967, %v966
        %v969 = vmul.f32 0.5, %v968
        %v970 = vsub.f32 1.5, %v969
        %v971 = vmul.f32 %v966, %v970
        %vm972 = vweird.f32 %v914
        %vm973 = vweird.f32 %v966
        %vm974 = vmor %vm972, %vm973
        %v975 = vsel %vm974, %v966, %v971
        %v976 = vrsqrt.pop %v915
        %v977 = vmul.f32 %v976, %v915
        %v978 = vmul.f32 %v977, %v976
        %v979 = vmul.f32 0.5, %v978
        %v980 = vsub.f32 1.5, %v979
        %v981 = vmul.f32 %v976, %v980
        %vm982 = vweird.f32 %v915
        %vm983 = vweird.f32 %v976
        %vm984 = vmor %vm982, %vm983
        %v985 = vsel %vm984, %v976, %v981
        %v986 = vrsqrt.pop %v916
        %v987 = vmul.f32 %v986, %v916
        %v988 = vmul.f32 %v987, %v986
        %v989 = vmul.f32 0.5, %v988
        %v990 = vsub.f32 1.5, %v989
        %v991 = vmul.f32 %v986, %v990
        %vm992 = vweird.f32 %v916
        %vm993 = vweird.f32 %v986
        %vm994 = vmor %vm992, %vm993
        %v995 = vsel %vm994, %v986, %v991
        %v996 = vrsqrt.pop %v917
        %v997 = vmul.f32 %v996, %v917
        %v998 = vmul.f32 %v997, %v996
        %v999 = vmul.f32 0.5, %v998
        %v1000 = vsub.f32 1.5, %v999
        %v1001 = vmul.f32 %v996, %v1000
        %vm1002 = vweird.f32 %v917
        %vm1003 = vweird.f32 %v996
        %vm1004 = vmor %vm1002, %vm1003
        %v1005 = vsel %vm1004, %v996, %v1001
        %v1006 = vrsqrt.pop %v918
        %v1007 = vmul.f32 %v1006, %v918
        %v1008 = vmul.f32 %v1007, %v1006
        %v1009 = vmul.f32 0.5, %v1008
        %v1010 = vsub.f32 1.5, %v1009
        %v1011 = vmul.f32 %v1006, %v1010
        %vm1012 = vweird.f32 %v918
        %vm1013 = vweird.f32 %v1006
        %vm1014 = vmor %vm1012, %vm1013
        %v1015 = vsel %vm1014, %v1006, %v1011
        %v1016 = vrsqrt.pop %v919
        %v1017 = vmul.f32 %v1016, %v919
        %v1018 = vmul.f32 %v1017, %v1016
        %v1019 = vmul.f32 0.5, %v1018
        %v1020 = vsub.f32 1.5, %v1019
        %v1021 = vmul.f32 %v1016, %v1020
        %vm1022 = vweird.f32 %v919
        %vm1023 = vweird.f32 %v1016
        %vm1024 = vmor %vm1022, %vm1023
        %v1025 = vsel %vm1024, %v1016, %v1021
        %v1026 = vrsqrt.pop %v920
        %v1027 = vmul.f32 %v1026, %v920
        %v1028 = vmul.f32 %v1027, %v1026
        %v1029 = vmul.f32 0.5, %v1028
        %v1030 = vsub.f32 1.5, %v1029
        %v1031 = vmul.f32 %v1026, %v1030
        %vm1032 = vweird.f32 %v920
        %vm1033 = vweird.f32 %v1026
        %vm1034 = vmor %vm1032, %vm1033
        %v1035 = vsel %vm1034, %v1026, %v1031
        %v1036 = vrsqrt.pop %v921
        %v1037 = vmul.f32 %v1036, %v921
        %v1038 = vmul.f32 %v1037, %v1036
        %v1039 = vmul.f32 0.5, %v1038
        %v1040 = vsub.f32 1.5, %v1039
        %v1041 = vmul.f32 %v1036, %v1040
        %vm1042 = vweird.f32 %v921
        %vm1043 = vweird.f32 %v1036
        %vm1044 = vmor %vm1042, %vm1043
        %v1045 = vsel %vm1044, %v1036, %v1041
        %v1046 = vrsqrt.pop %v922
        %v1047 = vmul.f32 %v1046, %v922
        %v1048 = vmul.f32 %v1047, %v1046
        %v1049 = vmul.f32 0.5, %v1048
        %v1050 = vsub.f32 1.5, %v1049
        %v1051 = vmul.f32 %v1046, %v1050
        %vm1052 = vweird.f32 %v922
        %vm1053 = vweird.f32 %v1046
        %vm1054 = vmor %vm1052, %vm1053
        %v1055 = vsel %vm1054, %v1046, %v1051
        %v1056 = vrsqrt.pop %v923
        %v1057 = vmul.f32 %v1056, %v923
        %v1058 = vmul.f32 %v1057, %v1056
        %v1059 = vmul.f32 0.5, %v1058
        %v1060 = vsub.f32 1.5, %v1059
        %v1061 = vmul.f32 %v1056, %v1060
        %vm1062 = vweird.f32 %v923
        %vm1063 = vweird.f32 %v1056
        %vm1064 = vmor %vm1062, %vm1063
        %v1065 = vsel %vm1064, %v1056, %v1061
        %v1066 = vrsqrt.pop %v924
        %v1067 = vmul.f32 %v1066, %v924
        %v1068 = vmul.f32 %v1067, %v1066
        %v1069 = vmul.f32 0.5, %v1068
        %v1070 = vsub.f32 1.5, %v1069
        %v1071 = vmul.f32 %v1066, %v1070
        %vm1072 = vweird.f32 %v924
        %vm1073 = vweird.f32 %v1066
        %vm1074 = vmor %vm1072, %vm1073
        %v1075 = vsel %vm1074, %v1066, %v1071
        %v1076 = vrsqrt.pop %v925
        %v1077 = vmul.f32 %v1076, %v925
        %v1078 = vmul.f32 %v1077, %v1076
        %v1079 = vmul.f32 0.5, %v1078
        %v1080 = vsub.f32 1.5, %v1079
        %v1081 = vmul.f32 %v1076, %v1080
        %vm1082 = vweird.f32 %v925
        %vm1083 = vweird.f32 %v1076
        %vm1084 = vmor %vm1082, %vm1083
        %v1085 = vsel %vm1084, %v1076, %v1081
        %v1086 = vmul.f32 %v830, %v935
        %v1087 = vmul.f32 %v831, %v945
        %v1088 = vmul.f32 %v832, %v955
        %v1089 = vmul.f32 %v833, %v965
        %v1090 = vmul.f32 %v834, %v975
        %v1091 = vmul.f32 %v835, %v985
        %v1092 = vmul.f32 %v836, %v995
        %v1093 = vmul.f32 %v837, %v1005
        %v1094 = vmul.f32 %v838, %v1015
        %v1095 = vmul.f32 %v839, %v1025
        %v1096 = vmul.f32 %v840, %v1035
        %v1097 = vmul.f32 %v841, %v1045
        %v1098 = vmul.f32 %v842, %v1055
        %v1099 = vmul.f32 %v843, %v1065
        %v1100 = vmul.f32 %v844, %v1075
        %v1101 = vmul.f32 %v845, %v1085
        %v1103 = vperm.slane %v773, 0
        %v1105 = vmul.f32 %v1086, %v1103
        %v1106 = vmul.f32 %v1087, %v1103
        %v1107 = vmul.f32 %v1088, %v1103
        %v1108 = vmul.f32 %v1089, %v1103
        %v1109 = vmul.f32 %v1090, %v1103
        %v1110 = vmul.f32 %v1091, %v1103
        %v1111 = vmul.f32 %v1092, %v1103
        %v1112 = vmul.f32 %v1093, %v1103
        %v1113 = vmul.f32 %v1094, %v1103
        %v1114 = vmul.f32 %v1095, %v1103
        %v1115 = vmul.f32 %v1096, %v1103
        %v1116 = vmul.f32 %v1097, %v1103
        %v1117 = vmul.f32 %v1098, %v1103
        %v1118 = vmul.f32 %v1099, %v1103
        %v1119 = vmul.f32 %v1100, %v1103
        %v1120 = vmul.f32 %v1101, %v1103
        %v1122 = vperm.slane %v774, 0
        %v1124 = vadd.f32 %v1105, %v1122
        %v1125 = vadd.f32 %v1106, %v1122
        %v1126 = vadd.f32 %v1107, %v1122
        %v1127 = vadd.f32 %v1108, %v1122
        %v1128 = vadd.f32 %v1109, %v1122
        %v1129 = vadd.f32 %v1110, %v1122
        %v1130 = vadd.f32 %v1111, %v1122
        %v1131 = vadd.f32 %v1112, %v1122
        %v1132 = vadd.f32 %v1113, %v1122
        %v1133 = vadd.f32 %v1114, %v1122
        %v1134 = vadd.f32 %v1115, %v1122
        %v1135 = vadd.f32 %v1116, %v1122
        %v1136 = vadd.f32 %v1117, %v1122
        %v1137 = vadd.f32 %v1118, %v1122
        %v1138 = vadd.f32 %v1119, %v1122
        %v1139 = vadd.f32 %v1120, %v1122
        %v1140 = vpack.c.bf16 %v1125, %v1124
        %v1141 = vpack.c.bf16 %v1127, %v1126
        %v1142 = vpack.c.bf16 %v1129, %v1128
        %v1143 = vpack.c.bf16 %v1131, %v1130
        %v1144 = vpack.c.bf16 %v1133, %v1132
        %v1145 = vpack.c.bf16 %v1135, %v1134
        %v1146 = vpack.c.bf16 %v1137, %v1136
        %v1147 = vpack.c.bf16 %v1139, %v1138
        %v1148 = vld [vmem:[%s664] sm:$0xff]
        %v1149 = vld [vmem:[%s664 + $0x8] sm:$0xf]
        %v1150 = vld [vmem:[%s664 + $0xc] sm:$0xff]
        %v1151 = vld [vmem:[%s664 + $0x14] sm:$0xf]
        %v1152 = vld [vmem:[%s664 + $0x18] sm:$0xff]
        %v1153 = vld [vmem:[%s664 + $0x20] sm:$0xf]
        %v1154 = vld [vmem:[%s664 + $0x24] sm:$0xff]
        %v1155 = vld [vmem:[%s664 + $0x2c] sm:$0xf]
        %v1156 = vld [vmem:[%s664 + $0x30] sm:$0xff]
        %v1157 = vld [vmem:[%s664 + $0x38] sm:$0xf]
        %v1158 = vld [vmem:[%s664 + $0x3c] sm:$0xff]
        %v1159 = vld [vmem:[%s664 + $0x44] sm:$0xf]
        %v1160 = vld [vmem:[%s664 + $0x48] sm:$0xff]
        %v1161 = vld [vmem:[%s664 + $0x50] sm:$0xf]
        %v1162 = vld [vmem:[%s664 + $0x54] sm:$0xff]
        %v1163 = vld [vmem:[%s664 + $0x5c] sm:$0xf]
        %v1164 = vld [vmem:[%s664 + $0x60] sm:$0xff]
        %v1165 = vld [vmem:[%s664 + $0x68] sm:$0xf]
        %v1166 = vld [vmem:[%s664 + $0x6c] sm:$0xff]
        %v1167 = vld [vmem:[%s664 + $0x74] sm:$0xf]
        %v1168 = vld [vmem:[%s664 + $0x78] sm:$0xff]
        %v1169 = vld [vmem:[%s664 + $0x80] sm:$0xf]
        %v1170 = vld [vmem:[%s664 + $0x84] sm:$0xff]
        %v1171 = vld [vmem:[%s664 + $0x8c] sm:$0xf]
        %v1172 = vld [vmem:[%s664 + $0x90] sm:$0xff]
        %v1173 = vld [vmem:[%s664 + $0x98] sm:$0xf]
        %v1174 = vld [vmem:[%s664 + $0x9c] sm:$0xff]
        %v1175 = vld [vmem:[%s664 + $0xa4] sm:$0xf]
        %v1176 = vld [vmem:[%s664 + $0xa8] sm:$0xff]
        %v1177 = vld [vmem:[%s664 + $0xb0] sm:$0xf]
        %v1178 = vld [vmem:[%s664 + $0xb4] sm:$0xff]
        %v1179 = vld [vmem:[%s664 + $0xbc] sm:$0xf]
        %v1212 = vunpack.c.l.b16 %v1148
        %v1213 = vunpack.c.h.b16 %v1148
        %v1214 = vunpack.c.l.b16 %v1149
        %v1215 = vunpack.c.l.b16 %v1150
        %v1216 = vunpack.c.h.b16 %v1150
        %v1217 = vunpack.c.l.b16 %v1151
        %v1218 = vunpack.c.l.b16 %v1152
        %v1219 = vunpack.c.h.b16 %v1152
        %v1220 = vunpack.c.l.b16 %v1153
        %v1221 = vunpack.c.l.b16 %v1154
        %v1222 = vunpack.c.h.b16 %v1154
        %v1223 = vunpack.c.l.b16 %v1155
        %v1224 = vunpack.c.l.b16 %v1156
        %v1225 = vunpack.c.h.b16 %v1156
        %v1226 = vunpack.c.l.b16 %v1157
        %v1227 = vunpack.c.l.b16 %v1158
        %v1228 = vunpack.c.h.b16 %v1158
        %v1229 = vunpack.c.l.b16 %v1159
        %v1230 = vunpack.c.l.b16 %v1160
        %v1231 = vunpack.c.h.b16 %v1160
        %v1232 = vunpack.c.l.b16 %v1161
        %v1233 = vunpack.c.l.b16 %v1162
        %v1234 = vunpack.c.h.b16 %v1162
        %v1235 = vunpack.c.l.b16 %v1163
        %v1236 = vunpack.c.l.b16 %v1164
        %v1237 = vunpack.c.h.b16 %v1164
        %v1238 = vunpack.c.l.b16 %v1165
        %v1239 = vunpack.c.l.b16 %v1166
        %v1240 = vunpack.c.h.b16 %v1166
        %v1241 = vunpack.c.l.b16 %v1167
        %v1242 = vunpack.c.l.b16 %v1168
        %v1243 = vunpack.c.h.b16 %v1168
        %v1244 = vunpack.c.l.b16 %v1169
        %v1245 = vunpack.c.l.b16 %v1170
        %v1246 = vunpack.c.h.b16 %v1170
        %v1247 = vunpack.c.l.b16 %v1171
        %v1248 = vunpack.c.l.b16 %v1172
        %v1249 = vunpack.c.h.b16 %v1172
        %v1250 = vunpack.c.l.b16 %v1173
        %v1251 = vunpack.c.l.b16 %v1174
        %v1252 = vunpack.c.h.b16 %v1174
        %v1253 = vunpack.c.l.b16 %v1175
        %v1254 = vunpack.c.l.b16 %v1176
        %v1255 = vunpack.c.h.b16 %v1176
        %v1256 = vunpack.c.l.b16 %v1177
        %v1257 = vunpack.c.l.b16 %v1178
        %v1258 = vunpack.c.h.b16 %v1178
        %v1259 = vunpack.c.l.b16 %v1179
        %v1260 = vpack.c.b16 %v1215, %v1212
        %v1261 = vpack.c.b16 %v1216, %v1213
        %v1262 = vpack.c.b16 %v1217, %v1214
        %v1263 = vpack.c.b16 %v1221, %v1218
        %v1264 = vpack.c.b16 %v1222, %v1219
        %v1265 = vpack.c.b16 %v1223, %v1220
        %v1266 = vpack.c.b16 %v1227, %v1224
        %v1267 = vpack.c.b16 %v1228, %v1225
        %v1268 = vpack.c.b16 %v1229, %v1226
        %v1269 = vpack.c.b16 %v1233, %v1230
        %v1270 = vpack.c.b16 %v1234, %v1231
        %v1271 = vpack.c.b16 %v1235, %v1232
        %v1272 = vpack.c.b16 %v1239, %v1236
        %v1273 = vpack.c.b16 %v1240, %v1237
        %v1274 = vpack.c.b16 %v1241, %v1238
        %v1275 = vpack.c.b16 %v1245, %v1242
        %v1276 = vpack.c.b16 %v1246, %v1243
        %v1277 = vpack.c.b16 %v1247, %v1244
        %v1278 = vpack.c.b16 %v1251, %v1248
        %v1279 = vpack.c.b16 %v1252, %v1249
        %v1280 = vpack.c.b16 %v1253, %v1250
        %v1281 = vpack.c.b16 %v1257, %v1254
        %v1282 = vpack.c.b16 %v1258, %v1255
        %v1283 = vpack.c.b16 %v1259, %v1256
        %1308 = vmatpush.bf16.msra.mxu0 %v1281
        %1309 = vmatpush.bf16.msra.mxu0 %v1278
        %1310 = vmatpush.bf16.msra.mxu0 %v1275
        %1311 = vmatpush.bf16.msra.mxu0 %v1272
        %1312 = vmatpush.bf16.msra.mxu0 %v1269
        %1313 = vmatpush.bf16.msra.mxu0 %v1266
        %1314 = vmatpush.bf16.msra.mxu0 %v1263
        %1315 = vmatpush.bf16.msra.mxu0 %v1260
        %1316 = vmatmul.bf16.gmra.mxu0 %v1140
        %v1317 = vpop.f32.mrf.mxu0
        %v1318 = vadd.f32 0.0, %v1317
        %v1319 = vpop.f32.mrf.mxu0
        %v1320 = vadd.f32 0.0, %v1319
        %1321 = vmatmul.bf16.gmra.mxu0 %v1141
        %v1322 = vpop.f32.mrf.mxu0
        %v1323 = vadd.f32 0.0, %v1322
        %v1324 = vpop.f32.mrf.mxu0
        %v1325 = vadd.f32 0.0, %v1324
        %1326 = vmatmul.bf16.gmra.mxu0 %v1142
        %v1327 = vpop.f32.mrf.mxu0
        %v1328 = vadd.f32 0.0, %v1327
        %v1329 = vpop.f32.mrf.mxu0
        %v1330 = vadd.f32 0.0, %v1329
        %1331 = vmatmul.bf16.gmra.mxu0 %v1143
        %v1332 = vpop.f32.mrf.mxu0
        %v1333 = vadd.f32 0.0, %v1332
        %v1334 = vpop.f32.mrf.mxu0
        %v1335 = vadd.f32 0.0, %v1334
        %1336 = vmatmul.bf16.gmra.mxu0 %v1144
        %v1337 = vpop.f32.mrf.mxu0
        %v1338 = vadd.f32 0.0, %v1337
        %v1339 = vpop.f32.mrf.mxu0
        %v1340 = vadd.f32 0.0, %v1339
        %1341 = vmatmul.bf16.gmra.mxu0 %v1145
        %v1342 = vpop.f32.mrf.mxu0
        %v1343 = vadd.f32 0.0, %v1342
        %v1344 = vpop.f32.mrf.mxu0
        %v1345 = vadd.f32 0.0, %v1344
        %1346 = vmatmul.bf16.gmra.mxu0 %v1146
        %v1347 = vpop.f32.mrf.mxu0
        %v1348 = vadd.f32 0.0, %v1347
        %v1349 = vpop.f32.mrf.mxu0
        %v1350 = vadd.f32 0.0, %v1349
        %1351 = vmatmul.bf16.gmra.mxu0 %v1147
        %v1352 = vpop.f32.mrf.mxu0
        %v1353 = vadd.f32 0.0, %v1352
        %v1354 = vpop.f32.mrf.mxu0
        %v1355 = vadd.f32 0.0, %v1354
        %1356 = vdwg.mxu0
        %1357 = vmatpush.bf16.msra.mxu0 %v1282
        %1358 = vmatpush.bf16.msra.mxu0 %v1279
        %1359 = vmatpush.bf16.msra.mxu0 %v1276
        %1360 = vmatpush.bf16.msra.mxu0 %v1273
        %1361 = vmatpush.bf16.msra.mxu0 %v1270
        %1362 = vmatpush.bf16.msra.mxu0 %v1267
        %1363 = vmatpush.bf16.msra.mxu0 %v1264
        %1364 = vmatpush.bf16.msra.mxu0 %v1261
        %1365 = vmatmul.bf16.gmra.mxu0 %v1140
        %v1366 = vpop.f32.mrf.mxu0
        %v1367 = vadd.f32 0.0, %v1366
        %v1368 = vpop.f32.mrf.mxu0
        %v1369 = vadd.f32 0.0, %v1368
        %1370 = vmatmul.bf16.gmra.mxu0 %v1141
        %v1371 = vpop.f32.mrf.mxu0
        %v1372 = vadd.f32 0.0, %v1371
        %v1373 = vpop.f32.mrf.mxu0
        %v1374 = vadd.f32 0.0, %v1373
        %1375 = vmatmul.bf16.gmra.mxu0 %v1142
        %v1376 = vpop.f32.mrf.mxu0
        %v1377 = vadd.f32 0.0, %v1376
        %v1378 = vpop.f32.mrf.mxu0
        %v1379 = vadd.f32 0.0, %v1378
        %1380 = vmatmul.bf16.gmra.mxu0 %v1143
        %v1381 = vpop.f32.mrf.mxu0
        %v1382 = vadd.f32 0.0, %v1381
        %v1383 = vpop.f32.mrf.mxu0
        %v1384 = vadd.f32 0.0, %v1383
        %1385 = vmatmul.bf16.gmra.mxu0 %v1144
        %v1386 = vpop.f32.mrf.mxu0
        %v1387 = vadd.f32 0.0, %v1386
        %v1388 = vpop.f32.mrf.mxu0
        %v1389 = vadd.f32 0.0, %v1388
        %1390 = vmatmul.bf16.gmra.mxu0 %v1145
        %v1391 = vpop.f32.mrf.mxu0
        %v1392 = vadd.f32 0.0, %v1391
        %v1393 = vpop.f32.mrf.mxu0
        %v1394 = vadd.f32 0.0, %v1393
        %1395 = vmatmul.bf16.gmra.mxu0 %v1146
        %v1396 = vpop.f32.mrf.mxu0
        %v1397 = vadd.f32 0.0, %v1396
        %v1398 = vpop.f32.mrf.mxu0
        %v1399 = vadd.f32 0.0, %v1398
        %1400 = vmatmul.bf16.gmra.mxu0 %v1147
        %v1401 = vpop.f32.mrf.mxu0
        %v1402 = vadd.f32 0.0, %v1401
        %v1403 = vpop.f32.mrf.mxu0
        %v1404 = vadd.f32 0.0, %v1403
        %1405 = vdwg.mxu0
        %1406 = vmatpush.bf16.msra.mxu0 %v1283
        %1407 = vmatpush.bf16.msra.mxu0 %v1280
        %1408 = vmatpush.bf16.msra.mxu0 %v1277
        %1409 = vmatpush.bf16.msra.mxu0 %v1274
        %1410 = vmatpush.bf16.msra.mxu0 %v1271
        %1411 = vmatpush.bf16.msra.mxu0 %v1268
        %1412 = vmatpush.bf16.msra.mxu0 %v1265
        %1413 = vmatpush.bf16.msra.mxu0 %v1262
        %1414 = vmatmul.bf16.gmra.mxu0 %v1140
        %v1415 = vpop.f32.mrf.mxu0
        %v1416 = vadd.f32 0.0, %v1415
        %v1417 = vpop.f32.mrf.mxu0
        %v1418 = vadd.f32 0.0, %v1417
        %1419 = vmatmul.bf16.gmra.mxu0 %v1141
        %v1420 = vpop.f32.mrf.mxu0
        %v1421 = vadd.f32 0.0, %v1420
        %v1422 = vpop.f32.mrf.mxu0
        %v1423 = vadd.f32 0.0, %v1422
        %1424 = vmatmul.bf16.gmra.mxu0 %v1142
        %v1425 = vpop.f32.mrf.mxu0
        %v1426 = vadd.f32 0.0, %v1425
        %v1427 = vpop.f32.mrf.mxu0
        %v1428 = vadd.f32 0.0, %v1427
        %1429 = vmatmul.bf16.gmra.mxu0 %v1143
        %v1430 = vpop.f32.mrf.mxu0
        %v1431 = vadd.f32 0.0, %v1430
        %v1432 = vpop.f32.mrf.mxu0
        %v1433 = vadd.f32 0.0, %v1432
        %1434 = vmatmul.bf16.gmra.mxu0 %v1144
        %v1435 = vpop.f32.mrf.mxu0
        %v1436 = vadd.f32 0.0, %v1435
        %v1437 = vpop.f32.mrf.mxu0
        %v1438 = vadd.f32 0.0, %v1437
        %1439 = vmatmul.bf16.gmra.mxu0 %v1145
        %v1440 = vpop.f32.mrf.mxu0
        %v1441 = vadd.f32 0.0, %v1440
        %v1442 = vpop.f32.mrf.mxu0
        %v1443 = vadd.f32 0.0, %v1442
        %1444 = vmatmul.bf16.gmra.mxu0 %v1146
        %v1445 = vpop.f32.mrf.mxu0
        %v1446 = vadd.f32 0.0, %v1445
        %v1447 = vpop.f32.mrf.mxu0
        %v1448 = vadd.f32 0.0, %v1447
        %1449 = vmatmul.bf16.gmra.mxu0 %v1147
        %v1450 = vpop.f32.mrf.mxu0
        %v1451 = vadd.f32 0.0, %v1450
        %v1452 = vpop.f32.mrf.mxu0
        %v1453 = vadd.f32 0.0, %v1452
        %1454 = vdwg.mxu0
        %v1455 = vpack.c.bf16 %v1367, %v1318
        %v1456 = vpack.c.bf16 %v1416, %v1416
        %v1457 = vpack.c.bf16 %v1369, %v1320
        %v1458 = vpack.c.bf16 %v1418, %v1418
        %v1459 = vpack.c.bf16 %v1372, %v1323
        %v1460 = vpack.c.bf16 %v1421, %v1421
        %v1461 = vpack.c.bf16 %v1374, %v1325
        %v1462 = vpack.c.bf16 %v1423, %v1423
        %v1463 = vpack.c.bf16 %v1377, %v1328
        %v1464 = vpack.c.bf16 %v1426, %v1426
        %v1465 = vpack.c.bf16 %v1379, %v1330
        %v1466 = vpack.c.bf16 %v1428, %v1428
        %v1467 = vpack.c.bf16 %v1382, %v1333
        %v1468 = vpack.c.bf16 %v1431, %v1431
        %v1469 = vpack.c.bf16 %v1384, %v1335
        %v1470 = vpack.c.bf16 %v1433, %v1433
        %v1471 = vpack.c.bf16 %v1387, %v1338
        %v1472 = vpack.c.bf16 %v1436, %v1436
        %v1473 = vpack.c.bf16 %v1389, %v1340
        %v1474 = vpack.c.bf16 %v1438, %v1438
        %v1475 = vpack.c.bf16 %v1392, %v1343
        %v1476 = vpack.c.bf16 %v1441, %v1441
        %v1477 = vpack.c.bf16 %v1394, %v1345
        %v1478 = vpack.c.bf16 %v1443, %v1443
        %v1479 = vpack.c.bf16 %v1397, %v1348
        %v1480 = vpack.c.bf16 %v1446, %v1446
        %v1481 = vpack.c.bf16 %v1399, %v1350
        %v1482 = vpack.c.bf16 %v1448, %v1448
        %v1483 = vpack.c.bf16 %v1402, %v1353
        %v1484 = vpack.c.bf16 %v1451, %v1451
        %v1485 = vpack.c.bf16 %v1404, %v1355
        %v1486 = vpack.c.bf16 %v1453, %v1453
        %v1487 = vlaneseq
        %v1488 = vshrl.u32 %v1487, 7
        %v1489 = vadd.s32 %v1488, 8
        %v1490 = vadd.s32 %v1488, 16
        %v1491 = vadd.s32 %v1488, 24
        %v1492 = vadd.s32 %v1488, 32
        %v1493 = vadd.s32 %v1488, 40
        %v1494 = vadd.s32 %v1488, 48
        %v1495 = vadd.s32 %v1488, 56
        %v1496 = vlaneseq
        %v1497 = vand.u32 %v1496, 127
        %vm1498 = vcmp.ge.s32.totalorder %v1488, %v1497
        %vm1499 = vcmp.ge.s32.totalorder %v1489, %v1497
        %vm1500 = vcmp.ge.s32.totalorder %v1490, %v1497
        %vm1501 = vcmp.ge.s32.totalorder %v1491, %v1497
        %vm1502 = vcmp.ge.s32.totalorder %v1492, %v1497
        %vm1503 = vcmp.ge.s32.totalorder %v1493, %v1497
        %vm1504 = vcmp.ge.s32.totalorder %v1494, %v1497
        %vm1505 = vcmp.ge.s32.totalorder %v1495, %v1497
        %v1514 = vunpack.c.l.b16 %v1455
        %v1515 = vunpack.c.l.b16 %v1457
        %v1516 = vunpack.c.l.b16 %v1459
        %v1517 = vunpack.c.l.b16 %v1461
        %v1518 = vunpack.c.l.b16 %v1463
        %v1519 = vunpack.c.l.b16 %v1465
        %v1520 = vunpack.c.l.b16 %v1467
        %v1521 = vunpack.c.l.b16 %v1469
        %v1522 = vpack.c.b16 %v1515, %v1514
        %v1523 = vpack.c.b16 %v1517, %v1516
        %v1524 = vpack.c.b16 %v1519, %v1518
        %v1525 = vpack.c.b16 %v1521, %v1520
        %v1526 = vunpack.c.h.b16 %v1455
        %v1527 = vunpack.c.h.b16 %v1457
        %v1528 = vunpack.c.h.b16 %v1459
        %v1529 = vunpack.c.h.b16 %v1461
        %v1530 = vunpack.c.h.b16 %v1463
        %v1531 = vunpack.c.h.b16 %v1465
        %v1532 = vunpack.c.h.b16 %v1467
        %v1533 = vunpack.c.h.b16 %v1469
        %v1534 = vpack.c.b16 %v1527, %v1526
        %v1535 = vpack.c.b16 %v1529, %v1528
        %v1536 = vpack.c.b16 %v1531, %v1530
        %v1537 = vpack.c.b16 %v1533, %v1532
        %vm1538 = vcmask 261120
        %v1540 = vsel %vm1538, %v1522, 0
        %v1543 = vsel %vm1538, %v1523, 0
        %v1546 = vsel %vm1538, %v1524, 0
        %v1549 = vsel %vm1538, %v1525, 0
        %v1552 = vsel %vm1538, %v1534, 0
        %v1555 = vsel %vm1538, %v1535, 0
        %v1558 = vsel %vm1538, %v1536, 0
        %v1561 = vsel %vm1538, %v1537, 0
        %1563 = vmatpush.bf16.xpose.msra.mxu0 0
        %1564 = vmatpush.bf16.xpose.msra.mxu0 0
        %1565 = vmatpush.bf16.xpose.msra.mxu0 0
        %1566 = vmatpush.bf16.xpose.msra.mxu0 0
        %1567 = vmatpush.bf16.xpose.msra.mxu0 %v1561
        %1568 = vmatpush.bf16.xpose.msra.mxu0 %v1558
        %1569 = vmatpush.bf16.xpose.msra.mxu0 %v1555
        %1570 = vmatpush.bf16.xpose.msra.mxu0 %v1552
        %1571 = vmatmul.bf16.gmra.mxu0 %v1540
        %v1572 = vpop.f32.mrf.mxu0
        %v1573 = vadd.f32 0.0, %v1572
        %v1574 = vpop.f32.mrf.mxu0
        %v1575 = vadd.f32 0.0, %v1574
        %1576 = vmatmul.bf16.gmra.mxu0 %v1543
        %v1577 = vpop.f32.mrf.mxu0
        %v1578 = vadd.f32 0.0, %v1577
        %v1579 = vpop.f32.mrf.mxu0
        %v1580 = vadd.f32 0.0, %v1579
        %1581 = vmatmul.bf16.gmra.mxu0 %v1546
        %v1582 = vpop.f32.mrf.mxu0
        %v1583 = vadd.f32 0.0, %v1582
        %v1584 = vpop.f32.mrf.mxu0
        %v1585 = vadd.f32 0.0, %v1584
        %1586 = vmatmul.bf16.gmra.mxu0 %v1549
        %v1587 = vpop.f32.mrf.mxu0
        %v1588 = vadd.f32 0.0, %v1587
        %v1589 = vpop.f32.mrf.mxu0
        %v1590 = vadd.f32 0.0, %v1589
        %1591 = vdwg.mxu0
        %v1592 = vmul.f32 %v1573, 0.088388346
        %v1593 = vmul.f32 %v1575, 0.088388346
        %v1594 = vmul.f32 %v1578, 0.088388346
        %v1595 = vmul.f32 %v1580, 0.088388346
        %v1596 = vmul.f32 %v1583, 0.088388346
        %v1597 = vmul.f32 %v1585, 0.088388346
        %v1598 = vmul.f32 %v1588, 0.088388346
        %v1599 = vmul.f32 %v1590, 0.088388346
        %v1600 = vsel %vm1498, %v1592, -inf
        %v1601 = vsel %vm1499, %v1593, -inf
        %v1602 = vsel %vm1500, %v1594, -inf
        %v1603 = vsel %vm1501, %v1595, -inf
        %v1604 = vsel %vm1502, %v1596, -inf
        %v1605 = vsel %vm1503, %v1597, -inf
        %v1606 = vsel %vm1504, %v1598, -inf
        %v1607 = vsel %vm1505, %v1599, -inf
        %vm1608 = vcmask 523264
        %v1609 = vsel %vm1608, %v1600, -inf
        %1610 = vmax.xlane.f32.xlu0 %v1609
        %v1611 = vpop.xlane.xlu0 %1610
        %v1612 = vsel %vm1608, %v1601, -inf
        %1613 = vmax.xlane.f32.xlu0 %v1612
        %v1614 = vpop.xlane.xlu0 %1613
        %v1615 = vsel %vm1608, %v1602, -inf
        %1616 = vmax.xlane.f32.xlu0 %v1615
        %v1617 = vpop.xlane.xlu0 %1616
        %v1618 = vsel %vm1608, %v1603, -inf
        %1619 = vmax.xlane.f32.xlu0 %v1618
        %v1620 = vpop.xlane.xlu0 %1619
        %v1621 = vsel %vm1608, %v1604, -inf
        %1622 = vmax.xlane.f32.xlu0 %v1621
        %v1623 = vpop.xlane.xlu0 %1622
        %v1624 = vsel %vm1608, %v1605, -inf
        %1625 = vmax.xlane.f32.xlu0 %v1624
        %v1626 = vpop.xlane.xlu0 %1625
        %v1627 = vsel %vm1608, %v1606, -inf
        %1628 = vmax.xlane.f32.xlu0 %v1627
        %v1629 = vpop.xlane.xlu0 %1628
        %v1630 = vsel %vm1608, %v1607, -inf
        %1631 = vmax.xlane.f32.xlu0 %v1630
        %v1632 = vpop.xlane.xlu0 %1631
        %v1633 = vsub.f32 %v1600, %v1611
        %v1634 = vsub.f32 %v1601, %v1614
        %v1635 = vsub.f32 %v1602, %v1617
        %v1636 = vsub.f32 %v1603, %v1620
        %v1637 = vsub.f32 %v1604, %v1623
        %v1638 = vsub.f32 %v1605, %v1626
        %v1639 = vsub.f32 %v1606, %v1629
        %v1640 = vsub.f32 %v1607, %v1632
        %v1641 = vmul.f32 %v1633, 1.442695
        %v1642 = vpow.pop %v1641
        %v1643 = vmul.f32 %v1634, 1.442695
        %v1644 = vpow.pop %v1643
        %v1645 = vmul.f32 %v1635, 1.442695
        %v1646 = vpow.pop %v1645
        %v1647 = vmul.f32 %v1636, 1.442695
        %v1648 = vpow.pop %v1647
        %v1649 = vmul.f32 %v1637, 1.442695
        %v1650 = vpow.pop %v1649
        %v1651 = vmul.f32 %v1638, 1.442695
        %v1652 = vpow.pop %v1651
        %v1653 = vmul.f32 %v1639, 1.442695
        %v1654 = vpow.pop %v1653
        %v1655 = vmul.f32 %v1640, 1.442695
        %v1656 = vpow.pop %v1655
        %v1657 = vsel %vm1608, %v1642, 0.0
        %1658 = vadd.xlane.f32.xlu0 %v1657
        %v1659 = vpop.xlane.xlu0 %1658
        %v1660 = vsel %vm1608, %v1644, 0.0
        %1661 = vadd.xlane.f32.xlu0 %v1660
        %v1662 = vpop.xlane.xlu0 %1661
        %v1663 = vsel %vm1608, %v1646, 0.0
        %1664 = vadd.xlane.f32.xlu0 %v1663
        %v1665 = vpop.xlane.xlu0 %1664
        %v1666 = vsel %vm1608, %v1648, 0.0
        %1667 = vadd.xlane.f32.xlu0 %v1666
        %v1668 = vpop.xlane.xlu0 %1667
        %v1669 = vsel %vm1608, %v1650, 0.0
        %1670 = vadd.xlane.f32.xlu0 %v1669
        %v1671 = vpop.xlane.xlu0 %1670
        %v1672 = vsel %vm1608, %v1652, 0.0
        %1673 = vadd.xlane.f32.xlu0 %v1672
        %v1674 = vpop.xlane.xlu0 %1673
        %v1675 = vsel %vm1608, %v1654, 0.0
        %1676 = vadd.xlane.f32.xlu0 %v1675
        %v1677 = vpop.xlane.xlu0 %1676
        %v1678 = vsel %vm1608, %v1656, 0.0
        %1679 = vadd.xlane.f32.xlu0 %v1678
        %v1680 = vpop.xlane.xlu0 %1679
        %v1681 = vrcp.pop %v1659
        %v1682 = vrcp.pop %v1662
        %v1683 = vrcp.pop %v1665
        %v1684 = vrcp.pop %v1668
        %v1685 = vrcp.pop %v1671
        %v1686 = vrcp.pop %v1674
        %v1687 = vrcp.pop %v1677
        %v1688 = vrcp.pop %v1680
        %v1689 = vmul.f32 %v1642, %v1681
        %v1690 = vmul.f32 %v1644, %v1682
        %v1691 = vmul.f32 %v1646, %v1683
        %v1692 = vmul.f32 %v1648, %v1684
        %v1693 = vmul.f32 %v1650, %v1685
        %v1694 = vmul.f32 %v1652, %v1686
        %v1695 = vmul.f32 %v1654, %v1687
        %v1696 = vmul.f32 %v1656, %v1688
        %v1697 = vpack.c.bf16 %v1690, %v1689
        %v1698 = vpack.c.bf16 %v1692, %v1691
        %v1699 = vpack.c.bf16 %v1694, %v1693
        %v1700 = vpack.c.bf16 %v1696, %v1695
        %v1709 = vunpack.c.l.b16 %v1456
        %v1710 = vunpack.c.l.b16 %v1458
        %v1711 = vunpack.c.l.b16 %v1460
        %v1712 = vunpack.c.l.b16 %v1462
        %v1713 = vunpack.c.l.b16 %v1464
        %v1714 = vunpack.c.l.b16 %v1466
        %v1715 = vunpack.c.l.b16 %v1468
        %v1716 = vunpack.c.l.b16 %v1470
        %v1717 = vpack.c.b16 %v1710, %v1709
        %v1718 = vpack.c.b16 %v1712, %v1711
        %v1719 = vpack.c.b16 %v1714, %v1713
        %v1720 = vpack.c.b16 %v1716, %v1715
        %v1726 = vsel %vm1608, %v1697, 0
        %v1729 = vsel %vm1608, %v1698, 0
        %v1732 = vsel %vm1608, %v1699, 0
        %v1735 = vsel %vm1608, %v1700, 0
        %1737 = vmatpush.bf16.msra.mxu0 0
        %1738 = vmatpush.bf16.msra.mxu0 0
        %1739 = vmatpush.bf16.msra.mxu0 0
        %1740 = vmatpush.bf16.msra.mxu0 0
        %1741 = vmatpush.bf16.msra.mxu0 %v1720
        %1742 = vmatpush.bf16.msra.mxu0 %v1719
        %1743 = vmatpush.bf16.msra.mxu0 %v1718
        %1744 = vmatpush.bf16.msra.mxu0 %v1717
        %1745 = vmatmul.bf16.gmra.mxu0 %v1726
        %v1746 = vpop.f32.mrf.mxu0
        %v1747 = vadd.f32 0.0, %v1746
        %v1748 = vpop.f32.mrf.mxu0
        %v1749 = vadd.f32 0.0, %v1748
        %1750 = vmatmul.bf16.gmra.mxu0 %v1729
        %v1751 = vpop.f32.mrf.mxu0
        %v1752 = vadd.f32 0.0, %v1751
        %v1753 = vpop.f32.mrf.mxu0
        %v1754 = vadd.f32 0.0, %v1753
        %1755 = vmatmul.bf16.gmra.mxu0 %v1732
        %v1756 = vpop.f32.mrf.mxu0
        %v1757 = vadd.f32 0.0, %v1756
        %v1758 = vpop.f32.mrf.mxu0
        %v1759 = vadd.f32 0.0, %v1758
        %1760 = vmatmul.bf16.gmra.mxu0 %v1735
        %v1761 = vpop.f32.mrf.mxu0
        %v1762 = vadd.f32 0.0, %v1761
        %v1763 = vpop.f32.mrf.mxu0
        %v1764 = vadd.f32 0.0, %v1763
        %1765 = vdwg.mxu0
        %1766 = vst.msk [vmem:[#allocation3] sm:$0xff] %vm1538, %v1747
        %1767 = vst.msk [vmem:[#allocation3 + $0x8] sm:$0xff] %vm1538, %v1749
        %1768 = vst.msk [vmem:[#allocation3 + $0x10] sm:$0xff] %vm1538, %v1752
        %1769 = vst.msk [vmem:[#allocation3 + $0x18] sm:$0xff] %vm1538, %v1754
        %1770 = vst.msk [vmem:[#allocation3 + $0x20] sm:$0xff] %vm1538, %v1757
        %1771 = vst.msk [vmem:[#allocation3 + $0x28] sm:$0xff] %vm1538, %v1759
        %1772 = vst.msk [vmem:[#allocation3 + $0x30] sm:$0xff] %vm1538, %v1762
        %1773 = vst.msk [vmem:[#allocation3 + $0x38] sm:$0xff] %vm1538, %v1764
        %1774 = vrot.lane.b32.xlu0 %v1522, 96
        %v1775 = vpop.permute.xlu0 %1774
        %1776 = vrot.lane.b32.xlu0 %v1523, 96
        %v1777 = vpop.permute.xlu0 %1776
        %1778 = vrot.lane.b32.xlu0 %v1524, 96
        %v1779 = vpop.permute.xlu0 %1778
        %1780 = vrot.lane.b32.xlu0 %v1525, 96
        %v1781 = vpop.permute.xlu0 %1780
        %1782 = vrot.lane.b32.xlu0 %v1534, 96
        %v1783 = vpop.permute.xlu0 %1782
        %1784 = vrot.lane.b32.xlu0 %v1535, 96
        %v1785 = vpop.permute.xlu0 %1784
        %1786 = vrot.lane.b32.xlu0 %v1536, 96
        %v1787 = vpop.permute.xlu0 %1786
        %1788 = vrot.lane.b32.xlu0 %v1537, 96
        %v1789 = vpop.permute.xlu0 %1788
        %v1791 = vsel %vm1538, %v1775, 0
        %v1794 = vsel %vm1538, %v1777, 0
        %v1797 = vsel %vm1538, %v1779, 0
        %v1800 = vsel %vm1538, %v1781, 0
        %v1803 = vsel %vm1538, %v1783, 0
        %v1806 = vsel %vm1538, %v1785, 0
        %v1809 = vsel %vm1538, %v1787, 0
        %v1812 = vsel %vm1538, %v1789, 0
        %1814 = vmatpush.bf16.xpose.msra.mxu0 0
        %1815 = vmatpush.bf16.xpose.msra.mxu0 0
        %1816 = vmatpush.bf16.xpose.msra.mxu0 0
        %1817 = vmatpush.bf16.xpose.msra.mxu0 0
        %1818 = vmatpush.bf16.xpose.msra.mxu0 %v1812
        %1819 = vmatpush.bf16.xpose.msra.mxu0 %v1809
        %1820 = vmatpush.bf16.xpose.msra.mxu0 %v1806
        %1821 = vmatpush.bf16.xpose.msra.mxu0 %v1803
        %1822 = vmatmul.bf16.gmra.mxu0 %v1791
        %v1823 = vpop.f32.mrf.mxu0
        %v1824 = vadd.f32 0.0, %v1823
        %v1825 = vpop.f32.mrf.mxu0
        %v1826 = vadd.f32 0.0, %v1825
        %1827 = vmatmul.bf16.gmra.mxu0 %v1794
        %v1828 = vpop.f32.mrf.mxu0
        %v1829 = vadd.f32 0.0, %v1828
        %v1830 = vpop.f32.mrf.mxu0
        %v1831 = vadd.f32 0.0, %v1830
        %1832 = vmatmul.bf16.gmra.mxu0 %v1797
        %v1833 = vpop.f32.mrf.mxu0
        %v1834 = vadd.f32 0.0, %v1833
        %v1835 = vpop.f32.mrf.mxu0
        %v1836 = vadd.f32 0.0, %v1835
        %1837 = vmatmul.bf16.gmra.mxu0 %v1800
        %v1838 = vpop.f32.mrf.mxu0
        %v1839 = vadd.f32 0.0, %v1838
        %v1840 = vpop.f32.mrf.mxu0
        %v1841 = vadd.f32 0.0, %v1840
        %1842 = vdwg.mxu0
        %v1843 = vmul.f32 %v1824, 0.088388346
        %v1844 = vmul.f32 %v1826, 0.088388346
        %v1845 = vmul.f32 %v1829, 0.088388346
        %v1846 = vmul.f32 %v1831, 0.088388346
        %v1847 = vmul.f32 %v1834, 0.088388346
        %v1848 = vmul.f32 %v1836, 0.088388346
        %v1849 = vmul.f32 %v1839, 0.088388346
        %v1850 = vmul.f32 %v1841, 0.088388346
        %v1851 = vsel %vm1498, %v1843, -inf
        %v1852 = vsel %vm1499, %v1844, -inf
        %v1853 = vsel %vm1500, %v1845, -inf
        %v1854 = vsel %vm1501, %v1846, -inf
        %v1855 = vsel %vm1502, %v1847, -inf
        %v1856 = vsel %vm1503, %v1848, -inf
        %v1857 = vsel %vm1504, %v1849, -inf
        %v1858 = vsel %vm1505, %v1850, -inf
        %v1859 = vsel %vm1608, %v1851, -inf
        %1860 = vmax.xlane.f32.xlu0 %v1859
        %v1861 = vpop.xlane.xlu0 %1860
        %v1862 = vsel %vm1608, %v1852, -inf
        %1863 = vmax.xlane.f32.xlu0 %v1862
        %v1864 = vpop.xlane.xlu0 %1863
        %v1865 = vsel %vm1608, %v1853, -inf
        %1866 = vmax.xlane.f32.xlu0 %v1865
        %v1867 = vpop.xlane.xlu0 %1866
        %v1868 = vsel %vm1608, %v1854, -inf
        %1869 = vmax.xlane.f32.xlu0 %v1868
        %v1870 = vpop.xlane.xlu0 %1869
        %v1871 = vsel %vm1608, %v1855, -inf
        %1872 = vmax.xlane.f32.xlu0 %v1871
        %v1873 = vpop.xlane.xlu0 %1872
        %v1874 = vsel %vm1608, %v1856, -inf
        %1875 = vmax.xlane.f32.xlu0 %v1874
        %v1876 = vpop.xlane.xlu0 %1875
        %v1877 = vsel %vm1608, %v1857, -inf
        %1878 = vmax.xlane.f32.xlu0 %v1877
        %v1879 = vpop.xlane.xlu0 %1878
        %v1880 = vsel %vm1608, %v1858, -inf
        %1881 = vmax.xlane.f32.xlu0 %v1880
        %v1882 = vpop.xlane.xlu0 %1881
        %v1883 = vsub.f32 %v1851, %v1861
        %v1884 = vsub.f32 %v1852, %v1864
        %v1885 = vsub.f32 %v1853, %v1867
        %v1886 = vsub.f32 %v1854, %v1870
        %v1887 = vsub.f32 %v1855, %v1873
        %v1888 = vsub.f32 %v1856, %v1876
        %v1889 = vsub.f32 %v1857, %v1879
        %v1890 = vsub.f32 %v1858, %v1882
        %v1891 = vmul.f32 %v1883, 1.442695
        %v1892 = vpow.pop %v1891
        %v1893 = vmul.f32 %v1884, 1.442695
        %v1894 = vpow.pop %v1893
        %v1895 = vmul.f32 %v1885, 1.442695
        %v1896 = vpow.pop %v1895
        %v1897 = vmul.f32 %v1886, 1.442695
        %v1898 = vpow.pop %v1897
        %v1899 = vmul.f32 %v1887, 1.442695
        %v1900 = vpow.pop %v1899
        %v1901 = vmul.f32 %v1888, 1.442695
        %v1902 = vpow.pop %v1901
        %v1903 = vmul.f32 %v1889, 1.442695
        %v1904 = vpow.pop %v1903
        %v1905 = vmul.f32 %v1890, 1.442695
        %v1906 = vpow.pop %v1905
        %v1907 = vsel %vm1608, %v1892, 0.0
        %1908 = vadd.xlane.f32.xlu0 %v1907
        %v1909 = vpop.xlane.xlu0 %1908
        %v1910 = vsel %vm1608, %v1894, 0.0
        %1911 = vadd.xlane.f32.xlu0 %v1910
        %v1912 = vpop.xlane.xlu0 %1911
        %v1913 = vsel %vm1608, %v1896, 0.0
        %1914 = vadd.xlane.f32.xlu0 %v1913
        %v1915 = vpop.xlane.xlu0 %1914
        %v1916 = vsel %vm1608, %v1898, 0.0
        %1917 = vadd.xlane.f32.xlu0 %v1916
        %v1918 = vpop.xlane.xlu0 %1917
        %v1919 = vsel %vm1608, %v1900, 0.0
        %1920 = vadd.xlane.f32.xlu0 %v1919
        %v1921 = vpop.xlane.xlu0 %1920
        %v1922 = vsel %vm1608, %v1902, 0.0
        %1923 = vadd.xlane.f32.xlu0 %v1922
        %v1924 = vpop.xlane.xlu0 %1923
        %v1925 = vsel %vm1608, %v1904, 0.0
        %1926 = vadd.xlane.f32.xlu0 %v1925
        %v1927 = vpop.xlane.xlu0 %1926
        %v1928 = vsel %vm1608, %v1906, 0.0
        %1929 = vadd.xlane.f32.xlu0 %v1928
        %v1930 = vpop.xlane.xlu0 %1929
        %v1931 = vrcp.pop %v1909
        %v1932 = vrcp.pop %v1912
        %v1933 = vrcp.pop %v1915
        %v1934 = vrcp.pop %v1918
        %v1935 = vrcp.pop %v1921
        %v1936 = vrcp.pop %v1924
        %v1937 = vrcp.pop %v1927
        %v1938 = vrcp.pop %v1930
        %v1939 = vmul.f32 %v1892, %v1931
        %v1940 = vmul.f32 %v1894, %v1932
        %v1941 = vmul.f32 %v1896, %v1933
        %v1942 = vmul.f32 %v1898, %v1934
        %v1943 = vmul.f32 %v1900, %v1935
        %v1944 = vmul.f32 %v1902, %v1936
        %v1945 = vmul.f32 %v1904, %v1937
        %v1946 = vmul.f32 %v1906, %v1938
        %v1947 = vpack.c.bf16 %v1940, %v1939
        %v1948 = vpack.c.bf16 %v1942, %v1941
        %v1949 = vpack.c.bf16 %v1944, %v1943
        %v1950 = vpack.c.bf16 %v1946, %v1945
        %1951 = vrot.lane.b32.xlu0 %v1717, 96
        %v1952 = vpop.permute.xlu0 %1951
        %1953 = vrot.lane.b32.xlu0 %v1718, 96
        %v1954 = vpop.permute.xlu0 %1953
        %1955 = vrot.lane.b32.xlu0 %v1719, 96
        %v1956 = vpop.permute.xlu0 %1955
        %1957 = vrot.lane.b32.xlu0 %v1720, 96
        %v1958 = vpop.permute.xlu0 %1957
        %v1964 = vsel %vm1608, %v1947, 0
        %v1967 = vsel %vm1608, %v1948, 0
        %v1970 = vsel %vm1608, %v1949, 0
        %v1973 = vsel %vm1608, %v1950, 0
        %1975 = vmatpush.bf16.msra.mxu0 0
        %1976 = vmatpush.bf16.msra.mxu0 0
        %1977 = vmatpush.bf16.msra.mxu0 0
        %1978 = vmatpush.bf16.msra.mxu0 0
        %1979 = vmatpush.bf16.msra.mxu0 %v1958
        %1980 = vmatpush.bf16.msra.mxu0 %v1956
        %1981 = vmatpush.bf16.msra.mxu0 %v1954
        %1982 = vmatpush.bf16.msra.mxu0 %v1952
        %1983 = vmatmul.bf16.gmra.mxu0 %v1964
        %v1984 = vpop.f32.mrf.mxu0
        %v1985 = vadd.f32 0.0, %v1984
        %v1986 = vpop.f32.mrf.mxu0
        %v1987 = vadd.f32 0.0, %v1986
        %1988 = vmatmul.bf16.gmra.mxu0 %v1967
        %v1989 = vpop.f32.mrf.mxu0
        %v1990 = vadd.f32 0.0, %v1989
        %v1991 = vpop.f32.mrf.mxu0
        %v1992 = vadd.f32 0.0, %v1991
        %1993 = vmatmul.bf16.gmra.mxu0 %v1970
        %v1994 = vpop.f32.mrf.mxu0
        %v1995 = vadd.f32 0.0, %v1994
        %v1996 = vpop.f32.mrf.mxu0
        %v1997 = vadd.f32 0.0, %v1996
        %1998 = vmatmul.bf16.gmra.mxu0 %v1973
        %v1999 = vpop.f32.mrf.mxu0
        %v2000 = vadd.f32 0.0, %v1999
        %v2001 = vpop.f32.mrf.mxu0
        %v2002 = vadd.f32 0.0, %v2001
        %2003 = vdwg.mxu0
        %2012 = vrot.lane.b32.xlu0 %v1985, 32
        %v2013 = vpop.permute.xlu0 %2012
        %2014 = vrot.lane.b32.xlu0 %v1987, 32
        %v2015 = vpop.permute.xlu0 %2014
        %2016 = vrot.lane.b32.xlu0 %v1990, 32
        %v2017 = vpop.permute.xlu0 %2016
        %2018 = vrot.lane.b32.xlu0 %v1992, 32
        %v2019 = vpop.permute.xlu0 %2018
        %2020 = vrot.lane.b32.xlu0 %v1995, 32
        %v2021 = vpop.permute.xlu0 %2020
        %2022 = vrot.lane.b32.xlu0 %v1997, 32
        %v2023 = vpop.permute.xlu0 %2022
        %2024 = vrot.lane.b32.xlu0 %v2000, 32
        %v2025 = vpop.permute.xlu0 %2024
        %2026 = vrot.lane.b32.xlu0 %v2002, 32
        %v2027 = vpop.permute.xlu0 %2026
        %vm2036 = vcmask 523520
        %2037 = vst.msk [vmem:[#allocation3] sm:$0xff] %vm2036, %v2013
        %2038 = vst.msk [vmem:[#allocation3 + $0x8] sm:$0xff] %vm2036, %v2015
        %2039 = vst.msk [vmem:[#allocation3 + $0x10] sm:$0xff] %vm2036, %v2017
        %2040 = vst.msk [vmem:[#allocation3 + $0x18] sm:$0xff] %vm2036, %v2019
        %2041 = vst.msk [vmem:[#allocation3 + $0x20] sm:$0xff] %vm2036, %v2021
        %2042 = vst.msk [vmem:[#allocation3 + $0x28] sm:$0xff] %vm2036, %v2023
        %2043 = vst.msk [vmem:[#allocation3 + $0x30] sm:$0xff] %vm2036, %v2025
        %2044 = vst.msk [vmem:[#allocation3 + $0x38] sm:$0xff] %vm2036, %v2027
        %2045 = vrot.lane.b32.xlu0 %v1522, 64
        %v2046 = vpop.permute.xlu0 %2045
        %2047 = vrot.lane.b32.xlu0 %v1523, 64
        %v2048 = vpop.permute.xlu0 %2047
        %2049 = vrot.lane.b32.xlu0 %v1524, 64
        %v2050 = vpop.permute.xlu0 %2049
        %2051 = vrot.lane.b32.xlu0 %v1525, 64
        %v2052 = vpop.permute.xlu0 %2051
        %2053 = vrot.lane.b32.xlu0 %v1534, 64
        %v2054 = vpop.permute.xlu0 %2053
        %2055 = vrot.lane.b32.xlu0 %v1535, 64
        %v2056 = vpop.permute.xlu0 %2055
        %2057 = vrot.lane.b32.xlu0 %v1536, 64
        %v2058 = vpop.permute.xlu0 %2057
        %2059 = vrot.lane.b32.xlu0 %v1537, 64
        %v2060 = vpop.permute.xlu0 %2059
        %v2062 = vsel %vm1538, %v2046, 0
        %v2065 = vsel %vm1538, %v2048, 0
        %v2068 = vsel %vm1538, %v2050, 0
        %v2071 = vsel %vm1538, %v2052, 0
        %v2074 = vsel %vm1538, %v2054, 0
        %v2077 = vsel %vm1538, %v2056, 0
        %v2080 = vsel %vm1538, %v2058, 0
        %v2083 = vsel %vm1538, %v2060, 0
        %2085 = vmatpush.bf16.xpose.msra.mxu0 0
        %2086 = vmatpush.bf16.xpose.msra.mxu0 0
        %2087 = vmatpush.bf16.xpose.msra.mxu0 0
        %2088 = vmatpush.bf16.xpose.msra.mxu0 0
        %2089 = vmatpush.bf16.xpose.msra.mxu0 %v2083
        %2090 = vmatpush.bf16.xpose.msra.mxu0 %v2080
        %2091 = vmatpush.bf16.xpose.msra.mxu0 %v2077
        %2092 = vmatpush.bf16.xpose.msra.mxu0 %v2074
        %2093 = vmatmul.bf16.gmra.mxu0 %v2062
        %v2094 = vpop.f32.mrf.mxu0
        %v2095 = vadd.f32 0.0, %v2094
        %v2096 = vpop.f32.mrf.mxu0
        %v2097 = vadd.f32 0.0, %v2096
        %2098 = vmatmul.bf16.gmra.mxu0 %v2065
        %v2099 = vpop.f32.mrf.mxu0
        %v2100 = vadd.f32 0.0, %v2099
        %v2101 = vpop.f32.mrf.mxu0
        %v2102 = vadd.f32 0.0, %v2101
        %2103 = vmatmul.bf16.gmra.mxu0 %v2068
        %v2104 = vpop.f32.mrf.mxu0
        %v2105 = vadd.f32 0.0, %v2104
        %v2106 = vpop.f32.mrf.mxu0
        %v2107 = vadd.f32 0.0, %v2106
        %2108 = vmatmul.bf16.gmra.mxu0 %v2071
        %v2109 = vpop.f32.mrf.mxu0
        %v2110 = vadd.f32 0.0, %v2109
        %v2111 = vpop.f32.mrf.mxu0
        %v2112 = vadd.f32 0.0, %v2111
        %2113 = vdwg.mxu0
        %v2114 = vmul.f32 %v2095, 0.088388346
        %v2115 = vmul.f32 %v2097, 0.088388346
        %v2116 = vmul.f32 %v2100, 0.088388346
        %v2117 = vmul.f32 %v2102, 0.088388346
        %v2118 = vmul.f32 %v2105, 0.088388346
        %v2119 = vmul.f32 %v2107, 0.088388346
        %v2120 = vmul.f32 %v2110, 0.088388346
        %v2121 = vmul.f32 %v2112, 0.088388346
        %v2122 = vsel %vm1498, %v2114, -inf
        %v2123 = vsel %vm1499, %v2115, -inf
        %v2124 = vsel %vm1500, %v2116, -inf
        %v2125 = vsel %vm1501, %v2117, -inf
        %v2126 = vsel %vm1502, %v2118, -inf
        %v2127 = vsel %vm1503, %v2119, -inf
        %v2128 = vsel %vm1504, %v2120, -inf
        %v2129 = vsel %vm1505, %v2121, -inf
        %v2130 = vsel %vm1608, %v2122, -inf
        %2131 = vmax.xlane.f32.xlu0 %v2130
        %v2132 = vpop.xlane.xlu0 %2131
        %v2133 = vsel %vm1608, %v2123, -inf
        %2134 = vmax.xlane.f32.xlu0 %v2133
        %v2135 = vpop.xlane.xlu0 %2134
        %v2136 = vsel %vm1608, %v2124, -inf
        %2137 = vmax.xlane.f32.xlu0 %v2136
        %v2138 = vpop.xlane.xlu0 %2137
        %v2139 = vsel %vm1608, %v2125, -inf
        %2140 = vmax.xlane.f32.xlu0 %v2139
        %v2141 = vpop.xlane.xlu0 %2140
        %v2142 = vsel %vm1608, %v2126, -inf
        %2143 = vmax.xlane.f32.xlu0 %v2142
        %v2144 = vpop.xlane.xlu0 %2143
        %v2145 = vsel %vm1608, %v2127, -inf
        %2146 = vmax.xlane.f32.xlu0 %v2145
        %v2147 = vpop.xlane.xlu0 %2146
        %v2148 = vsel %vm1608, %v2128, -inf
        %2149 = vmax.xlane.f32.xlu0 %v2148
        %v2150 = vpop.xlane.xlu0 %2149
        %v2151 = vsel %vm1608, %v2129, -inf
        %2152 = vmax.xlane.f32.xlu0 %v2151
        %v2153 = vpop.xlane.xlu0 %2152
        %v2154 = vsub.f32 %v2122, %v2132
        %v2155 = vsub.f32 %v2123, %v2135
        %v2156 = vsub.f32 %v2124, %v2138
        %v2157 = vsub.f32 %v2125, %v2141
        %v2158 = vsub.f32 %v2126, %v2144
        %v2159 = vsub.f32 %v2127, %v2147
        %v2160 = vsub.f32 %v2128, %v2150
        %v2161 = vsub.f32 %v2129, %v2153
        %v2162 = vmul.f32 %v2154, 1.442695
        %v2163 = vpow.pop %v2162
        %v2164 = vmul.f32 %v2155, 1.442695
        %v2165 = vpow.pop %v2164
        %v2166 = vmul.f32 %v2156, 1.442695
        %v2167 = vpow.pop %v2166
        %v2168 = vmul.f32 %v2157, 1.442695
        %v2169 = vpow.pop %v2168
        %v2170 = vmul.f32 %v2158, 1.442695
        %v2171 = vpow.pop %v2170
        %v2172 = vmul.f32 %v2159, 1.442695
        %v2173 = vpow.pop %v2172
        %v2174 = vmul.f32 %v2160, 1.442695
        %v2175 = vpow.pop %v2174
        %v2176 = vmul.f32 %v2161, 1.442695
        %v2177 = vpow.pop %v2176
        %v2178 = vsel %vm1608, %v2163, 0.0
        %2179 = vadd.xlane.f32.xlu0 %v2178
        %v2180 = vpop.xlane.xlu0 %2179
        %v2181 = vsel %vm1608, %v2165, 0.0
        %2182 = vadd.xlane.f32.xlu0 %v2181
        %v2183 = vpop.xlane.xlu0 %2182
        %v2184 = vsel %vm1608, %v2167, 0.0
        %2185 = vadd.xlane.f32.xlu0 %v2184
        %v2186 = vpop.xlane.xlu0 %2185
        %v2187 = vsel %vm1608, %v2169, 0.0
        %2188 = vadd.xlane.f32.xlu0 %v2187
        %v2189 = vpop.xlane.xlu0 %2188
        %v2190 = vsel %vm1608, %v2171, 0.0
        %2191 = vadd.xlane.f32.xlu0 %v2190
        %v2192 = vpop.xlane.xlu0 %2191
        %v2193 = vsel %vm1608, %v2173, 0.0
        %2194 = vadd.xlane.f32.xlu0 %v2193
        %v2195 = vpop.xlane.xlu0 %2194
        %v2196 = vsel %vm1608, %v2175, 0.0
        %2197 = vadd.xlane.f32.xlu0 %v2196
        %v2198 = vpop.xlane.xlu0 %2197
        %v2199 = vsel %vm1608, %v2177, 0.0
        %2200 = vadd.xlane.f32.xlu0 %v2199
        %v2201 = vpop.xlane.xlu0 %2200
        %v2202 = vrcp.pop %v2180
        %v2203 = vrcp.pop %v2183
        %v2204 = vrcp.pop %v2186
        %v2205 = vrcp.pop %v2189
        %v2206 = vrcp.pop %v2192
        %v2207 = vrcp.pop %v2195
        %v2208 = vrcp.pop %v2198
        %v2209 = vrcp.pop %v2201
        %v2210 = vmul.f32 %v2163, %v2202
        %v2211 = vmul.f32 %v2165, %v2203
        %v2212 = vmul.f32 %v2167, %v2204
        %v2213 = vmul.f32 %v2169, %v2205
        %v2214 = vmul.f32 %v2171, %v2206
        %v2215 = vmul.f32 %v2173, %v2207
        %v2216 = vmul.f32 %v2175, %v2208
        %v2217 = vmul.f32 %v2177, %v2209
        %v2218 = vpack.c.bf16 %v2211, %v2210
        %v2219 = vpack.c.bf16 %v2213, %v2212
        %v2220 = vpack.c.bf16 %v2215, %v2214
        %v2221 = vpack.c.bf16 %v2217, %v2216
        %2222 = vrot.lane.b32.xlu0 %v1717, 64
        %v2223 = vpop.permute.xlu0 %2222
        %2224 = vrot.lane.b32.xlu0 %v1718, 64
        %v2225 = vpop.permute.xlu0 %2224
        %2226 = vrot.lane.b32.xlu0 %v1719, 64
        %v2227 = vpop.permute.xlu0 %2226
        %2228 = vrot.lane.b32.xlu0 %v1720, 64
        %v2229 = vpop.permute.xlu0 %2228
        %v2235 = vsel %vm1608, %v2218, 0
        %v2238 = vsel %vm1608, %v2219, 0
        %v2241 = vsel %vm1608, %v2220, 0
        %v2244 = vsel %vm1608, %v2221, 0
        %2246 = vmatpush.bf16.msra.mxu0 0
        %2247 = vmatpush.bf16.msra.mxu0 0
        %2248 = vmatpush.bf16.msra.mxu0 0
        %2249 = vmatpush.bf16.msra.mxu0 0
        %2250 = vmatpush.bf16.msra.mxu0 %v2229
        %2251 = vmatpush.bf16.msra.mxu0 %v2227
        %2252 = vmatpush.bf16.msra.mxu0 %v2225
        %2253 = vmatpush.bf16.msra.mxu0 %v2223
        %2254 = vmatmul.bf16.gmra.mxu0 %v2235
        %v2255 = vpop.f32.mrf.mxu0
        %v2256 = vadd.f32 0.0, %v2255
        %v2257 = vpop.f32.mrf.mxu0
        %v2258 = vadd.f32 0.0, %v2257
        %2259 = vmatmul.bf16.gmra.mxu0 %v2238
        %v2260 = vpop.f32.mrf.mxu0
        %v2261 = vadd.f32 0.0, %v2260
        %v2262 = vpop.f32.mrf.mxu0
        %v2263 = vadd.f32 0.0, %v2262
        %2264 = vmatmul.bf16.gmra.mxu0 %v2241
        %v2265 = vpop.f32.mrf.mxu0
        %v2266 = vadd.f32 0.0, %v2265
        %v2267 = vpop.f32.mrf.mxu0
        %v2268 = vadd.f32 0.0, %v2267
        %2269 = vmatmul.bf16.gmra.mxu0 %v2244
        %v2270 = vpop.f32.mrf.mxu0
        %v2271 = vadd.f32 0.0, %v2270
        %v2272 = vpop.f32.mrf.mxu0
        %v2273 = vadd.f32 0.0, %v2272
        %2274 = vdwg.mxu0
        %2283 = vrot.lane.b32.xlu0 %v2256, 64
        %v2284 = vpop.permute.xlu0 %2283
        %2285 = vrot.lane.b32.xlu0 %v2258, 64
        %v2286 = vpop.permute.xlu0 %2285
        %2287 = vrot.lane.b32.xlu0 %v2261, 64
        %v2288 = vpop.permute.xlu0 %2287
        %2289 = vrot.lane.b32.xlu0 %v2263, 64
        %v2290 = vpop.permute.xlu0 %2289
        %2291 = vrot.lane.b32.xlu0 %v2266, 64
        %v2292 = vpop.permute.xlu0 %2291
        %2293 = vrot.lane.b32.xlu0 %v2268, 64
        %v2294 = vpop.permute.xlu0 %2293
        %2295 = vrot.lane.b32.xlu0 %v2271, 64
        %v2296 = vpop.permute.xlu0 %2295
        %2297 = vrot.lane.b32.xlu0 %v2273, 64
        %v2298 = vpop.permute.xlu0 %2297
        %vm2307 = vcmask 785920
        %2308 = vst.msk [vmem:[#allocation3] sm:$0xff] %vm2307, %v2284
        %2309 = vst.msk [vmem:[#allocation3 + $0x8] sm:$0xff] %vm2307, %v2286
        %2310 = vst.msk [vmem:[#allocation3 + $0x10] sm:$0xff] %vm2307, %v2288
        %2311 = vst.msk [vmem:[#allocation3 + $0x18] sm:$0xff] %vm2307, %v2290
        %2312 = vst.msk [vmem:[#allocation3 + $0x20] sm:$0xff] %vm2307, %v2292
        %2313 = vst.msk [vmem:[#allocation3 + $0x28] sm:$0xff] %vm2307, %v2294
        %2314 = vst.msk [vmem:[#allocation3 + $0x30] sm:$0xff] %vm2307, %v2296
        %2315 = vst.msk [vmem:[#allocation3 + $0x38] sm:$0xff] %vm2307, %v2298
        %2316 = vrot.lane.b32.xlu0 %v1522, 32
        %v2317 = vpop.permute.xlu0 %2316
        %2318 = vrot.lane.b32.xlu0 %v1523, 32
        %v2319 = vpop.permute.xlu0 %2318
        %2320 = vrot.lane.b32.xlu0 %v1524, 32
        %v2321 = vpop.permute.xlu0 %2320
        %2322 = vrot.lane.b32.xlu0 %v1525, 32
        %v2323 = vpop.permute.xlu0 %2322
        %2324 = vrot.lane.b32.xlu0 %v1534, 32
        %v2325 = vpop.permute.xlu0 %2324
        %2326 = vrot.lane.b32.xlu0 %v1535, 32
        %v2327 = vpop.permute.xlu0 %2326
        %2328 = vrot.lane.b32.xlu0 %v1536, 32
        %v2329 = vpop.permute.xlu0 %2328
        %2330 = vrot.lane.b32.xlu0 %v1537, 32
        %v2331 = vpop.permute.xlu0 %2330
        %v2333 = vsel %vm1538, %v2317, 0
        %v2336 = vsel %vm1538, %v2319, 0
        %v2339 = vsel %vm1538, %v2321, 0
        %v2342 = vsel %vm1538, %v2323, 0
        %v2345 = vsel %vm1538, %v2325, 0
        %v2348 = vsel %vm1538, %v2327, 0
        %v2351 = vsel %vm1538, %v2329, 0
        %v2354 = vsel %vm1538, %v2331, 0
        %2356 = vmatpush.bf16.xpose.msra.mxu0 0
        %2357 = vmatpush.bf16.xpose.msra.mxu0 0
        %2358 = vmatpush.bf16.xpose.msra.mxu0 0
        %2359 = vmatpush.bf16.xpose.msra.mxu0 0
        %2360 = vmatpush.bf16.xpose.msra.mxu0 %v2354
        %2361 = vmatpush.bf16.xpose.msra.mxu0 %v2351
        %2362 = vmatpush.bf16.xpose.msra.mxu0 %v2348
        %2363 = vmatpush.bf16.xpose.msra.mxu0 %v2345
        %2364 = vmatmul.bf16.gmra.mxu0 %v2333
        %v2365 = vpop.f32.mrf.mxu0
        %v2366 = vadd.f32 0.0, %v2365
        %v2367 = vpop.f32.mrf.mxu0
        %v2368 = vadd.f32 0.0, %v2367
        %2369 = vmatmul.bf16.gmra.mxu0 %v2336
        %v2370 = vpop.f32.mrf.mxu0
        %v2371 = vadd.f32 0.0, %v2370
        %v2372 = vpop.f32.mrf.mxu0
        %v2373 = vadd.f32 0.0, %v2372
        %2374 = vmatmul.bf16.gmra.mxu0 %v2339
        %v2375 = vpop.f32.mrf.mxu0
        %v2376 = vadd.f32 0.0, %v2375
        %v2377 = vpop.f32.mrf.mxu0
        %v2378 = vadd.f32 0.0, %v2377
        %2379 = vmatmul.bf16.gmra.mxu0 %v2342
        %v2380 = vpop.f32.mrf.mxu0
        %v2381 = vadd.f32 0.0, %v2380
        %v2382 = vpop.f32.mrf.mxu0
        %v2383 = vadd.f32 0.0, %v2382
        %2384 = vdwg.mxu0
        %v2385 = vmul.f32 %v2366, 0.088388346
        %v2386 = vmul.f32 %v2368, 0.088388346
        %v2387 = vmul.f32 %v2371, 0.088388346
        %v2388 = vmul.f32 %v2373, 0.088388346
        %v2389 = vmul.f32 %v2376, 0.088388346
        %v2390 = vmul.f32 %v2378, 0.088388346
        %v2391 = vmul.f32 %v2381, 0.088388346
        %v2392 = vmul.f32 %v2383, 0.088388346
        %v2393 = vsel %vm1498, %v2385, -inf
        %v2394 = vsel %vm1499, %v2386, -inf
        %v2395 = vsel %vm1500, %v2387, -inf
        %v2396 = vsel %vm1501, %v2388, -inf
        %v2397 = vsel %vm1502, %v2389, -inf
        %v2398 = vsel %vm1503, %v2390, -inf
        %v2399 = vsel %vm1504, %v2391, -inf
        %v2400 = vsel %vm1505, %v2392, -inf
        %v2401 = vsel %vm1608, %v2393, -inf
        %2402 = vmax.xlane.f32.xlu0 %v2401
        %v2403 = vpop.xlane.xlu0 %2402
        %v2404 = vsel %vm1608, %v2394, -inf
        %2405 = vmax.xlane.f32.xlu0 %v2404
        %v2406 = vpop.xlane.xlu0 %2405
        %v2407 = vsel %vm1608, %v2395, -inf
        %2408 = vmax.xlane.f32.xlu0 %v2407
        %v2409 = vpop.xlane.xlu0 %2408
        %v2410 = vsel %vm1608, %v2396, -inf
        %2411 = vmax.xlane.f32.xlu0 %v2410
        %v2412 = vpop.xlane.xlu0 %2411
        %v2413 = vsel %vm1608, %v2397, -inf
        %2414 = vmax.xlane.f32.xlu0 %v2413
        %v2415 = vpop.xlane.xlu0 %2414
        %v2416 = vsel %vm1608, %v2398, -inf
        %2417 = vmax.xlane.f32.xlu0 %v2416
        %v2418 = vpop.xlane.xlu0 %2417
        %v2419 = vsel %vm1608, %v2399, -inf
        %2420 = vmax.xlane.f32.xlu0 %v2419
        %v2421 = vpop.xlane.xlu0 %2420
        %v2422 = vsel %vm1608, %v2400, -inf
        %2423 = vmax.xlane.f32.xlu0 %v2422
        %v2424 = vpop.xlane.xlu0 %2423
        %v2425 = vsub.f32 %v2393, %v2403
        %v2426 = vsub.f32 %v2394, %v2406
        %v2427 = vsub.f32 %v2395, %v2409
        %v2428 = vsub.f32 %v2396, %v2412
        %v2429 = vsub.f32 %v2397, %v2415
        %v2430 = vsub.f32 %v2398, %v2418
        %v2431 = vsub.f32 %v2399, %v2421
        %v2432 = vsub.f32 %v2400, %v2424
        %v2433 = vmul.f32 %v2425, 1.442695
        %v2434 = vpow.pop %v2433
        %v2435 = vmul.f32 %v2426, 1.442695
        %v2436 = vpow.pop %v2435
        %v2437 = vmul.f32 %v2427, 1.442695
        %v2438 = vpow.pop %v2437
        %v2439 = vmul.f32 %v2428, 1.442695
        %v2440 = vpow.pop %v2439
        %v2441 = vmul.f32 %v2429, 1.442695
        %v2442 = vpow.pop %v2441
        %v2443 = vmul.f32 %v2430, 1.442695
        %v2444 = vpow.pop %v2443
        %v2445 = vmul.f32 %v2431, 1.442695
        %v2446 = vpow.pop %v2445
        %v2447 = vmul.f32 %v2432, 1.442695
        %v2448 = vpow.pop %v2447
        %v2449 = vsel %vm1608, %v2434, 0.0
        %2450 = vadd.xlane.f32.xlu0 %v2449
        %v2451 = vpop.xlane.xlu0 %2450
        %v2452 = vsel %vm1608, %v2436, 0.0
        %2453 = vadd.xlane.f32.xlu0 %v2452
        %v2454 = vpop.xlane.xlu0 %2453
        %v2455 = vsel %vm1608, %v2438, 0.0
        %2456 = vadd.xlane.f32.xlu0 %v2455
        %v2457 = vpop.xlane.xlu0 %2456
        %v2458 = vsel %vm1608, %v2440, 0.0
        %2459 = vadd.xlane.f32.xlu0 %v2458
        %v2460 = vpop.xlane.xlu0 %2459
        %v2461 = vsel %vm1608, %v2442, 0.0
        %2462 = vadd.xlane.f32.xlu0 %v2461
        %v2463 = vpop.xlane.xlu0 %2462
        %v2464 = vsel %vm1608, %v2444, 0.0
        %2465 = vadd.xlane.f32.xlu0 %v2464
        %v2466 = vpop.xlane.xlu0 %2465
        %v2467 = vsel %vm1608, %v2446, 0.0
        %2468 = vadd.xlane.f32.xlu0 %v2467
        %v2469 = vpop.xlane.xlu0 %2468
        %v2470 = vsel %vm1608, %v2448, 0.0
        %2471 = vadd.xlane.f32.xlu0 %v2470
        %v2472 = vpop.xlane.xlu0 %2471
        %v2473 = vrcp.pop %v2451
        %v2474 = vrcp.pop %v2454
        %v2475 = vrcp.pop %v2457
        %v2476 = vrcp.pop %v2460
        %v2477 = vrcp.pop %v2463
        %v2478 = vrcp.pop %v2466
        %v2479 = vrcp.pop %v2469
        %v2480 = vrcp.pop %v2472
        %v2481 = vmul.f32 %v2434, %v2473
        %v2482 = vmul.f32 %v2436, %v2474
        %v2483 = vmul.f32 %v2438, %v2475
        %v2484 = vmul.f32 %v2440, %v2476
        %v2485 = vmul.f32 %v2442, %v2477
        %v2486 = vmul.f32 %v2444, %v2478
        %v2487 = vmul.f32 %v2446, %v2479
        %v2488 = vmul.f32 %v2448, %v2480
        %v2489 = vpack.c.bf16 %v2482, %v2481
        %v2490 = vpack.c.bf16 %v2484, %v2483
        %v2491 = vpack.c.bf16 %v2486, %v2485
        %v2492 = vpack.c.bf16 %v2488, %v2487
        %2493 = vrot.lane.b32.xlu0 %v1717, 32
        %v2494 = vpop.permute.xlu0 %2493
        %2495 = vrot.lane.b32.xlu0 %v1718, 32
        %v2496 = vpop.permute.xlu0 %2495
        %2497 = vrot.lane.b32.xlu0 %v1719, 32
        %v2498 = vpop.permute.xlu0 %2497
        %2499 = vrot.lane.b32.xlu0 %v1720, 32
        %v2500 = vpop.permute.xlu0 %2499
        %v2506 = vsel %vm1608, %v2489, 0
        %v2509 = vsel %vm1608, %v2490, 0
        %v2512 = vsel %vm1608, %v2491, 0
        %v2515 = vsel %vm1608, %v2492, 0
        %2517 = vmatpush.bf16.msra.mxu0 0
        %2518 = vmatpush.bf16.msra.mxu0 0
        %2519 = vmatpush.bf16.msra.mxu0 0
        %2520 = vmatpush.bf16.msra.mxu0 0
        %2521 = vmatpush.bf16.msra.mxu0 %v2500
        %2522 = vmatpush.bf16.msra.mxu0 %v2498
        %2523 = vmatpush.bf16.msra.mxu0 %v2496
        %2524 = vmatpush.bf16.msra.mxu0 %v2494
        %2525 = vmatmul.bf16.gmra.mxu0 %v2506
        %v2526 = vpop.f32.mrf.mxu0
        %v2527 = vadd.f32 0.0, %v2526
        %v2528 = vpop.f32.mrf.mxu0
        %v2529 = vadd.f32 0.0, %v2528
        %2530 = vmatmul.bf16.gmra.mxu0 %v2509
        %v2531 = vpop.f32.mrf.mxu0
        %v2532 = vadd.f32 0.0, %v2531
        %v2533 = vpop.f32.mrf.mxu0
        %v2534 = vadd.f32 0.0, %v2533
        %2535 = vmatmul.bf16.gmra.mxu0 %v2512
        %v2536 = vpop.f32.mrf.mxu0
        %v2537 = vadd.f32 0.0, %v2536
        %v2538 = vpop.f32.mrf.mxu0
        %v2539 = vadd.f32 0.0, %v2538
        %2540 = vmatmul.bf16.gmra.mxu0 %v2515
        %v2541 = vpop.f32.mrf.mxu0
        %v2542 = vadd.f32 0.0, %v2541
        %v2543 = vpop.f32.mrf.mxu0
        %v2544 = vadd.f32 0.0, %v2543
        %2545 = vdwg.mxu0
        %2554 = vrot.lane.b32.xlu0 %v2527, 96
        %v2555 = vpop.permute.xlu0 %2554
        %2556 = vrot.lane.b32.xlu0 %v2529, 96
        %v2557 = vpop.permute.xlu0 %2556
        %2558 = vrot.lane.b32.xlu0 %v2532, 96
        %v2559 = vpop.permute.xlu0 %2558
        %2560 = vrot.lane.b32.xlu0 %v2534, 96
        %v2561 = vpop.permute.xlu0 %2560
        %2562 = vrot.lane.b32.xlu0 %v2537, 96
        %v2563 = vpop.permute.xlu0 %2562
        %2564 = vrot.lane.b32.xlu0 %v2539, 96
        %v2565 = vpop.permute.xlu0 %2564
        %2566 = vrot.lane.b32.xlu0 %v2542, 96
        %v2567 = vpop.permute.xlu0 %2566
        %2568 = vrot.lane.b32.xlu0 %v2544, 96
        %v2569 = vpop.permute.xlu0 %2568
        %vm2578 = vcmask 1048320
        %2579 = vst.msk [vmem:[#allocation3] sm:$0xff] %vm2578, %v2555
        %2580 = vst.msk [vmem:[#allocation3 + $0x8] sm:$0xff] %vm2578, %v2557
        %2581 = vst.msk [vmem:[#allocation3 + $0x10] sm:$0xff] %vm2578, %v2559
        %2582 = vst.msk [vmem:[#allocation3 + $0x18] sm:$0xff] %vm2578, %v2561
        %2583 = vst.msk [vmem:[#allocation3 + $0x20] sm:$0xff] %vm2578, %v2563
        %2584 = vst.msk [vmem:[#allocation3 + $0x28] sm:$0xff] %vm2578, %v2565
        %2585 = vst.msk [vmem:[#allocation3 + $0x30] sm:$0xff] %vm2578, %v2567
        %2586 = vst.msk [vmem:[#allocation3 + $0x38] sm:$0xff] %vm2578, %v2569
        %v2595 = vunpack.c.l.b16 %v1471
        %v2596 = vunpack.c.l.b16 %v1473
        %v2597 = vunpack.c.l.b16 %v1475
        %v2598 = vunpack.c.l.b16 %v1477
        %v2599 = vunpack.c.l.b16 %v1479
        %v2600 = vunpack.c.l.b16 %v1481
        %v2601 = vunpack.c.l.b16 %v1483
        %v2602 = vunpack.c.l.b16 %v1485
        %v2603 = vpack.c.b16 %v2596, %v2595
        %v2604 = vpack.c.b16 %v2598, %v2597
        %v2605 = vpack.c.b16 %v2600, %v2599
        %v2606 = vpack.c.b16 %v2602, %v2601
        %v2607 = vunpack.c.h.b16 %v1471
        %v2608 = vunpack.c.h.b16 %v1473
        %v2609 = vunpack.c.h.b16 %v1475
        %v2610 = vunpack.c.h.b16 %v1477
        %v2611 = vunpack.c.h.b16 %v1479
        %v2612 = vunpack.c.h.b16 %v1481
        %v2613 = vunpack.c.h.b16 %v1483
        %v2614 = vunpack.c.h.b16 %v1485
        %v2615 = vpack.c.b16 %v2608, %v2607
        %v2616 = vpack.c.b16 %v2610, %v2609
        %v2617 = vpack.c.b16 %v2612, %v2611
        %v2618 = vpack.c.b16 %v2614, %v2613
        %v2620 = vsel %vm1538, %v2603, 0
        %v2623 = vsel %vm1538, %v2604, 0
        %v2626 = vsel %vm1538, %v2605, 0
        %v2629 = vsel %vm1538, %v2606, 0
        %v2632 = vsel %vm1538, %v2615, 0
        %v2635 = vsel %vm1538, %v2616, 0
        %v2638 = vsel %vm1538, %v2617, 0
        %v2641 = vsel %vm1538, %v2618, 0
        %2643 = vmatpush.bf16.xpose.msra.mxu0 0
        %2644 = vmatpush.bf16.xpose.msra.mxu0 0
        %2645 = vmatpush.bf16.xpose.msra.mxu0 0
        %2646 = vmatpush.bf16.xpose.msra.mxu0 0
        %2647 = vmatpush.bf16.xpose.msra.mxu0 %v2641
        %2648 = vmatpush.bf16.xpose.msra.mxu0 %v2638
        %2649 = vmatpush.bf16.xpose.msra.mxu0 %v2635
        %2650 = vmatpush.bf16.xpose.msra.mxu0 %v2632
        %2651 = vmatmul.bf16.gmra.mxu0 %v2620
        %v2652 = vpop.f32.mrf.mxu0
        %v2653 = vadd.f32 0.0, %v2652
        %v2654 = vpop.f32.mrf.mxu0
        %v2655 = vadd.f32 0.0, %v2654
        %2656 = vmatmul.bf16.gmra.mxu0 %v2623
        %v2657 = vpop.f32.mrf.mxu0
        %v2658 = vadd.f32 0.0, %v2657
        %v2659 = vpop.f32.mrf.mxu0
        %v2660 = vadd.f32 0.0, %v2659
        %2661 = vmatmul.bf16.gmra.mxu0 %v2626
        %v2662 = vpop.f32.mrf.mxu0
        %v2663 = vadd.f32 0.0, %v2662
        %v2664 = vpop.f32.mrf.mxu0
        %v2665 = vadd.f32 0.0, %v2664
        %2666 = vmatmul.bf16.gmra.mxu0 %v2629
        %v2667 = vpop.f32.mrf.mxu0
        %v2668 = vadd.f32 0.0, %v2667
        %v2669 = vpop.f32.mrf.mxu0
        %v2670 = vadd.f32 0.0, %v2669
        %2671 = vdwg.mxu0
        %v2672 = vmul.f32 %v2653, 0.088388346
        %v2673 = vmul.f32 %v2655, 0.088388346
        %v2674 = vmul.f32 %v2658, 0.088388346
        %v2675 = vmul.f32 %v2660, 0.088388346
        %v2676 = vmul.f32 %v2663, 0.088388346
        %v2677 = vmul.f32 %v2665, 0.088388346
        %v2678 = vmul.f32 %v2668, 0.088388346
        %v2679 = vmul.f32 %v2670, 0.088388346
        %v2680 = vsel %vm1498, %v2672, -inf
        %v2681 = vsel %vm1499, %v2673, -inf
        %v2682 = vsel %vm1500, %v2674, -inf
        %v2683 = vsel %vm1501, %v2675, -inf
        %v2684 = vsel %vm1502, %v2676, -inf
        %v2685 = vsel %vm1503, %v2677, -inf
        %v2686 = vsel %vm1504, %v2678, -inf
        %v2687 = vsel %vm1505, %v2679, -inf
        %v2688 = vsel %vm1608, %v2680, -inf
        %2689 = vmax.xlane.f32.xlu0 %v2688
        %v2690 = vpop.xlane.xlu0 %2689
        %v2691 = vsel %vm1608, %v2681, -inf
        %2692 = vmax.xlane.f32.xlu0 %v2691
        %v2693 = vpop.xlane.xlu0 %2692
        %v2694 = vsel %vm1608, %v2682, -inf
        %2695 = vmax.xlane.f32.xlu0 %v2694
        %v2696 = vpop.xlane.xlu0 %2695
        %v2697 = vsel %vm1608, %v2683, -inf
        %2698 = vmax.xlane.f32.xlu0 %v2697
        %v2699 = vpop.xlane.xlu0 %2698
        %v2700 = vsel %vm1608, %v2684, -inf
        %2701 = vmax.xlane.f32.xlu0 %v2700
        %v2702 = vpop.xlane.xlu0 %2701
        %v2703 = vsel %vm1608, %v2685, -inf
        %2704 = vmax.xlane.f32.xlu0 %v2703
        %v2705 = vpop.xlane.xlu0 %2704
        %v2706 = vsel %vm1608, %v2686, -inf
        %2707 = vmax.xlane.f32.xlu0 %v2706
        %v2708 = vpop.xlane.xlu0 %2707
        %v2709 = vsel %vm1608, %v2687, -inf
        %2710 = vmax.xlane.f32.xlu0 %v2709
        %v2711 = vpop.xlane.xlu0 %2710
        %v2712 = vsub.f32 %v2680, %v2690
        %v2713 = vsub.f32 %v2681, %v2693
        %v2714 = vsub.f32 %v2682, %v2696
        %v2715 = vsub.f32 %v2683, %v2699
        %v2716 = vsub.f32 %v2684, %v2702
        %v2717 = vsub.f32 %v2685, %v2705
        %v2718 = vsub.f32 %v2686, %v2708
        %v2719 = vsub.f32 %v2687, %v2711
        %v2720 = vmul.f32 %v2712, 1.442695
        %v2721 = vpow.pop %v2720
        %v2722 = vmul.f32 %v2713, 1.442695
        %v2723 = vpow.pop %v2722
        %v2724 = vmul.f32 %v2714, 1.442695
        %v2725 = vpow.pop %v2724
        %v2726 = vmul.f32 %v2715, 1.442695
        %v2727 = vpow.pop %v2726
        %v2728 = vmul.f32 %v2716, 1.442695
        %v2729 = vpow.pop %v2728
        %v2730 = vmul.f32 %v2717, 1.442695
        %v2731 = vpow.pop %v2730
        %v2732 = vmul.f32 %v2718, 1.442695
        %v2733 = vpow.pop %v2732
        %v2734 = vmul.f32 %v2719, 1.442695
        %v2735 = vpow.pop %v2734
        %v2736 = vsel %vm1608, %v2721, 0.0
        %2737 = vadd.xlane.f32.xlu0 %v2736
        %v2738 = vpop.xlane.xlu0 %2737
        %v2739 = vsel %vm1608, %v2723, 0.0
        %2740 = vadd.xlane.f32.xlu0 %v2739
        %v2741 = vpop.xlane.xlu0 %2740
        %v2742 = vsel %vm1608, %v2725, 0.0
        %2743 = vadd.xlane.f32.xlu0 %v2742
        %v2744 = vpop.xlane.xlu0 %2743
        %v2745 = vsel %vm1608, %v2727, 0.0
        %2746 = vadd.xlane.f32.xlu0 %v2745
        %v2747 = vpop.xlane.xlu0 %2746
        %v2748 = vsel %vm1608, %v2729, 0.0
        %2749 = vadd.xlane.f32.xlu0 %v2748
        %v2750 = vpop.xlane.xlu0 %2749
        %v2751 = vsel %vm1608, %v2731, 0.0
        %2752 = vadd.xlane.f32.xlu0 %v2751
        %v2753 = vpop.xlane.xlu0 %2752
        %v2754 = vsel %vm1608, %v2733, 0.0
        %2755 = vadd.xlane.f32.xlu0 %v2754
        %v2756 = vpop.xlane.xlu0 %2755
        %v2757 = vsel %vm1608, %v2735, 0.0
        %2758 = vadd.xlane.f32.xlu0 %v2757
        %v2759 = vpop.xlane.xlu0 %2758
        %v2760 = vrcp.pop %v2738
        %v2761 = vrcp.pop %v2741
        %v2762 = vrcp.pop %v2744
        %v2763 = vrcp.pop %v2747
        %v2764 = vrcp.pop %v2750
        %v2765 = vrcp.pop %v2753
        %v2766 = vrcp.pop %v2756
        %v2767 = vrcp.pop %v2759
        %v2768 = vmul.f32 %v2721, %v2760
        %v2769 = vmul.f32 %v2723, %v2761
        %v2770 = vmul.f32 %v2725, %v2762
        %v2771 = vmul.f32 %v2727, %v2763
        %v2772 = vmul.f32 %v2729, %v2764
        %v2773 = vmul.f32 %v2731, %v2765
        %v2774 = vmul.f32 %v2733, %v2766
        %v2775 = vmul.f32 %v2735, %v2767
        %v2776 = vpack.c.bf16 %v2769, %v2768
        %v2777 = vpack.c.bf16 %v2771, %v2770
        %v2778 = vpack.c.bf16 %v2773, %v2772
        %v2779 = vpack.c.bf16 %v2775, %v2774
        %v2788 = vunpack.c.l.b16 %v1472
        %v2789 = vunpack.c.l.b16 %v1474
        %v2790 = vunpack.c.l.b16 %v1476
        %v2791 = vunpack.c.l.b16 %v1478
        %v2792 = vunpack.c.l.b16 %v1480
        %v2793 = vunpack.c.l.b16 %v1482
        %v2794 = vunpack.c.l.b16 %v1484
        %v2795 = vunpack.c.l.b16 %v1486
        %v2796 = vpack.c.b16 %v2789, %v2788
        %v2797 = vpack.c.b16 %v2791, %v2790
        %v2798 = vpack.c.b16 %v2793, %v2792
        %v2799 = vpack.c.b16 %v2795, %v2794
        %v2805 = vsel %vm1608, %v2776, 0
        %v2808 = vsel %vm1608, %v2777, 0
        %v2811 = vsel %vm1608, %v2778, 0
        %v2814 = vsel %vm1608, %v2779, 0
        %2816 = vmatpush.bf16.msra.mxu0 0
        %2817 = vmatpush.bf16.msra.mxu0 0
        %2818 = vmatpush.bf16.msra.mxu0 0
        %2819 = vmatpush.bf16.msra.mxu0 0
        %2820 = vmatpush.bf16.msra.mxu0 %v2799
        %2821 = vmatpush.bf16.msra.mxu0 %v2798
        %2822 = vmatpush.bf16.msra.mxu0 %v2797
        %2823 = vmatpush.bf16.msra.mxu0 %v2796
        %2824 = vmatmul.bf16.gmra.mxu0 %v2805
        %v2825 = vpop.f32.mrf.mxu0
        %v2826 = vadd.f32 0.0, %v2825
        %v2827 = vpop.f32.mrf.mxu0
        %v2828 = vadd.f32 0.0, %v2827
        %2829 = vmatmul.bf16.gmra.mxu0 %v2808
        %v2830 = vpop.f32.mrf.mxu0
        %v2831 = vadd.f32 0.0, %v2830
        %v2832 = vpop.f32.mrf.mxu0
        %v2833 = vadd.f32 0.0, %v2832
        %2834 = vmatmul.bf16.gmra.mxu0 %v2811
        %v2835 = vpop.f32.mrf.mxu0
        %v2836 = vadd.f32 0.0, %v2835
        %v2837 = vpop.f32.mrf.mxu0
        %v2838 = vadd.f32 0.0, %v2837
        %2839 = vmatmul.bf16.gmra.mxu0 %v2814
        %v2840 = vpop.f32.mrf.mxu0
        %v2841 = vadd.f32 0.0, %v2840
        %v2842 = vpop.f32.mrf.mxu0
        %v2843 = vadd.f32 0.0, %v2842
        %2844 = vdwg.mxu0
        %2845 = vst.msk [vmem:[#allocation3 + $0x40] sm:$0xff] %vm1538, %v2826
        %2846 = vst.msk [vmem:[#allocation3 + $0x48] sm:$0xff] %vm1538, %v2828
        %2847 = vst.msk [vmem:[#allocation3 + $0x50] sm:$0xff] %vm1538, %v2831
        %2848 = vst.msk [vmem:[#allocation3 + $0x58] sm:$0xff] %vm1538, %v2833
        %2849 = vst.msk [vmem:[#allocation3 + $0x60] sm:$0xff] %vm1538, %v2836
        %2850 = vst.msk [vmem:[#allocation3 + $0x68] sm:$0xff] %vm1538, %v2838
        %2851 = vst.msk [vmem:[#allocation3 + $0x70] sm:$0xff] %vm1538, %v2841
        %2852 = vst.msk [vmem:[#allocation3 + $0x78] sm:$0xff] %vm1538, %v2843
        %2853 = vrot.lane.b32.xlu0 %v2603, 96
        %v2854 = vpop.permute.xlu0 %2853
        %2855 = vrot.lane.b32.xlu0 %v2604, 96
        %v2856 = vpop.permute.xlu0 %2855
        %2857 = vrot.lane.b32.xlu0 %v2605, 96
        %v2858 = vpop.permute.xlu0 %2857
        %2859 = vrot.lane.b32.xlu0 %v2606, 96
        %v2860 = vpop.permute.xlu0 %2859
        %2861 = vrot.lane.b32.xlu0 %v2615, 96
        %v2862 = vpop.permute.xlu0 %2861
        %2863 = vrot.lane.b32.xlu0 %v2616, 96
        %v2864 = vpop.permute.xlu0 %2863
        %2865 = vrot.lane.b32.xlu0 %v2617, 96
        %v2866 = vpop.permute.xlu0 %2865
        %2867 = vrot.lane.b32.xlu0 %v2618, 96
        %v2868 = vpop.permute.xlu0 %2867
        %v2870 = vsel %vm1538, %v2854, 0
        %v2873 = vsel %vm1538, %v2856, 0
        %v2876 = vsel %vm1538, %v2858, 0
        %v2879 = vsel %vm1538, %v2860, 0
        %v2882 = vsel %vm1538, %v2862, 0
        %v2885 = vsel %vm1538, %v2864, 0
        %v2888 = vsel %vm1538, %v2866, 0
        %v2891 = vsel %vm1538, %v2868, 0
        %2893 = vmatpush.bf16.xpose.msra.mxu0 0
        %2894 = vmatpush.bf16.xpose.msra.mxu0 0
        %2895 = vmatpush.bf16.xpose.msra.mxu0 0
        %2896 = vmatpush.bf16.xpose.msra.mxu0 0
        %2897 = vmatpush.bf16.xpose.msra.mxu0 %v2891
        %2898 = vmatpush.bf16.xpose.msra.mxu0 %v2888
        %2899 = vmatpush.bf16.xpose.msra.mxu0 %v2885
        %2900 = vmatpush.bf16.xpose.msra.mxu0 %v2882
        %2901 = vmatmul.bf16.gmra.mxu0 %v2870
        %v2902 = vpop.f32.mrf.mxu0
        %v2903 = vadd.f32 0.0, %v2902
        %v2904 = vpop.f32.mrf.mxu0
        %v2905 = vadd.f32 0.0, %v2904
        %2906 = vmatmul.bf16.gmra.mxu0 %v2873
        %v2907 = vpop.f32.mrf.mxu0
        %v2908 = vadd.f32 0.0, %v2907
        %v2909 = vpop.f32.mrf.mxu0
        %v2910 = vadd.f32 0.0, %v2909
        %2911 = vmatmul.bf16.gmra.mxu0 %v2876
        %v2912 = vpop.f32.mrf.mxu0
        %v2913 = vadd.f32 0.0, %v2912
        %v2914 = vpop.f32.mrf.mxu0
        %v2915 = vadd.f32 0.0, %v2914
        %2916 = vmatmul.bf16.gmra.mxu0 %v2879
        %v2917 = vpop.f32.mrf.mxu0
        %v2918 = vadd.f32 0.0, %v2917
        %v2919 = vpop.f32.mrf.mxu0
        %v2920 = vadd.f32 0.0, %v2919
        %2921 = vdwg.mxu0
        %v2922 = vmul.f32 %v2903, 0.088388346
        %v2923 = vmul.f32 %v2905, 0.088388346
        %v2924 = vmul.f32 %v2908, 0.088388346
        %v2925 = vmul.f32 %v2910, 0.088388346
        %v2926 = vmul.f32 %v2913, 0.088388346
        %v2927 = vmul.f32 %v2915, 0.088388346
        %v2928 = vmul.f32 %v2918, 0.088388346
        %v2929 = vmul.f32 %v2920, 0.088388346
        %v2930 = vsel %vm1498, %v2922, -inf
        %v2931 = vsel %vm1499, %v2923, -inf
        %v2932 = vsel %vm1500, %v2924, -inf
        %v2933 = vsel %vm1501, %v2925, -inf
        %v2934 = vsel %vm1502, %v2926, -inf
        %v2935 = vsel %vm1503, %v2927, -inf
        %v2936 = vsel %vm1504, %v2928, -inf
        %v2937 = vsel %vm1505, %v2929, -inf
        %v2938 = vsel %vm1608, %v2930, -inf
        %2939 = vmax.xlane.f32.xlu0 %v2938
        %v2940 = vpop.xlane.xlu0 %2939
        %v2941 = vsel %vm1608, %v2931, -inf
        %2942 = vmax.xlane.f32.xlu0 %v2941
        %v2943 = vpop.xlane.xlu0 %2942
        %v2944 = vsel %vm1608, %v2932, -inf
        %2945 = vmax.xlane.f32.xlu0 %v2944
        %v2946 = vpop.xlane.xlu0 %2945
        %v2947 = vsel %vm1608, %v2933, -inf
        %2948 = vmax.xlane.f32.xlu0 %v2947
        %v2949 = vpop.xlane.xlu0 %2948
        %v2950 = vsel %vm1608, %v2934, -inf
        %2951 = vmax.xlane.f32.xlu0 %v2950
        %v2952 = vpop.xlane.xlu0 %2951
        %v2953 = vsel %vm1608, %v2935, -inf
        %2954 = vmax.xlane.f32.xlu0 %v2953
        %v2955 = vpop.xlane.xlu0 %2954
        %v2956 = vsel %vm1608, %v2936, -inf
        %2957 = vmax.xlane.f32.xlu0 %v2956
        %v2958 = vpop.xlane.xlu0 %2957
        %v2959 = vsel %vm1608, %v2937, -inf
        %2960 = vmax.xlane.f32.xlu0 %v2959
        %v2961 = vpop.xlane.xlu0 %2960
        %v2962 = vsub.f32 %v2930, %v2940
        %v2963 = vsub.f32 %v2931, %v2943
        %v2964 = vsub.f32 %v2932, %v2946
        %v2965 = vsub.f32 %v2933, %v2949
        %v2966 = vsub.f32 %v2934, %v2952
        %v2967 = vsub.f32 %v2935, %v2955
        %v2968 = vsub.f32 %v2936, %v2958
        %v2969 = vsub.f32 %v2937, %v2961
        %v2970 = vmul.f32 %v2962, 1.442695
        %v2971 = vpow.pop %v2970
        %v2972 = vmul.f32 %v2963, 1.442695
        %v2973 = vpow.pop %v2972
        %v2974 = vmul.f32 %v2964, 1.442695
        %v2975 = vpow.pop %v2974
        %v2976 = vmul.f32 %v2965, 1.442695
        %v2977 = vpow.pop %v2976
        %v2978 = vmul.f32 %v2966, 1.442695
        %v2979 = vpow.pop %v2978
        %v2980 = vmul.f32 %v2967, 1.442695
        %v2981 = vpow.pop %v2980
        %v2982 = vmul.f32 %v2968, 1.442695
        %v2983 = vpow.pop %v2982
        %v2984 = vmul.f32 %v2969, 1.442695
        %v2985 = vpow.pop %v2984
        %v2986 = vsel %vm1608, %v2971, 0.0
        %2987 = vadd.xlane.f32.xlu0 %v2986
        %v2988 = vpop.xlane.xlu0 %2987
        %v2989 = vsel %vm1608, %v2973, 0.0
        %2990 = vadd.xlane.f32.xlu0 %v2989
        %v2991 = vpop.xlane.xlu0 %2990
        %v2992 = vsel %vm1608, %v2975, 0.0
        %2993 = vadd.xlane.f32.xlu0 %v2992
        %v2994 = vpop.xlane.xlu0 %2993
        %v2995 = vsel %vm1608, %v2977, 0.0
        %2996 = vadd.xlane.f32.xlu0 %v2995
        %v2997 = vpop.xlane.xlu0 %2996
        %v2998 = vsel %vm1608, %v2979, 0.0
        %2999 = vadd.xlane.f32.xlu0 %v2998
        %v3000 = vpop.xlane.xlu0 %2999
        %v3001 = vsel %vm1608, %v2981, 0.0
        %3002 = vadd.xlane.f32.xlu0 %v3001
        %v3003 = vpop.xlane.xlu0 %3002
        %v3004 = vsel %vm1608, %v2983, 0.0
        %3005 = vadd.xlane.f32.xlu0 %v3004
        %v3006 = vpop.xlane.xlu0 %3005
        %v3007 = vsel %vm1608, %v2985, 0.0
        %3008 = vadd.xlane.f32.xlu0 %v3007
        %v3009 = vpop.xlane.xlu0 %3008
        %v3010 = vrcp.pop %v2988
        %v3011 = vrcp.pop %v2991
        %v3012 = vrcp.pop %v2994
        %v3013 = vrcp.pop %v2997
        %v3014 = vrcp.pop %v3000
        %v3015 = vrcp.pop %v3003
        %v3016 = vrcp.pop %v3006
        %v3017 = vrcp.pop %v3009
        %v3018 = vmul.f32 %v2971, %v3010
        %v3019 = vmul.f32 %v2973, %v3011
        %v3020 = vmul.f32 %v2975, %v3012
        %v3021 = vmul.f32 %v2977, %v3013
        %v3022 = vmul.f32 %v2979, %v3014
        %v3023 = vmul.f32 %v2981, %v3015
        %v3024 = vmul.f32 %v2983, %v3016
        %v3025 = vmul.f32 %v2985, %v3017
        %v3026 = vpack.c.bf16 %v3019, %v3018
        %v3027 = vpack.c.bf16 %v3021, %v3020
        %v3028 = vpack.c.bf16 %v3023, %v3022
        %v3029 = vpack.c.bf16 %v3025, %v3024
        %3030 = vrot.lane.b32.xlu0 %v2796, 96
        %v3031 = vpop.permute.xlu0 %3030
        %3032 = vrot.lane.b32.xlu0 %v2797, 96
        %v3033 = vpop.permute.xlu0 %3032
        %3034 = vrot.lane.b32.xlu0 %v2798, 96
        %v3035 = vpop.permute.xlu0 %3034
        %3036 = vrot.lane.b32.xlu0 %v2799, 96
        %v3037 = vpop.permute.xlu0 %3036
        %v3043 = vsel %vm1608, %v3026, 0
        %v3046 = vsel %vm1608, %v3027, 0
        %v3049 = vsel %vm1608, %v3028, 0
        %v3052 = vsel %vm1608, %v3029, 0
        %3054 = vmatpush.bf16.msra.mxu0 0
        %3055 = vmatpush.bf16.msra.mxu0 0
        %3056 = vmatpush.bf16.msra.mxu0 0
        %3057 = vmatpush.bf16.msra.mxu0 0
        %3058 = vmatpush.bf16.msra.mxu0 %v3037
        %3059 = vmatpush.bf16.msra.mxu0 %v3035
        %3060 = vmatpush.bf16.msra.mxu0 %v3033
        %3061 = vmatpush.bf16.msra.mxu0 %v3031
        %3062 = vmatmul.bf16.gmra.mxu0 %v3043
        %v3063 = vpop.f32.mrf.mxu0
        %v3064 = vadd.f32 0.0, %v3063
        %v3065 = vpop.f32.mrf.mxu0
        %v3066 = vadd.f32 0.0, %v3065
        %3067 = vmatmul.bf16.gmra.mxu0 %v3046
        %v3068 = vpop.f32.mrf.mxu0
        %v3069 = vadd.f32 0.0, %v3068
        %v3070 = vpop.f32.mrf.mxu0
        %v3071 = vadd.f32 0.0, %v3070
        %3072 = vmatmul.bf16.gmra.mxu0 %v3049
        %v3073 = vpop.f32.mrf.mxu0
        %v3074 = vadd.f32 0.0, %v3073
        %v3075 = vpop.f32.mrf.mxu0
        %v3076 = vadd.f32 0.0, %v3075
        %3077 = vmatmul.bf16.gmra.mxu0 %v3052
        %v3078 = vpop.f32.mrf.mxu0
        %v3079 = vadd.f32 0.0, %v3078
        %v3080 = vpop.f32.mrf.mxu0
        %v3081 = vadd.f32 0.0, %v3080
        %3082 = vdwg.mxu0
        %3091 = vrot.lane.b32.xlu0 %v3064, 32
        %v3092 = vpop.permute.xlu0 %3091
        %3093 = vrot.lane.b32.xlu0 %v3066, 32
        %v3094 = vpop.permute.xlu0 %3093
        %3095 = vrot.lane.b32.xlu0 %v3069, 32
        %v3096 = vpop.permute.xlu0 %3095
        %3097 = vrot.lane.b32.xlu0 %v3071, 32
        %v3098 = vpop.permute.xlu0 %3097
        %3099 = vrot.lane.b32.xlu0 %v3074, 32
        %v3100 = vpop.permute.xlu0 %3099
        %3101 = vrot.lane.b32.xlu0 %v3076, 32
        %v3102 = vpop.permute.xlu0 %3101
        %3103 = vrot.lane.b32.xlu0 %v3079, 32
        %v3104 = vpop.permute.xlu0 %3103
        %3105 = vrot.lane.b32.xlu0 %v3081, 32
        %v3106 = vpop.permute.xlu0 %3105
        %3115 = vst.msk [vmem:[#allocation3 + $0x40] sm:$0xff] %vm2036, %v3092
        %3116 = vst.msk [vmem:[#allocation3 + $0x48] sm:$0xff] %vm2036, %v3094
        %3117 = vst.msk [vmem:[#allocation3 + $0x50] sm:$0xff] %vm2036, %v3096
        %3118 = vst.msk [vmem:[#allocation3 + $0x58] sm:$0xff] %vm2036, %v3098
        %3119 = vst.msk [vmem:[#allocation3 + $0x60] sm:$0xff] %vm2036, %v3100
        %3120 = vst.msk [vmem:[#allocation3 + $0x68] sm:$0xff] %vm2036, %v3102
        %3121 = vst.msk [vmem:[#allocation3 + $0x70] sm:$0xff] %vm2036, %v3104
        %3122 = vst.msk [vmem:[#allocation3 + $0x78] sm:$0xff] %vm2036, %v3106
        %3123 = vrot.lane.b32.xlu0 %v2603, 64
        %v3124 = vpop.permute.xlu0 %3123
        %3125 = vrot.lane.b32.xlu0 %v2604, 64
        %v3126 = vpop.permute.xlu0 %3125
        %3127 = vrot.lane.b32.xlu0 %v2605, 64
        %v3128 = vpop.permute.xlu0 %3127
        %3129 = vrot.lane.b32.xlu0 %v2606, 64
        %v3130 = vpop.permute.xlu0 %3129
        %3131 = vrot.lane.b32.xlu0 %v2615, 64
        %v3132 = vpop.permute.xlu0 %3131
        %3133 = vrot.lane.b32.xlu0 %v2616, 64
        %v3134 = vpop.permute.xlu0 %3133
        %3135 = vrot.lane.b32.xlu0 %v2617, 64
        %v3136 = vpop.permute.xlu0 %3135
        %3137 = vrot.lane.b32.xlu0 %v2618, 64
        %v3138 = vpop.permute.xlu0 %3137
        %v3140 = vsel %vm1538, %v3124, 0
        %v3143 = vsel %vm1538, %v3126, 0
        %v3146 = vsel %vm1538, %v3128, 0
        %v3149 = vsel %vm1538, %v3130, 0
        %v3152 = vsel %vm1538, %v3132, 0
        %v3155 = vsel %vm1538, %v3134, 0
        %v3158 = vsel %vm1538, %v3136, 0
        %v3161 = vsel %vm1538, %v3138, 0
        %3163 = vmatpush.bf16.xpose.msra.mxu0 0
        %3164 = vmatpush.bf16.xpose.msra.mxu0 0
        %3165 = vmatpush.bf16.xpose.msra.mxu0 0
        %3166 = vmatpush.bf16.xpose.msra.mxu0 0
        %3167 = vmatpush.bf16.xpose.msra.mxu0 %v3161
        %3168 = vmatpush.bf16.xpose.msra.mxu0 %v3158
        %3169 = vmatpush.bf16.xpose.msra.mxu0 %v3155
        %3170 = vmatpush.bf16.xpose.msra.mxu0 %v3152
        %3171 = vmatmul.bf16.gmra.mxu0 %v3140
        %v3172 = vpop.f32.mrf.mxu0
        %v3173 = vadd.f32 0.0, %v3172
        %v3174 = vpop.f32.mrf.mxu0
        %v3175 = vadd.f32 0.0, %v3174
        %3176 = vmatmul.bf16.gmra.mxu0 %v3143
        %v3177 = vpop.f32.mrf.mxu0
        %v3178 = vadd.f32 0.0, %v3177
        %v3179 = vpop.f32.mrf.mxu0
        %v3180 = vadd.f32 0.0, %v3179
        %3181 = vmatmul.bf16.gmra.mxu0 %v3146
        %v3182 = vpop.f32.mrf.mxu0
        %v3183 = vadd.f32 0.0, %v3182
        %v3184 = vpop.f32.mrf.mxu0
        %v3185 = vadd.f32 0.0, %v3184
        %3186 = vmatmul.bf16.gmra.mxu0 %v3149
        %v3187 = vpop.f32.mrf.mxu0
        %v3188 = vadd.f32 0.0, %v3187
        %v3189 = vpop.f32.mrf.mxu0
        %v3190 = vadd.f32 0.0, %v3189
        %3191 = vdwg.mxu0
        %v3192 = vmul.f32 %v3173, 0.088388346
        %v3193 = vmul.f32 %v3175, 0.088388346
        %v3194 = vmul.f32 %v3178, 0.088388346
        %v3195 = vmul.f32 %v3180, 0.088388346
        %v3196 = vmul.f32 %v3183, 0.088388346
        %v3197 = vmul.f32 %v3185, 0.088388346
        %v3198 = vmul.f32 %v3188, 0.088388346
        %v3199 = vmul.f32 %v3190, 0.088388346
        %v3200 = vsel %vm1498, %v3192, -inf
        %v3201 = vsel %vm1499, %v3193, -inf
        %v3202 = vsel %vm1500, %v3194, -inf
        %v3203 = vsel %vm1501, %v3195, -inf
        %v3204 = vsel %vm1502, %v3196, -inf
        %v3205 = vsel %vm1503, %v3197, -inf
        %v3206 = vsel %vm1504, %v3198, -inf
        %v3207 = vsel %vm1505, %v3199, -inf
        %v3208 = vsel %vm1608, %v3200, -inf
        %3209 = vmax.xlane.f32.xlu0 %v3208
        %v3210 = vpop.xlane.xlu0 %3209
        %v3211 = vsel %vm1608, %v3201, -inf
        %3212 = vmax.xlane.f32.xlu0 %v3211
        %v3213 = vpop.xlane.xlu0 %3212
        %v3214 = vsel %vm1608, %v3202, -inf
        %3215 = vmax.xlane.f32.xlu0 %v3214
        %v3216 = vpop.xlane.xlu0 %3215
        %v3217 = vsel %vm1608, %v3203, -inf
        %3218 = vmax.xlane.f32.xlu0 %v3217
        %v3219 = vpop.xlane.xlu0 %3218
        %v3220 = vsel %vm1608, %v3204, -inf
        %3221 = vmax.xlane.f32.xlu0 %v3220
        %v3222 = vpop.xlane.xlu0 %3221
        %v3223 = vsel %vm1608, %v3205, -inf
        %3224 = vmax.xlane.f32.xlu0 %v3223
        %v3225 = vpop.xlane.xlu0 %3224
        %v3226 = vsel %vm1608, %v3206, -inf
        %3227 = vmax.xlane.f32.xlu0 %v3226
        %v3228 = vpop.xlane.xlu0 %3227
        %v3229 = vsel %vm1608, %v3207, -inf
        %3230 = vmax.xlane.f32.xlu0 %v3229
        %v3231 = vpop.xlane.xlu0 %3230
        %v3232 = vsub.f32 %v3200, %v3210
        %v3233 = vsub.f32 %v3201, %v3213
        %v3234 = vsub.f32 %v3202, %v3216
        %v3235 = vsub.f32 %v3203, %v3219
        %v3236 = vsub.f32 %v3204, %v3222
        %v3237 = vsub.f32 %v3205, %v3225
        %v3238 = vsub.f32 %v3206, %v3228
        %v3239 = vsub.f32 %v3207, %v3231
        %v3240 = vmul.f32 %v3232, 1.442695
        %v3241 = vpow.pop %v3240
        %v3242 = vmul.f32 %v3233, 1.442695
        %v3243 = vpow.pop %v3242
        %v3244 = vmul.f32 %v3234, 1.442695
        %v3245 = vpow.pop %v3244
        %v3246 = vmul.f32 %v3235, 1.442695
        %v3247 = vpow.pop %v3246
        %v3248 = vmul.f32 %v3236, 1.442695
        %v3249 = vpow.pop %v3248
        %v3250 = vmul.f32 %v3237, 1.442695
        %v3251 = vpow.pop %v3250
        %v3252 = vmul.f32 %v3238, 1.442695
        %v3253 = vpow.pop %v3252
        %v3254 = vmul.f32 %v3239, 1.442695
        %v3255 = vpow.pop %v3254
        %v3256 = vsel %vm1608, %v3241, 0.0
        %3257 = vadd.xlane.f32.xlu0 %v3256
        %v3258 = vpop.xlane.xlu0 %3257
        %v3259 = vsel %vm1608, %v3243, 0.0
        %3260 = vadd.xlane.f32.xlu0 %v3259
        %v3261 = vpop.xlane.xlu0 %3260
        %v3262 = vsel %vm1608, %v3245, 0.0
        %3263 = vadd.xlane.f32.xlu0 %v3262
        %v3264 = vpop.xlane.xlu0 %3263
        %v3265 = vsel %vm1608, %v3247, 0.0
        %3266 = vadd.xlane.f32.xlu0 %v3265
        %v3267 = vpop.xlane.xlu0 %3266
        %v3268 = vsel %vm1608, %v3249, 0.0
        %3269 = vadd.xlane.f32.xlu0 %v3268
        %v3270 = vpop.xlane.xlu0 %3269
        %v3271 = vsel %vm1608, %v3251, 0.0
        %3272 = vadd.xlane.f32.xlu0 %v3271
        %v3273 = vpop.xlane.xlu0 %3272
        %v3274 = vsel %vm1608, %v3253, 0.0
        %3275 = vadd.xlane.f32.xlu0 %v3274
        %v3276 = vpop.xlane.xlu0 %3275
        %v3277 = vsel %vm1608, %v3255, 0.0
        %3278 = vadd.xlane.f32.xlu0 %v3277
        %v3279 = vpop.xlane.xlu0 %3278
        %v3280 = vrcp.pop %v3258
        %v3281 = vrcp.pop %v3261
        %v3282 = vrcp.pop %v3264
        %v3283 = vrcp.pop %v3267
        %v3284 = vrcp.pop %v3270
        %v3285 = vrcp.pop %v3273
        %v3286 = vrcp.pop %v3276
        %v3287 = vrcp.pop %v3279
        %v3288 = vmul.f32 %v3241, %v3280
        %v3289 = vmul.f32 %v3243, %v3281
        %v3290 = vmul.f32 %v3245, %v3282
        %v3291 = vmul.f32 %v3247, %v3283
        %v3292 = vmul.f32 %v3249, %v3284
        %v3293 = vmul.f32 %v3251, %v3285
        %v3294 = vmul.f32 %v3253, %v3286
        %v3295 = vmul.f32 %v3255, %v3287
        %v3296 = vpack.c.bf16 %v3289, %v3288
        %v3297 = vpack.c.bf16 %v3291, %v3290
        %v3298 = vpack.c.bf16 %v3293, %v3292
        %v3299 = vpack.c.bf16 %v3295, %v3294
        %3300 = vrot.lane.b32.xlu0 %v2796, 64
        %v3301 = vpop.permute.xlu0 %3300
        %3302 = vrot.lane.b32.xlu0 %v2797, 64
        %v3303 = vpop.permute.xlu0 %3302
        %3304 = vrot.lane.b32.xlu0 %v2798, 64
        %v3305 = vpop.permute.xlu0 %3304
        %3306 = vrot.lane.b32.xlu0 %v2799, 64
        %v3307 = vpop.permute.xlu0 %3306
        %v3313 = vsel %vm1608, %v3296, 0
        %v3316 = vsel %vm1608, %v3297, 0
        %v3319 = vsel %vm1608, %v3298, 0
        %v3322 = vsel %vm1608, %v3299, 0
        %3324 = vmatpush.bf16.msra.mxu0 0
        %3325 = vmatpush.bf16.msra.mxu0 0
        %3326 = vmatpush.bf16.msra.mxu0 0
        %3327 = vmatpush.bf16.msra.mxu0 0
        %3328 = vmatpush.bf16.msra.mxu0 %v3307
        %3329 = vmatpush.bf16.msra.mxu0 %v3305
        %3330 = vmatpush.bf16.msra.mxu0 %v3303
        %3331 = vmatpush.bf16.msra.mxu0 %v3301
        %3332 = vmatmul.bf16.gmra.mxu0 %v3313
        %v3333 = vpop.f32.mrf.mxu0
        %v3334 = vadd.f32 0.0, %v3333
        %v3335 = vpop.f32.mrf.mxu0
        %v3336 = vadd.f32 0.0, %v3335
        %3337 = vmatmul.bf16.gmra.mxu0 %v3316
        %v3338 = vpop.f32.mrf.mxu0
        %v3339 = vadd.f32 0.0, %v3338
        %v3340 = vpop.f32.mrf.mxu0
        %v3341 = vadd.f32 0.0, %v3340
        %3342 = vmatmul.bf16.gmra.mxu0 %v3319
        %v3343 = vpop.f32.mrf.mxu0
        %v3344 = vadd.f32 0.0, %v3343
        %v3345 = vpop.f32.mrf.mxu0
        %v3346 = vadd.f32 0.0, %v3345
        %3347 = vmatmul.bf16.gmra.mxu0 %v3322
        %v3348 = vpop.f32.mrf.mxu0
        %v3349 = vadd.f32 0.0, %v3348
        %v3350 = vpop.f32.mrf.mxu0
        %v3351 = vadd.f32 0.0, %v3350
        %3352 = vdwg.mxu0
        %3361 = vrot.lane.b32.xlu0 %v3334, 64
        %v3362 = vpop.permute.xlu0 %3361
        %3363 = vrot.lane.b32.xlu0 %v3336, 64
        %v3364 = vpop.permute.xlu0 %3363
        %3365 = vrot.lane.b32.xlu0 %v3339, 64
        %v3366 = vpop.permute.xlu0 %3365
        %3367 = vrot.lane.b32.xlu0 %v3341, 64
        %v3368 = vpop.permute.xlu0 %3367
        %3369 = vrot.lane.b32.xlu0 %v3344, 64
        %v3370 = vpop.permute.xlu0 %3369
        %3371 = vrot.lane.b32.xlu0 %v3346, 64
        %v3372 = vpop.permute.xlu0 %3371
        %3373 = vrot.lane.b32.xlu0 %v3349, 64
        %v3374 = vpop.permute.xlu0 %3373
        %3375 = vrot.lane.b32.xlu0 %v3351, 64
        %v3376 = vpop.permute.xlu0 %3375
        %3385 = vst.msk [vmem:[#allocation3 + $0x40] sm:$0xff] %vm2307, %v3362
        %3386 = vst.msk [vmem:[#allocation3 + $0x48] sm:$0xff] %vm2307, %v3364
        %3387 = vst.msk [vmem:[#allocation3 + $0x50] sm:$0xff] %vm2307, %v3366
        %3388 = vst.msk [vmem:[#allocation3 + $0x58] sm:$0xff] %vm2307, %v3368
        %3389 = vst.msk [vmem:[#allocation3 + $0x60] sm:$0xff] %vm2307, %v3370
        %3390 = vst.msk [vmem:[#allocation3 + $0x68] sm:$0xff] %vm2307, %v3372
        %3391 = vst.msk [vmem:[#allocation3 + $0x70] sm:$0xff] %vm2307, %v3374
        %3392 = vst.msk [vmem:[#allocation3 + $0x78] sm:$0xff] %vm2307, %v3376
        %3393 = vrot.lane.b32.xlu0 %v2603, 32
        %v3394 = vpop.permute.xlu0 %3393
        %3395 = vrot.lane.b32.xlu0 %v2604, 32
        %v3396 = vpop.permute.xlu0 %3395
        %3397 = vrot.lane.b32.xlu0 %v2605, 32
        %v3398 = vpop.permute.xlu0 %3397
        %3399 = vrot.lane.b32.xlu0 %v2606, 32
        %v3400 = vpop.permute.xlu0 %3399
        %3401 = vrot.lane.b32.xlu0 %v2615, 32
        %v3402 = vpop.permute.xlu0 %3401
        %3403 = vrot.lane.b32.xlu0 %v2616, 32
        %v3404 = vpop.permute.xlu0 %3403
        %3405 = vrot.lane.b32.xlu0 %v2617, 32
        %v3406 = vpop.permute.xlu0 %3405
        %3407 = vrot.lane.b32.xlu0 %v2618, 32
        %v3408 = vpop.permute.xlu0 %3407
        %v3410 = vsel %vm1538, %v3394, 0
        %v3413 = vsel %vm1538, %v3396, 0
        %v3416 = vsel %vm1538, %v3398, 0
        %v3419 = vsel %vm1538, %v3400, 0
        %v3422 = vsel %vm1538, %v3402, 0
        %v3425 = vsel %vm1538, %v3404, 0
        %v3428 = vsel %vm1538, %v3406, 0
        %v3431 = vsel %vm1538, %v3408, 0
        %3433 = vmatpush.bf16.xpose.msra.mxu0 0
        %3434 = vmatpush.bf16.xpose.msra.mxu0 0
        %3435 = vmatpush.bf16.xpose.msra.mxu0 0
        %3436 = vmatpush.bf16.xpose.msra.mxu0 0
        %3437 = vmatpush.bf16.xpose.msra.mxu0 %v3431
        %3438 = vmatpush.bf16.xpose.msra.mxu0 %v3428
        %3439 = vmatpush.bf16.xpose.msra.mxu0 %v3425
        %3440 = vmatpush.bf16.xpose.msra.mxu0 %v3422
        %3441 = vmatmul.bf16.gmra.mxu0 %v3410
        %v3442 = vpop.f32.mrf.mxu0
        %v3443 = vadd.f32 0.0, %v3442
        %v3444 = vpop.f32.mrf.mxu0
        %v3445 = vadd.f32 0.0, %v3444
        %3446 = vmatmul.bf16.gmra.mxu0 %v3413
        %v3447 = vpop.f32.mrf.mxu0
        %v3448 = vadd.f32 0.0, %v3447
        %v3449 = vpop.f32.mrf.mxu0
        %v3450 = vadd.f32 0.0, %v3449
        %3451 = vmatmul.bf16.gmra.mxu0 %v3416
        %v3452 = vpop.f32.mrf.mxu0
        %v3453 = vadd.f32 0.0, %v3452
        %v3454 = vpop.f32.mrf.mxu0
        %v3455 = vadd.f32 0.0, %v3454
        %3456 = vmatmul.bf16.gmra.mxu0 %v3419
        %v3457 = vpop.f32.mrf.mxu0
        %v3458 = vadd.f32 0.0, %v3457
        %v3459 = vpop.f32.mrf.mxu0
        %v3460 = vadd.f32 0.0, %v3459
        %3461 = vdwg.mxu0
        %v3462 = vmul.f32 %v3443, 0.088388346
        %v3463 = vmul.f32 %v3445, 0.088388346
        %v3464 = vmul.f32 %v3448, 0.088388346
        %v3465 = vmul.f32 %v3450, 0.088388346
        %v3466 = vmul.f32 %v3453, 0.088388346
        %v3467 = vmul.f32 %v3455, 0.088388346
        %v3468 = vmul.f32 %v3458, 0.088388346
        %v3469 = vmul.f32 %v3460, 0.088388346
        %v3470 = vsel %vm1498, %v3462, -inf
        %v3471 = vsel %vm1499, %v3463, -inf
        %v3472 = vsel %vm1500, %v3464, -inf
        %v3473 = vsel %vm1501, %v3465, -inf
        %v3474 = vsel %vm1502, %v3466, -inf
        %v3475 = vsel %vm1503, %v3467, -inf
        %v3476 = vsel %vm1504, %v3468, -inf
        %v3477 = vsel %vm1505, %v3469, -inf
        %v3478 = vsel %vm1608, %v3470, -inf
        %3479 = vmax.xlane.f32.xlu0 %v3478
        %v3480 = vpop.xlane.xlu0 %3479
        %v3481 = vsel %vm1608, %v3471, -inf
        %3482 = vmax.xlane.f32.xlu0 %v3481
        %v3483 = vpop.xlane.xlu0 %3482
        %v3484 = vsel %vm1608, %v3472, -inf
        %3485 = vmax.xlane.f32.xlu0 %v3484
        %v3486 = vpop.xlane.xlu0 %3485
        %v3487 = vsel %vm1608, %v3473, -inf
        %3488 = vmax.xlane.f32.xlu0 %v3487
        %v3489 = vpop.xlane.xlu0 %3488
        %v3490 = vsel %vm1608, %v3474, -inf
        %3491 = vmax.xlane.f32.xlu0 %v3490
        %v3492 = vpop.xlane.xlu0 %3491
        %v3493 = vsel %vm1608, %v3475, -inf
        %3494 = vmax.xlane.f32.xlu0 %v3493
        %v3495 = vpop.xlane.xlu0 %3494
        %v3496 = vsel %vm1608, %v3476, -inf
        %3497 = vmax.xlane.f32.xlu0 %v3496
        %v3498 = vpop.xlane.xlu0 %3497
        %v3499 = vsel %vm1608, %v3477, -inf
        %3500 = vmax.xlane.f32.xlu0 %v3499
        %v3501 = vpop.xlane.xlu0 %3500
        %v3502 = vsub.f32 %v3470, %v3480
        %v3503 = vsub.f32 %v3471, %v3483
        %v3504 = vsub.f32 %v3472, %v3486
        %v3505 = vsub.f32 %v3473, %v3489
        %v3506 = vsub.f32 %v3474, %v3492
        %v3507 = vsub.f32 %v3475, %v3495
        %v3508 = vsub.f32 %v3476, %v3498
        %v3509 = vsub.f32 %v3477, %v3501
        %v3510 = vmul.f32 %v3502, 1.442695
        %v3511 = vpow.pop %v3510
        %v3512 = vmul.f32 %v3503, 1.442695
        %v3513 = vpow.pop %v3512
        %v3514 = vmul.f32 %v3504, 1.442695
        %v3515 = vpow.pop %v3514
        %v3516 = vmul.f32 %v3505, 1.442695
        %v3517 = vpow.pop %v3516
        %v3518 = vmul.f32 %v3506, 1.442695
        %v3519 = vpow.pop %v3518
        %v3520 = vmul.f32 %v3507, 1.442695
        %v3521 = vpow.pop %v3520
        %v3522 = vmul.f32 %v3508, 1.442695
        %v3523 = vpow.pop %v3522
        %v3524 = vmul.f32 %v3509, 1.442695
        %v3525 = vpow.pop %v3524
        %v3526 = vsel %vm1608, %v3511, 0.0
        %3527 = vadd.xlane.f32.xlu0 %v3526
        %v3528 = vpop.xlane.xlu0 %3527
        %v3529 = vsel %vm1608, %v3513, 0.0
        %3530 = vadd.xlane.f32.xlu0 %v3529
        %v3531 = vpop.xlane.xlu0 %3530
        %v3532 = vsel %vm1608, %v3515, 0.0
        %3533 = vadd.xlane.f32.xlu0 %v3532
        %v3534 = vpop.xlane.xlu0 %3533
        %v3535 = vsel %vm1608, %v3517, 0.0
        %3536 = vadd.xlane.f32.xlu0 %v3535
        %v3537 = vpop.xlane.xlu0 %3536
        %v3538 = vsel %vm1608, %v3519, 0.0
        %3539 = vadd.xlane.f32.xlu0 %v3538
        %v3540 = vpop.xlane.xlu0 %3539
        %v3541 = vsel %vm1608, %v3521, 0.0
        %3542 = vadd.xlane.f32.xlu0 %v3541
        %v3543 = vpop.xlane.xlu0 %3542
        %v3544 = vsel %vm1608, %v3523, 0.0
        %3545 = vadd.xlane.f32.xlu0 %v3544
        %v3546 = vpop.xlane.xlu0 %3545
        %v3547 = vsel %vm1608, %v3525, 0.0
        %3548 = vadd.xlane.f32.xlu0 %v3547
        %v3549 = vpop.xlane.xlu0 %3548
        %v3550 = vrcp.pop %v3528
        %v3551 = vrcp.pop %v3531
        %v3552 = vrcp.pop %v3534
        %v3553 = vrcp.pop %v3537
        %v3554 = vrcp.pop %v3540
        %v3555 = vrcp.pop %v3543
        %v3556 = vrcp.pop %v3546
        %v3557 = vrcp.pop %v3549
        %v3558 = vmul.f32 %v3511, %v3550
        %v3559 = vmul.f32 %v3513, %v3551
        %v3560 = vmul.f32 %v3515, %v3552
        %v3561 = vmul.f32 %v3517, %v3553
        %v3562 = vmul.f32 %v3519, %v3554
        %v3563 = vmul.f32 %v3521, %v3555
        %v3564 = vmul.f32 %v3523, %v3556
        %v3565 = vmul.f32 %v3525, %v3557
        %v3566 = vpack.c.bf16 %v3559, %v3558
        %v3567 = vpack.c.bf16 %v3561, %v3560
        %v3568 = vpack.c.bf16 %v3563, %v3562
        %v3569 = vpack.c.bf16 %v3565, %v3564
        %3570 = vrot.lane.b32.xlu0 %v2796, 32
        %v3571 = vpop.permute.xlu0 %3570
        %3572 = vrot.lane.b32.xlu0 %v2797, 32
        %v3573 = vpop.permute.xlu0 %3572
        %3574 = vrot.lane.b32.xlu0 %v2798, 32
        %v3575 = vpop.permute.xlu0 %3574
        %3576 = vrot.lane.b32.xlu0 %v2799, 32
        %v3577 = vpop.permute.xlu0 %3576
        %v3583 = vsel %vm1608, %v3566, 0
        %v3586 = vsel %vm1608, %v3567, 0
        %v3589 = vsel %vm1608, %v3568, 0
        %v3592 = vsel %vm1608, %v3569, 0
        %3594 = vmatpush.bf16.msra.mxu0 0
        %3595 = vmatpush.bf16.msra.mxu0 0
        %3596 = vmatpush.bf16.msra.mxu0 0
        %3597 = vmatpush.bf16.msra.mxu0 0
        %3598 = vmatpush.bf16.msra.mxu0 %v3577
        %3599 = vmatpush.bf16.msra.mxu0 %v3575
        %3600 = vmatpush.bf16.msra.mxu0 %v3573
        %3601 = vmatpush.bf16.msra.mxu0 %v3571
        %3602 = vmatmul.bf16.gmra.mxu0 %v3583
        %v3603 = vpop.f32.mrf.mxu0
        %v3604 = vadd.f32 0.0, %v3603
        %v3605 = vpop.f32.mrf.mxu0
        %v3606 = vadd.f32 0.0, %v3605
        %3607 = vmatmul.bf16.gmra.mxu0 %v3586
        %v3608 = vpop.f32.mrf.mxu0
        %v3609 = vadd.f32 0.0, %v3608
        %v3610 = vpop.f32.mrf.mxu0
        %v3611 = vadd.f32 0.0, %v3610
        %3612 = vmatmul.bf16.gmra.mxu0 %v3589
        %v3613 = vpop.f32.mrf.mxu0
        %v3614 = vadd.f32 0.0, %v3613
        %v3615 = vpop.f32.mrf.mxu0
        %v3616 = vadd.f32 0.0, %v3615
        %3617 = vmatmul.bf16.gmra.mxu0 %v3592
        %v3618 = vpop.f32.mrf.mxu0
        %v3619 = vadd.f32 0.0, %v3618
        %v3620 = vpop.f32.mrf.mxu0
        %v3621 = vadd.f32 0.0, %v3620
        %3622 = vdwg.mxu0
        %3631 = vrot.lane.b32.xlu0 %v3604, 96
        %v3632 = vpop.permute.xlu0 %3631
        %3633 = vrot.lane.b32.xlu0 %v3606, 96
        %v3634 = vpop.permute.xlu0 %3633
        %3635 = vrot.lane.b32.xlu0 %v3609, 96
        %v3636 = vpop.permute.xlu0 %3635
        %3637 = vrot.lane.b32.xlu0 %v3611, 96
        %v3638 = vpop.permute.xlu0 %3637
        %3639 = vrot.lane.b32.xlu0 %v3614, 96
        %v3640 = vpop.permute.xlu0 %3639
        %3641 = vrot.lane.b32.xlu0 %v3616, 96
        %v3642 = vpop.permute.xlu0 %3641
        %3643 = vrot.lane.b32.xlu0 %v3619, 96
        %v3644 = vpop.permute.xlu0 %3643
        %3645 = vrot.lane.b32.xlu0 %v3621, 96
        %v3646 = vpop.permute.xlu0 %3645
        %3655 = vst.msk [vmem:[#allocation3 + $0x40] sm:$0xff] %vm2578, %v3632
        %3656 = vst.msk [vmem:[#allocation3 + $0x48] sm:$0xff] %vm2578, %v3634
        %3657 = vst.msk [vmem:[#allocation3 + $0x50] sm:$0xff] %vm2578, %v3636
        %3658 = vst.msk [vmem:[#allocation3 + $0x58] sm:$0xff] %vm2578, %v3638
        %3659 = vst.msk [vmem:[#allocation3 + $0x60] sm:$0xff] %vm2578, %v3640
        %3660 = vst.msk [vmem:[#allocation3 + $0x68] sm:$0xff] %vm2578, %v3642
        %3661 = vst.msk [vmem:[#allocation3 + $0x70] sm:$0xff] %vm2578, %v3644
        %3662 = vst.msk [vmem:[#allocation3 + $0x78] sm:$0xff] %vm2578, %v3646
        %v3663 = vld [vmem:[#allocation3] sm:$0xff]
        %v3664 = vld [vmem:[#allocation3 + $0x8] sm:$0xff]
        %v3665 = vld [vmem:[#allocation3 + $0x10] sm:$0xff]
        %v3666 = vld [vmem:[#allocation3 + $0x18] sm:$0xff]
        %v3667 = vld [vmem:[#allocation3 + $0x20] sm:$0xff]
        %v3668 = vld [vmem:[#allocation3 + $0x28] sm:$0xff]
        %v3669 = vld [vmem:[#allocation3 + $0x30] sm:$0xff]
        %v3670 = vld [vmem:[#allocation3 + $0x38] sm:$0xff]
        %v3671 = vld [vmem:[#allocation3 + $0x40] sm:$0xff]
        %v3672 = vld [vmem:[#allocation3 + $0x48] sm:$0xff]
        %v3673 = vld [vmem:[#allocation3 + $0x50] sm:$0xff]
        %v3674 = vld [vmem:[#allocation3 + $0x58] sm:$0xff]
        %v3675 = vld [vmem:[#allocation3 + $0x60] sm:$0xff]
        %v3676 = vld [vmem:[#allocation3 + $0x68] sm:$0xff]
        %v3677 = vld [vmem:[#allocation3 + $0x70] sm:$0xff]
        %v3678 = vld [vmem:[#allocation3 + $0x78] sm:$0xff]
        %v3679 = vpack.c.bf16 %v3664, %v3663
        %v3680 = vpack.c.bf16 %v3666, %v3665
        %v3681 = vpack.c.bf16 %v3668, %v3667
        %v3682 = vpack.c.bf16 %v3670, %v3669
        %v3683 = vpack.c.bf16 %v3672, %v3671
        %v3684 = vpack.c.bf16 %v3674, %v3673
        %v3685 = vpack.c.bf16 %v3676, %v3675
        %v3686 = vpack.c.bf16 %v3678, %v3677
        %v3687 = vld [vmem:[%s669] sm:$0xf]
        %v3688 = vld [vmem:[%s669 + $0x4] sm:$0xf]
        %v3689 = vld [vmem:[%s669 + $0x8] sm:$0xf]
        %v3690 = vld [vmem:[%s669 + $0xc] sm:$0xf]
        %v3691 = vld [vmem:[%s669 + $0x10] sm:$0xf]
        %v3692 = vld [vmem:[%s669 + $0x14] sm:$0xf]
        %v3693 = vld [vmem:[%s669 + $0x18] sm:$0xf]
        %v3694 = vld [vmem:[%s669 + $0x1c] sm:$0xf]
        %v3695 = vld [vmem:[%s669 + $0x20] sm:$0xf]
        %v3696 = vld [vmem:[%s669 + $0x24] sm:$0xf]
        %v3697 = vld [vmem:[%s669 + $0x28] sm:$0xf]
        %v3698 = vld [vmem:[%s669 + $0x2c] sm:$0xf]
        %v3699 = vld [vmem:[%s669 + $0x30] sm:$0xf]
        %v3700 = vld [vmem:[%s669 + $0x34] sm:$0xf]
        %v3701 = vld [vmem:[%s669 + $0x38] sm:$0xf]
        %v3702 = vld [vmem:[%s669 + $0x3c] sm:$0xf]
        %v3703 = vld [vmem:[%s672] sm:$0x1]
        %v3705 = vperm.slane %v3703, 0
        %v3723 = vunpack.c.l.b16 %v3687
        %v3724 = vunpack.c.l.b16 %v3688
        %v3725 = vunpack.c.l.b16 %v3689
        %v3726 = vunpack.c.l.b16 %v3690
        %v3727 = vunpack.c.l.b16 %v3691
        %v3728 = vunpack.c.l.b16 %v3692
        %v3729 = vunpack.c.l.b16 %v3693
        %v3730 = vunpack.c.l.b16 %v3694
        %v3731 = vunpack.c.l.b16 %v3695
        %v3732 = vunpack.c.l.b16 %v3696
        %v3733 = vunpack.c.l.b16 %v3697
        %v3734 = vunpack.c.l.b16 %v3698
        %v3735 = vunpack.c.l.b16 %v3699
        %v3736 = vunpack.c.l.b16 %v3700
        %v3737 = vunpack.c.l.b16 %v3701
        %v3738 = vunpack.c.l.b16 %v3702
        %v3739 = vpack.c.b16 %v3724, %v3723
        %v3740 = vpack.c.b16 %v3726, %v3725
        %v3741 = vpack.c.b16 %v3728, %v3727
        %v3742 = vpack.c.b16 %v3730, %v3729
        %v3743 = vpack.c.b16 %v3732, %v3731
        %v3744 = vpack.c.b16 %v3734, %v3733
        %v3745 = vpack.c.b16 %v3736, %v3735
        %v3746 = vpack.c.b16 %v3738, %v3737
        %3755 = vmatpush.bf16.msra.mxu0 %v3746
        %3756 = vmatpush.bf16.msra.mxu0 %v3745
        %3757 = vmatpush.bf16.msra.mxu0 %v3744
        %3758 = vmatpush.bf16.msra.mxu0 %v3743
        %3759 = vmatpush.bf16.msra.mxu0 %v3742
        %3760 = vmatpush.bf16.msra.mxu0 %v3741
        %3761 = vmatpush.bf16.msra.mxu0 %v3740
        %3762 = vmatpush.bf16.msra.mxu0 %v3739
        %3763 = vmatmul.bf16.gmra.mxu0 %v3679
        %v3764 = vpop.f32.mrf.mxu0
        %v3765 = vadd.f32 %v3705, %v3764
        %v3766 = vpop.f32.mrf.mxu0
        %v3767 = vadd.f32 %v3705, %v3766
        %3768 = vmatmul.bf16.gmra.mxu0 %v3680
        %v3769 = vpop.f32.mrf.mxu0
        %v3770 = vadd.f32 %v3705, %v3769
        %v3771 = vpop.f32.mrf.mxu0
        %v3772 = vadd.f32 %v3705, %v3771
        %3773 = vmatmul.bf16.gmra.mxu0 %v3681
        %v3774 = vpop.f32.mrf.mxu0
        %v3775 = vadd.f32 %v3705, %v3774
        %v3776 = vpop.f32.mrf.mxu0
        %v3777 = vadd.f32 %v3705, %v3776
        %3778 = vmatmul.bf16.gmra.mxu0 %v3682
        %v3779 = vpop.f32.mrf.mxu0
        %v3780 = vadd.f32 %v3705, %v3779
        %v3781 = vpop.f32.mrf.mxu0
        %v3782 = vadd.f32 %v3705, %v3781
        %3783 = vmatmul.bf16.gmra.mxu0 %v3683
        %v3784 = vpop.f32.mrf.mxu0
        %v3785 = vadd.f32 %v3705, %v3784
        %v3786 = vpop.f32.mrf.mxu0
        %v3787 = vadd.f32 %v3705, %v3786
        %3788 = vmatmul.bf16.gmra.mxu0 %v3684
        %v3789 = vpop.f32.mrf.mxu0
        %v3790 = vadd.f32 %v3705, %v3789
        %v3791 = vpop.f32.mrf.mxu0
        %v3792 = vadd.f32 %v3705, %v3791
        %3793 = vmatmul.bf16.gmra.mxu0 %v3685
        %v3794 = vpop.f32.mrf.mxu0
        %v3795 = vadd.f32 %v3705, %v3794
        %v3796 = vpop.f32.mrf.mxu0
        %v3797 = vadd.f32 %v3705, %v3796
        %3798 = vmatmul.bf16.gmra.mxu0 %v3686
        %v3799 = vpop.f32.mrf.mxu0
        %v3800 = vadd.f32 %v3705, %v3799
        %v3801 = vpop.f32.mrf.mxu0
        %v3802 = vadd.f32 %v3705, %v3801
        %3803 = vdwg.mxu0
        %v3804 = vadd.f32 %v757, %v3765
        %v3805 = vadd.f32 %v758, %v3767
        %v3806 = vadd.f32 %v759, %v3770
        %v3807 = vadd.f32 %v760, %v3772
        %v3808 = vadd.f32 %v761, %v3775
        %v3809 = vadd.f32 %v762, %v3777
        %v3810 = vadd.f32 %v763, %v3780
        %v3811 = vadd.f32 %v764, %v3782
        %v3812 = vadd.f32 %v765, %v3785
        %v3813 = vadd.f32 %v766, %v3787
        %v3814 = vadd.f32 %v767, %v3790
        %v3815 = vadd.f32 %v768, %v3792
        %v3816 = vadd.f32 %v769, %v3795
        %v3817 = vadd.f32 %v770, %v3797
        %v3818 = vadd.f32 %v771, %v3800
        %v3819 = vadd.f32 %v772, %v3802
        %v3820 = vld [vmem:[%s675] sm:$0x1]
        %v3821 = vld [vmem:[%s678] sm:$0x1]
        %3822 = vadd.xlane.f32.xlu0 %v3804
        %v3823 = vpop.xlane.xlu0 %3822
        %3824 = vadd.xlane.f32.xlu0 %v3805
        %v3825 = vpop.xlane.xlu0 %3824
        %3826 = vadd.xlane.f32.xlu0 %v3806
        %v3827 = vpop.xlane.xlu0 %3826
        %3828 = vadd.xlane.f32.xlu0 %v3807
        %v3829 = vpop.xlane.xlu0 %3828
        %3830 = vadd.xlane.f32.xlu0 %v3808
        %v3831 = vpop.xlane.xlu0 %3830
        %3832 = vadd.xlane.f32.xlu0 %v3809
        %v3833 = vpop.xlane.xlu0 %3832
        %3834 = vadd.xlane.f32.xlu0 %v3810
        %v3835 = vpop.xlane.xlu0 %3834
        %3836 = vadd.xlane.f32.xlu0 %v3811
        %v3837 = vpop.xlane.xlu0 %3836
        %3838 = vadd.xlane.f32.xlu0 %v3812
        %v3839 = vpop.xlane.xlu0 %3838
        %3840 = vadd.xlane.f32.xlu0 %v3813
        %v3841 = vpop.xlane.xlu0 %3840
        %3842 = vadd.xlane.f32.xlu0 %v3814
        %v3843 = vpop.xlane.xlu0 %3842
        %3844 = vadd.xlane.f32.xlu0 %v3815
        %v3845 = vpop.xlane.xlu0 %3844
        %3846 = vadd.xlane.f32.xlu0 %v3816
        %v3847 = vpop.xlane.xlu0 %3846
        %3848 = vadd.xlane.f32.xlu0 %v3817
        %v3849 = vpop.xlane.xlu0 %3848
        %3850 = vadd.xlane.f32.xlu0 %v3818
        %v3851 = vpop.xlane.xlu0 %3850
        %3852 = vadd.xlane.f32.xlu0 %v3819
        %v3853 = vpop.xlane.xlu0 %3852
        %v3854 = vmul.f32 %v3823, %v813
        %v3855 = vmul.f32 %v3825, %v813
        %v3856 = vmul.f32 %v3827, %v813
        %v3857 = vmul.f32 %v3829, %v813
        %v3858 = vmul.f32 %v3831, %v813
        %v3859 = vmul.f32 %v3833, %v813
        %v3860 = vmul.f32 %v3835, %v813
        %v3861 = vmul.f32 %v3837, %v813
        %v3862 = vmul.f32 %v3839, %v813
        %v3863 = vmul.f32 %v3841, %v813
        %v3864 = vmul.f32 %v3843, %v813
        %v3865 = vmul.f32 %v3845, %v813
        %v3866 = vmul.f32 %v3847, %v813
        %v3867 = vmul.f32 %v3849, %v813
        %v3868 = vmul.f32 %v3851, %v813
        %v3869 = vmul.f32 %v3853, %v813
        %v3870 = vsub.f32 %v3804, %v3854
        %v3871 = vsub.f32 %v3805, %v3855
        %v3872 = vsub.f32 %v3806, %v3856
        %v3873 = vsub.f32 %v3807, %v3857
        %v3874 = vsub.f32 %v3808, %v3858
        %v3875 = vsub.f32 %v3809, %v3859
        %v3876 = vsub.f32 %v3810, %v3860
        %v3877 = vsub.f32 %v3811, %v3861
        %v3878 = vsub.f32 %v3812, %v3862
        %v3879 = vsub.f32 %v3813, %v3863
        %v3880 = vsub.f32 %v3814, %v3864
        %v3881 = vsub.f32 %v3815, %v3865
        %v3882 = vsub.f32 %v3816, %v3866
        %v3883 = vsub.f32 %v3817, %v3867
        %v3884 = vsub.f32 %v3818, %v3868
        %v3885 = vsub.f32 %v3819, %v3869
        %v3886 = vmul.f32 %v3870, %v3870
        %v3887 = vmul.f32 %v3871, %v3871
        %v3888 = vmul.f32 %v3872, %v3872
        %v3889 = vmul.f32 %v3873, %v3873
        %v3890 = vmul.f32 %v3874, %v3874
        %v3891 = vmul.f32 %v3875, %v3875
        %v3892 = vmul.f32 %v3876, %v3876
        %v3893 = vmul.f32 %v3877, %v3877
        %v3894 = vmul.f32 %v3878, %v3878
        %v3895 = vmul.f32 %v3879, %v3879
        %v3896 = vmul.f32 %v3880, %v3880
        %v3897 = vmul.f32 %v3881, %v3881
        %v3898 = vmul.f32 %v3882, %v3882
        %v3899 = vmul.f32 %v3883, %v3883
        %v3900 = vmul.f32 %v3884, %v3884
        %v3901 = vmul.f32 %v3885, %v3885
        %3902 = vadd.xlane.f32.xlu0 %v3886
        %v3903 = vpop.xlane.xlu0 %3902
        %3904 = vadd.xlane.f32.xlu0 %v3887
        %v3905 = vpop.xlane.xlu0 %3904
        %3906 = vadd.xlane.f32.xlu0 %v3888
        %v3907 = vpop.xlane.xlu0 %3906
        %3908 = vadd.xlane.f32.xlu0 %v3889
        %v3909 = vpop.xlane.xlu0 %3908
        %3910 = vadd.xlane.f32.xlu0 %v3890
        %v3911 = vpop.xlane.xlu0 %3910
        %3912 = vadd.xlane.f32.xlu0 %v3891
        %v3913 = vpop.xlane.xlu0 %3912
        %3914 = vadd.xlane.f32.xlu0 %v3892
        %v3915 = vpop.xlane.xlu0 %3914
        %3916 = vadd.xlane.f32.xlu0 %v3893
        %v3917 = vpop.xlane.xlu0 %3916
        %3918 = vadd.xlane.f32.xlu0 %v3894
        %v3919 = vpop.xlane.xlu0 %3918
        %3920 = vadd.xlane.f32.xlu0 %v3895
        %v3921 = vpop.xlane.xlu0 %3920
        %3922 = vadd.xlane.f32.xlu0 %v3896
        %v3923 = vpop.xlane.xlu0 %3922
        %3924 = vadd.xlane.f32.xlu0 %v3897
        %v3925 = vpop.xlane.xlu0 %3924
        %3926 = vadd.xlane.f32.xlu0 %v3898
        %v3927 = vpop.xlane.xlu0 %3926
        %3928 = vadd.xlane.f32.xlu0 %v3899
        %v3929 = vpop.xlane.xlu0 %3928
        %3930 = vadd.xlane.f32.xlu0 %v3900
        %v3931 = vpop.xlane.xlu0 %3930
        %3932 = vadd.xlane.f32.xlu0 %v3901
        %v3933 = vpop.xlane.xlu0 %3932
        %v3934 = vmul.f32 %v3903, %v813
        %v3935 = vmul.f32 %v3905, %v813
        %v3936 = vmul.f32 %v3907, %v813
        %v3937 = vmul.f32 %v3909, %v813
        %v3938 = vmul.f32 %v3911, %v813
        %v3939 = vmul.f32 %v3913, %v813
        %v3940 = vmul.f32 %v3915, %v813
        %v3941 = vmul.f32 %v3917, %v813
        %v3942 = vmul.f32 %v3919, %v813
        %v3943 = vmul.f32 %v3921, %v813
        %v3944 = vmul.f32 %v3923, %v813
        %v3945 = vmul.f32 %v3925, %v813
        %v3946 = vmul.f32 %v3927, %v813
        %v3947 = vmul.f32 %v3929, %v813
        %v3948 = vmul.f32 %v3931, %v813
        %v3949 = vmul.f32 %v3933, %v813
        %v3950 = vadd.f32 %v3934, 1e-05
        %v3951 = vadd.f32 %v3935, 1e-05
        %v3952 = vadd.f32 %v3936, 1e-05
        %v3953 = vadd.f32 %v3937, 1e-05
        %v3954 = vadd.f32 %v3938, 1e-05
        %v3955 = vadd.f32 %v3939, 1e-05
        %v3956 = vadd.f32 %v3940, 1e-05
        %v3957 = vadd.f32 %v3941, 1e-05
        %v3958 = vadd.f32 %v3942, 1e-05
        %v3959 = vadd.f32 %v3943, 1e-05
        %v3960 = vadd.f32 %v3944, 1e-05
        %v3961 = vadd.f32 %v3945, 1e-05
        %v3962 = vadd.f32 %v3946, 1e-05
        %v3963 = vadd.f32 %v3947, 1e-05
        %v3964 = vadd.f32 %v3948, 1e-05
        %v3965 = vadd.f32 %v3949, 1e-05
        %v3966 = vrsqrt.pop %v3950
        %v3967 = vmul.f32 %v3966, %v3950
        %v3968 = vmul.f32 %v3967, %v3966
        %v3969 = vmul.f32 0.5, %v3968
        %v3970 = vsub.f32 1.5, %v3969
        %v3971 = vmul.f32 %v3966, %v3970
        %vm3972 = vweird.f32 %v3950
        %vm3973 = vweird.f32 %v3966
        %vm3974 = vmor %vm3972, %vm3973
        %v3975 = vsel %vm3974, %v3966, %v3971
        %v3976 = vrsqrt.pop %v3951
        %v3977 = vmul.f32 %v3976, %v3951
        %v3978 = vmul.f32 %v3977, %v3976
        %v3979 = vmul.f32 0.5, %v3978
        %v3980 = vsub.f32 1.5, %v3979
        %v3981 = vmul.f32 %v3976, %v3980
        %vm3982 = vweird.f32 %v3951
        %vm3983 = vweird.f32 %v3976
        %vm3984 = vmor %vm3982, %vm3983
        %v3985 = vsel %vm3984, %v3976, %v3981
        %v3986 = vrsqrt.pop %v3952
        %v3987 = vmul.f32 %v3986, %v3952
        %v3988 = vmul.f32 %v3987, %v3986
        %v3989 = vmul.f32 0.5, %v3988
        %v3990 = vsub.f32 1.5, %v3989
        %v3991 = vmul.f32 %v3986, %v3990
        %vm3992 = vweird.f32 %v3952
        %vm3993 = vweird.f32 %v3986
        %vm3994 = vmor %vm3992, %vm3993
        %v3995 = vsel %vm3994, %v3986, %v3991
        %v3996 = vrsqrt.pop %v3953
        %v3997 = vmul.f32 %v3996, %v3953
        %v3998 = vmul.f32 %v3997, %v3996
        %v3999 = vmul.f32 0.5, %v3998
        %v4000 = vsub.f32 1.5, %v3999
        %v4001 = vmul.f32 %v3996, %v4000
        %vm4002 = vweird.f32 %v3953
        %vm4003 = vweird.f32 %v3996
        %vm4004 = vmor %vm4002, %vm4003
        %v4005 = vsel %vm4004, %v3996, %v4001
        %v4006 = vrsqrt.pop %v3954
        %v4007 = vmul.f32 %v4006, %v3954
        %v4008 = vmul.f32 %v4007, %v4006
        %v4009 = vmul.f32 0.5, %v4008
        %v4010 = vsub.f32 1.5, %v4009
        %v4011 = vmul.f32 %v4006, %v4010
        %vm4012 = vweird.f32 %v3954
        %vm4013 = vweird.f32 %v4006
        %vm4014 = vmor %vm4012, %vm4013
        %v4015 = vsel %vm4014, %v4006, %v4011
        %v4016 = vrsqrt.pop %v3955
        %v4017 = vmul.f32 %v4016, %v3955
        %v4018 = vmul.f32 %v4017, %v4016
        %v4019 = vmul.f32 0.5, %v4018
        %v4020 = vsub.f32 1.5, %v4019
        %v4021 = vmul.f32 %v4016, %v4020
        %vm4022 = vweird.f32 %v3955
        %vm4023 = vweird.f32 %v4016
        %vm4024 = vmor %vm4022, %vm4023
        %v4025 = vsel %vm4024, %v4016, %v4021
        %v4026 = vrsqrt.pop %v3956
        %v4027 = vmul.f32 %v4026, %v3956
        %v4028 = vmul.f32 %v4027, %v4026
        %v4029 = vmul.f32 0.5, %v4028
        %v4030 = vsub.f32 1.5, %v4029
        %v4031 = vmul.f32 %v4026, %v4030
        %vm4032 = vweird.f32 %v3956
        %vm4033 = vweird.f32 %v4026
        %vm4034 = vmor %vm4032, %vm4033
        %v4035 = vsel %vm4034, %v4026, %v4031
        %v4036 = vrsqrt.pop %v3957
        %v4037 = vmul.f32 %v4036, %v3957
        %v4038 = vmul.f32 %v4037, %v4036
        %v4039 = vmul.f32 0.5, %v4038
        %v4040 = vsub.f32 1.5, %v4039
        %v4041 = vmul.f32 %v4036, %v4040
        %vm4042 = vweird.f32 %v3957
        %vm4043 = vweird.f32 %v4036
        %vm4044 = vmor %vm4042, %vm4043
        %v4045 = vsel %vm4044, %v4036, %v4041
        %v4046 = vrsqrt.pop %v3958
        %v4047 = vmul.f32 %v4046, %v3958
        %v4048 = vmul.f32 %v4047, %v4046
        %v4049 = vmul.f32 0.5, %v4048
        %v4050 = vsub.f32 1.5, %v4049
        %v4051 = vmul.f32 %v4046, %v4050
        %vm4052 = vweird.f32 %v3958
        %vm4053 = vweird.f32 %v4046
        %vm4054 = vmor %vm4052, %vm4053
        %v4055 = vsel %vm4054, %v4046, %v4051
        %v4056 = vrsqrt.pop %v3959
        %v4057 = vmul.f32 %v4056, %v3959
        %v4058 = vmul.f32 %v4057, %v4056
        %v4059 = vmul.f32 0.5, %v4058
        %v4060 = vsub.f32 1.5, %v4059
        %v4061 = vmul.f32 %v4056, %v4060
        %vm4062 = vweird.f32 %v3959
        %vm4063 = vweird.f32 %v4056
        %vm4064 = vmor %vm4062, %vm4063
        %v4065 = vsel %vm4064, %v4056, %v4061
        %v4066 = vrsqrt.pop %v3960
        %v4067 = vmul.f32 %v4066, %v3960
        %v4068 = vmul.f32 %v4067, %v4066
        %v4069 = vmul.f32 0.5, %v4068
        %v4070 = vsub.f32 1.5, %v4069
        %v4071 = vmul.f32 %v4066, %v4070
        %vm4072 = vweird.f32 %v3960
        %vm4073 = vweird.f32 %v4066
        %vm4074 = vmor %vm4072, %vm4073
        %v4075 = vsel %vm4074, %v4066, %v4071
        %v4076 = vrsqrt.pop %v3961
        %v4077 = vmul.f32 %v4076, %v3961
        %v4078 = vmul.f32 %v4077, %v4076
        %v4079 = vmul.f32 0.5, %v4078
        %v4080 = vsub.f32 1.5, %v4079
        %v4081 = vmul.f32 %v4076, %v4080
        %vm4082 = vweird.f32 %v3961
        %vm4083 = vweird.f32 %v4076
        %vm4084 = vmor %vm4082, %vm4083
        %v4085 = vsel %vm4084, %v4076, %v4081
        %v4086 = vrsqrt.pop %v3962
        %v4087 = vmul.f32 %v4086, %v3962
        %v4088 = vmul.f32 %v4087, %v4086
        %v4089 = vmul.f32 0.5, %v4088
        %v4090 = vsub.f32 1.5, %v4089
        %v4091 = vmul.f32 %v4086, %v4090
        %vm4092 = vweird.f32 %v3962
        %vm4093 = vweird.f32 %v4086
        %vm4094 = vmor %vm4092, %vm4093
        %v4095 = vsel %vm4094, %v4086, %v4091
        %v4096 = vrsqrt.pop %v3963
        %v4097 = vmul.f32 %v4096, %v3963
        %v4098 = vmul.f32 %v4097, %v4096
        %v4099 = vmul.f32 0.5, %v4098
        %v4100 = vsub.f32 1.5, %v4099
        %v4101 = vmul.f32 %v4096, %v4100
        %vm4102 = vweird.f32 %v3963
        %vm4103 = vweird.f32 %v4096
        %vm4104 = vmor %vm4102, %vm4103
        %v4105 = vsel %vm4104, %v4096, %v4101
        %v4106 = vrsqrt.pop %v3964
        %v4107 = vmul.f32 %v4106, %v3964
        %v4108 = vmul.f32 %v4107, %v4106
        %v4109 = vmul.f32 0.5, %v4108
        %v4110 = vsub.f32 1.5, %v4109
        %v4111 = vmul.f32 %v4106, %v4110
        %vm4112 = vweird.f32 %v3964
        %vm4113 = vweird.f32 %v4106
        %vm4114 = vmor %vm4112, %vm4113
        %v4115 = vsel %vm4114, %v4106, %v4111
        %v4116 = vrsqrt.pop %v3965
        %v4117 = vmul.f32 %v4116, %v3965
        %v4118 = vmul.f32 %v4117, %v4116
        %v4119 = vmul.f32 0.5, %v4118
        %v4120 = vsub.f32 1.5, %v4119
        %v4121 = vmul.f32 %v4116, %v4120
        %vm4122 = vweird.f32 %v3965
        %vm4123 = vweird.f32 %v4116
        %vm4124 = vmor %vm4122, %vm4123
        %v4125 = vsel %vm4124, %v4116, %v4121
        %v4126 = vmul.f32 %v3870, %v3975
        %v4127 = vmul.f32 %v3871, %v3985
        %v4128 = vmul.f32 %v3872, %v3995
        %v4129 = vmul.f32 %v3873, %v4005
        %v4130 = vmul.f32 %v3874, %v4015
        %v4131 = vmul.f32 %v3875, %v4025
        %v4132 = vmul.f32 %v3876, %v4035
        %v4133 = vmul.f32 %v3877, %v4045
        %v4134 = vmul.f32 %v3878, %v4055
        %v4135 = vmul.f32 %v3879, %v4065
        %v4136 = vmul.f32 %v3880, %v4075
        %v4137 = vmul.f32 %v3881, %v4085
        %v4138 = vmul.f32 %v3882, %v4095
        %v4139 = vmul.f32 %v3883, %v4105
        %v4140 = vmul.f32 %v3884, %v4115
        %v4141 = vmul.f32 %v3885, %v4125
        %v4143 = vperm.slane %v3820, 0
        %v4145 = vmul.f32 %v4126, %v4143
        %v4146 = vmul.f32 %v4127, %v4143
        %v4147 = vmul.f32 %v4128, %v4143
        %v4148 = vmul.f32 %v4129, %v4143
        %v4149 = vmul.f32 %v4130, %v4143
        %v4150 = vmul.f32 %v4131, %v4143
        %v4151 = vmul.f32 %v4132, %v4143
        %v4152 = vmul.f32 %v4133, %v4143
        %v4153 = vmul.f32 %v4134, %v4143
        %v4154 = vmul.f32 %v4135, %v4143
        %v4155 = vmul.f32 %v4136, %v4143
        %v4156 = vmul.f32 %v4137, %v4143
        %v4157 = vmul.f32 %v4138, %v4143
        %v4158 = vmul.f32 %v4139, %v4143
        %v4159 = vmul.f32 %v4140, %v4143
        %v4160 = vmul.f32 %v4141, %v4143
        %v4162 = vperm.slane %v3821, 0
        %v4164 = vadd.f32 %v4145, %v4162
        %v4165 = vadd.f32 %v4146, %v4162
        %v4166 = vadd.f32 %v4147, %v4162
        %v4167 = vadd.f32 %v4148, %v4162
        %v4168 = vadd.f32 %v4149, %v4162
        %v4169 = vadd.f32 %v4150, %v4162
        %v4170 = vadd.f32 %v4151, %v4162
        %v4171 = vadd.f32 %v4152, %v4162
        %v4172 = vadd.f32 %v4153, %v4162
        %v4173 = vadd.f32 %v4154, %v4162
        %v4174 = vadd.f32 %v4155, %v4162
        %v4175 = vadd.f32 %v4156, %v4162
        %v4176 = vadd.f32 %v4157, %v4162
        %v4177 = vadd.f32 %v4158, %v4162
        %v4178 = vadd.f32 %v4159, %v4162
        %v4179 = vadd.f32 %v4160, %v4162
        %v4180 = vpack.c.bf16 %v4165, %v4164
        %v4181 = vpack.c.bf16 %v4167, %v4166
        %v4182 = vpack.c.bf16 %v4169, %v4168
        %v4183 = vpack.c.bf16 %v4171, %v4170
        %v4184 = vpack.c.bf16 %v4173, %v4172
        %v4185 = vpack.c.bf16 %v4175, %v4174
        %v4186 = vpack.c.bf16 %v4177, %v4176
        %v4187 = vpack.c.bf16 %v4179, %v4178
        %v4188 = vld [vmem:[%s683] sm:$0xff]
        %v4189 = vld [vmem:[%s683 + $0x8] sm:$0xff]
        %v4190 = vld [vmem:[%s683 + $0x10] sm:$0xff]
        %v4191 = vld [vmem:[%s683 + $0x18] sm:$0xff]
        %v4192 = vld [vmem:[%s683 + $0x20] sm:$0xff]
        %v4193 = vld [vmem:[%s683 + $0x28] sm:$0xff]
        %v4194 = vld [vmem:[%s683 + $0x30] sm:$0xff]
        %v4195 = vld [vmem:[%s683 + $0x38] sm:$0xff]
        %v4196 = vld [vmem:[%s683 + $0x40] sm:$0xff]
        %v4197 = vld [vmem:[%s683 + $0x48] sm:$0xff]
        %v4198 = vld [vmem:[%s683 + $0x50] sm:$0xff]
        %v4199 = vld [vmem:[%s683 + $0x58] sm:$0xff]
        %v4200 = vld [vmem:[%s683 + $0x60] sm:$0xff]
        %v4201 = vld [vmem:[%s683 + $0x68] sm:$0xff]
        %v4202 = vld [vmem:[%s683 + $0x70] sm:$0xff]
        %v4203 = vld [vmem:[%s683 + $0x78] sm:$0xff]
        %v4204 = vld [vmem:[%s683 + $0x80] sm:$0xff]
        %v4205 = vld [vmem:[%s683 + $0x88] sm:$0xff]
        %v4206 = vld [vmem:[%s683 + $0x90] sm:$0xff]
        %v4207 = vld [vmem:[%s683 + $0x98] sm:$0xff]
        %v4208 = vld [vmem:[%s683 + $0xa0] sm:$0xff]
        %v4209 = vld [vmem:[%s683 + $0xa8] sm:$0xff]
        %v4210 = vld [vmem:[%s683 + $0xb0] sm:$0xff]
        %v4211 = vld [vmem:[%s683 + $0xb8] sm:$0xff]
        %v4212 = vld [vmem:[%s683 + $0xc0] sm:$0xff]
        %v4213 = vld [vmem:[%s683 + $0xc8] sm:$0xff]
        %v4214 = vld [vmem:[%s683 + $0xd0] sm:$0xff]
        %v4215 = vld [vmem:[%s683 + $0xd8] sm:$0xff]
        %v4216 = vld [vmem:[%s683 + $0xe0] sm:$0xff]
        %v4217 = vld [vmem:[%s683 + $0xe8] sm:$0xff]
        %v4218 = vld [vmem:[%s683 + $0xf0] sm:$0xff]
        %v4219 = vld [vmem:[%s683 + $0xf8] sm:$0xff]
        %v4220 = vld [vmem:[%s687] sm:$0xf]
        %v4222 = vperm.slane %v4220, 0
        %v4223 = vperm.slane %v4220, 1
        %v4224 = vperm.slane %v4220, 2
        %v4225 = vperm.slane %v4220, 3
        %v4262 = vunpack.c.l.b16 %v4188
        %v4263 = vunpack.c.h.b16 %v4188
        %v4264 = vunpack.c.l.b16 %v4189
        %v4265 = vunpack.c.h.b16 %v4189
        %v4266 = vunpack.c.l.b16 %v4190
        %v4267 = vunpack.c.h.b16 %v4190
        %v4268 = vunpack.c.l.b16 %v4191
        %v4269 = vunpack.c.h.b16 %v4191
        %v4270 = vunpack.c.l.b16 %v4192
        %v4271 = vunpack.c.h.b16 %v4192
        %v4272 = vunpack.c.l.b16 %v4193
        %v4273 = vunpack.c.h.b16 %v4193
        %v4274 = vunpack.c.l.b16 %v4194
        %v4275 = vunpack.c.h.b16 %v4194
        %v4276 = vunpack.c.l.b16 %v4195
        %v4277 = vunpack.c.h.b16 %v4195
        %v4278 = vunpack.c.l.b16 %v4196
        %v4279 = vunpack.c.h.b16 %v4196
        %v4280 = vunpack.c.l.b16 %v4197
        %v4281 = vunpack.c.h.b16 %v4197
        %v4282 = vunpack.c.l.b16 %v4198
        %v4283 = vunpack.c.h.b16 %v4198
        %v4284 = vunpack.c.l.b16 %v4199
        %v4285 = vunpack.c.h.b16 %v4199
        %v4286 = vunpack.c.l.b16 %v4200
        %v4287 = vunpack.c.h.b16 %v4200
        %v4288 = vunpack.c.l.b16 %v4201
        %v4289 = vunpack.c.h.b16 %v4201
        %v4290 = vunpack.c.l.b16 %v4202
        %v4291 = vunpack.c.h.b16 %v4202
        %v4292 = vunpack.c.l.b16 %v4203
        %v4293 = vunpack.c.h.b16 %v4203
        %v4294 = vunpack.c.l.b16 %v4204
        %v4295 = vunpack.c.h.b16 %v4204
        %v4296 = vunpack.c.l.b16 %v4205
        %v4297 = vunpack.c.h.b16 %v4205
        %v4298 = vunpack.c.l.b16 %v4206
        %v4299 = vunpack.c.h.b16 %v4206
        %v4300 = vunpack.c.l.b16 %v4207
        %v4301 = vunpack.c.h.b16 %v4207
        %v4302 = vunpack.c.l.b16 %v4208
        %v4303 = vunpack.c.h.b16 %v4208
        %v4304 = vunpack.c.l.b16 %v4209
        %v4305 = vunpack.c.h.b16 %v4209
        %v4306 = vunpack.c.l.b16 %v4210
        %v4307 = vunpack.c.h.b16 %v4210
        %v4308 = vunpack.c.l.b16 %v4211
        %v4309 = vunpack.c.h.b16 %v4211
        %v4310 = vunpack.c.l.b16 %v4212
        %v4311 = vunpack.c.h.b16 %v4212
        %v4312 = vunpack.c.l.b16 %v4213
        %v4313 = vunpack.c.h.b16 %v4213
        %v4314 = vunpack.c.l.b16 %v4214
        %v4315 = vunpack.c.h.b16 %v4214
        %v4316 = vunpack.c.l.b16 %v4215
        %v4317 = vunpack.c.h.b16 %v4215
        %v4318 = vunpack.c.l.b16 %v4216
        %v4319 = vunpack.c.h.b16 %v4216
        %v4320 = vunpack.c.l.b16 %v4217
        %v4321 = vunpack.c.h.b16 %v4217
        %v4322 = vunpack.c.l.b16 %v4218
        %v4323 = vunpack.c.h.b16 %v4218
        %v4324 = vunpack.c.l.b16 %v4219
        %v4325 = vunpack.c.h.b16 %v4219
        %v4326 = vpack.c.b16 %v4266, %v4262
        %v4327 = vpack.c.b16 %v4267, %v4263
        %v4328 = vpack.c.b16 %v4268, %v4264
        %v4329 = vpack.c.b16 %v4269, %v4265
        %v4330 = vpack.c.b16 %v4274, %v4270
        %v4331 = vpack.c.b16 %v4275, %v4271
        %v4332 = vpack.c.b16 %v4276, %v4272
        %v4333 = vpack.c.b16 %v4277, %v4273
        %v4334 = vpack.c.b16 %v4282, %v4278
        %v4335 = vpack.c.b16 %v4283, %v4279
        %v4336 = vpack.c.b16 %v4284, %v4280
        %v4337 = vpack.c.b16 %v4285, %v4281
        %v4338 = vpack.c.b16 %v4290, %v4286
        %v4339 = vpack.c.b16 %v4291, %v4287
        %v4340 = vpack.c.b16 %v4292, %v4288
        %v4341 = vpack.c.b16 %v4293, %v4289
        %v4342 = vpack.c.b16 %v4298, %v4294
        %v4343 = vpack.c.b16 %v4299, %v4295
        %v4344 = vpack.c.b16 %v4300, %v4296
        %v4345 = vpack.c.b16 %v4301, %v4297
        %v4346 = vpack.c.b16 %v4306, %v4302
        %v4347 = vpack.c.b16 %v4307, %v4303
        %v4348 = vpack.c.b16 %v4308, %v4304
        %v4349 = vpack.c.b16 %v4309, %v4305
        %v4350 = vpack.c.b16 %v4314, %v4310
        %v4351 = vpack.c.b16 %v4315, %v4311
        %v4352 = vpack.c.b16 %v4316, %v4312
        %v4353 = vpack.c.b16 %v4317, %v4313
        %v4354 = vpack.c.b16 %v4322, %v4318
        %v4355 = vpack.c.b16 %v4323, %v4319
        %v4356 = vpack.c.b16 %v4324, %v4320
        %v4357 = vpack.c.b16 %v4325, %v4321
        %4390 = vmatpush.bf16.msra.mxu0 %v4354
        %4391 = vmatpush.bf16.msra.mxu0 %v4350
        %4392 = vmatpush.bf16.msra.mxu0 %v4346
        %4393 = vmatpush.bf16.msra.mxu0 %v4342
        %4394 = vmatpush.bf16.msra.mxu0 %v4338
        %4395 = vmatpush.bf16.msra.mxu0 %v4334
        %4396 = vmatpush.bf16.msra.mxu0 %v4330
        %4397 = vmatpush.bf16.msra.mxu0 %v4326
        %4398 = vmatmul.bf16.gmra.mxu0 %v4180
        %v4399 = vpop.f32.mrf.mxu0
        %v4400 = vadd.f32 %v4222, %v4399
        %v4401 = vpop.f32.mrf.mxu0
        %v4402 = vadd.f32 %v4222, %v4401
        %4403 = vmatmul.bf16.gmra.mxu0 %v4181
        %v4404 = vpop.f32.mrf.mxu0
        %v4405 = vadd.f32 %v4222, %v4404
        %v4406 = vpop.f32.mrf.mxu0
        %v4407 = vadd.f32 %v4222, %v4406
        %4408 = vmatmul.bf16.gmra.mxu0 %v4182
        %v4409 = vpop.f32.mrf.mxu0
        %v4410 = vadd.f32 %v4222, %v4409
        %v4411 = vpop.f32.mrf.mxu0
        %v4412 = vadd.f32 %v4222, %v4411
        %4413 = vmatmul.bf16.gmra.mxu0 %v4183
        %v4414 = vpop.f32.mrf.mxu0
        %v4415 = vadd.f32 %v4222, %v4414
        %v4416 = vpop.f32.mrf.mxu0
        %v4417 = vadd.f32 %v4222, %v4416
        %4418 = vmatmul.bf16.gmra.mxu0 %v4184
        %v4419 = vpop.f32.mrf.mxu0
        %v4420 = vadd.f32 %v4222, %v4419
        %v4421 = vpop.f32.mrf.mxu0
        %v4422 = vadd.f32 %v4222, %v4421
        %4423 = vmatmul.bf16.gmra.mxu0 %v4185
        %v4424 = vpop.f32.mrf.mxu0
        %v4425 = vadd.f32 %v4222, %v4424
        %v4426 = vpop.f32.mrf.mxu0
        %v4427 = vadd.f32 %v4222, %v4426
        %4428 = vmatmul.bf16.gmra.mxu0 %v4186
        %v4429 = vpop.f32.mrf.mxu0
        %v4430 = vadd.f32 %v4222, %v4429
        %v4431 = vpop.f32.mrf.mxu0
        %v4432 = vadd.f32 %v4222, %v4431
        %4433 = vmatmul.bf16.gmra.mxu0 %v4187
        %v4434 = vpop.f32.mrf.mxu0
        %v4435 = vadd.f32 %v4222, %v4434
        %v4436 = vpop.f32.mrf.mxu0
        %v4437 = vadd.f32 %v4222, %v4436
        %4438 = vdwg.mxu0
        %4439 = vmatpush.bf16.msra.mxu0 %v4355
        %4440 = vmatpush.bf16.msra.mxu0 %v4351
        %4441 = vmatpush.bf16.msra.mxu0 %v4347
        %4442 = vmatpush.bf16.msra.mxu0 %v4343
        %4443 = vmatpush.bf16.msra.mxu0 %v4339
        %4444 = vmatpush.bf16.msra.mxu0 %v4335
        %4445 = vmatpush.bf16.msra.mxu0 %v4331
        %4446 = vmatpush.bf16.msra.mxu0 %v4327
        %4447 = vmatmul.bf16.gmra.mxu0 %v4180
        %v4448 = vpop.f32.mrf.mxu0
        %v4449 = vadd.f32 %v4223, %v4448
        %v4450 = vpop.f32.mrf.mxu0
        %v4451 = vadd.f32 %v4223, %v4450
        %4452 = vmatmul.bf16.gmra.mxu0 %v4181
        %v4453 = vpop.f32.mrf.mxu0
        %v4454 = vadd.f32 %v4223, %v4453
        %v4455 = vpop.f32.mrf.mxu0
        %v4456 = vadd.f32 %v4223, %v4455
        %4457 = vmatmul.bf16.gmra.mxu0 %v4182
        %v4458 = vpop.f32.mrf.mxu0
        %v4459 = vadd.f32 %v4223, %v4458
        %v4460 = vpop.f32.mrf.mxu0
        %v4461 = vadd.f32 %v4223, %v4460
        %4462 = vmatmul.bf16.gmra.mxu0 %v4183
        %v4463 = vpop.f32.mrf.mxu0
        %v4464 = vadd.f32 %v4223, %v4463
        %v4465 = vpop.f32.mrf.mxu0
        %v4466 = vadd.f32 %v4223, %v4465
        %4467 = vmatmul.bf16.gmra.mxu0 %v4184
        %v4468 = vpop.f32.mrf.mxu0
        %v4469 = vadd.f32 %v4223, %v4468
        %v4470 = vpop.f32.mrf.mxu0
        %v4471 = vadd.f32 %v4223, %v4470
        %4472 = vmatmul.bf16.gmra.mxu0 %v4185
        %v4473 = vpop.f32.mrf.mxu0
        %v4474 = vadd.f32 %v4223, %v4473
        %v4475 = vpop.f32.mrf.mxu0
        %v4476 = vadd.f32 %v4223, %v4475
        %4477 = vmatmul.bf16.gmra.mxu0 %v4186
        %v4478 = vpop.f32.mrf.mxu0
        %v4479 = vadd.f32 %v4223, %v4478
        %v4480 = vpop.f32.mrf.mxu0
        %v4481 = vadd.f32 %v4223, %v4480
        %4482 = vmatmul.bf16.gmra.mxu0 %v4187
        %v4483 = vpop.f32.mrf.mxu0
        %v4484 = vadd.f32 %v4223, %v4483
        %v4485 = vpop.f32.mrf.mxu0
        %v4486 = vadd.f32 %v4223, %v4485
        %4487 = vdwg.mxu0
        %4488 = vmatpush.bf16.msra.mxu0 %v4356
        %4489 = vmatpush.bf16.msra.mxu0 %v4352
        %4490 = vmatpush.bf16.msra.mxu0 %v4348
        %4491 = vmatpush.bf16.msra.mxu0 %v4344
        %4492 = vmatpush.bf16.msra.mxu0 %v4340
        %4493 = vmatpush.bf16.msra.mxu0 %v4336
        %4494 = vmatpush.bf16.msra.mxu0 %v4332
        %4495 = vmatpush.bf16.msra.mxu0 %v4328
        %4496 = vmatmul.bf16.gmra.mxu0 %v4180
        %v4497 = vpop.f32.mrf.mxu0
        %v4498 = vadd.f32 %v4224, %v4497
        %v4499 = vpop.f32.mrf.mxu0
        %v4500 = vadd.f32 %v4224, %v4499
        %4501 = vmatmul.bf16.gmra.mxu0 %v4181
        %v4502 = vpop.f32.mrf.mxu0
        %v4503 = vadd.f32 %v4224, %v4502
        %v4504 = vpop.f32.mrf.mxu0
        %v4505 = vadd.f32 %v4224, %v4504
        %4506 = vmatmul.bf16.gmra.mxu0 %v4182
        %v4507 = vpop.f32.mrf.mxu0
        %v4508 = vadd.f32 %v4224, %v4507
        %v4509 = vpop.f32.mrf.mxu0
        %v4510 = vadd.f32 %v4224, %v4509
        %4511 = vmatmul.bf16.gmra.mxu0 %v4183
        %v4512 = vpop.f32.mrf.mxu0
        %v4513 = vadd.f32 %v4224, %v4512
        %v4514 = vpop.f32.mrf.mxu0
        %v4515 = vadd.f32 %v4224, %v4514
        %4516 = vmatmul.bf16.gmra.mxu0 %v4184
        %v4517 = vpop.f32.mrf.mxu0
        %v4518 = vadd.f32 %v4224, %v4517
        %v4519 = vpop.f32.mrf.mxu0
        %v4520 = vadd.f32 %v4224, %v4519
        %4521 = vmatmul.bf16.gmra.mxu0 %v4185
        %v4522 = vpop.f32.mrf.mxu0
        %v4523 = vadd.f32 %v4224, %v4522
        %v4524 = vpop.f32.mrf.mxu0
        %v4525 = vadd.f32 %v4224, %v4524
        %4526 = vmatmul.bf16.gmra.mxu0 %v4186
        %v4527 = vpop.f32.mrf.mxu0
        %v4528 = vadd.f32 %v4224, %v4527
        %v4529 = vpop.f32.mrf.mxu0
        %v4530 = vadd.f32 %v4224, %v4529
        %4531 = vmatmul.bf16.gmra.mxu0 %v4187
        %v4532 = vpop.f32.mrf.mxu0
        %v4533 = vadd.f32 %v4224, %v4532
        %v4534 = vpop.f32.mrf.mxu0
        %v4535 = vadd.f32 %v4224, %v4534
        %4536 = vdwg.mxu0
        %4537 = vmatpush.bf16.msra.mxu0 %v4357
        %4538 = vmatpush.bf16.msra.mxu0 %v4353
        %4539 = vmatpush.bf16.msra.mxu0 %v4349
        %4540 = vmatpush.bf16.msra.mxu0 %v4345
        %4541 = vmatpush.bf16.msra.mxu0 %v4341
        %4542 = vmatpush.bf16.msra.mxu0 %v4337
        %4543 = vmatpush.bf16.msra.mxu0 %v4333
        %4544 = vmatpush.bf16.msra.mxu0 %v4329
        %4545 = vmatmul.bf16.gmra.mxu0 %v4180
        %v4546 = vpop.f32.mrf.mxu0
        %v4547 = vadd.f32 %v4225, %v4546
        %v4548 = vpop.f32.mrf.mxu0
        %v4549 = vadd.f32 %v4225, %v4548
        %4550 = vmatmul.bf16.gmra.mxu0 %v4181
        %v4551 = vpop.f32.mrf.mxu0
        %v4552 = vadd.f32 %v4225, %v4551
        %v4553 = vpop.f32.mrf.mxu0
        %v4554 = vadd.f32 %v4225, %v4553
        %4555 = vmatmul.bf16.gmra.mxu0 %v4182
        %v4556 = vpop.f32.mrf.mxu0
        %v4557 = vadd.f32 %v4225, %v4556
        %v4558 = vpop.f32.mrf.mxu0
        %v4559 = vadd.f32 %v4225, %v4558
        %4560 = vmatmul.bf16.gmra.mxu0 %v4183
        %v4561 = vpop.f32.mrf.mxu0
        %v4562 = vadd.f32 %v4225, %v4561
        %v4563 = vpop.f32.mrf.mxu0
        %v4564 = vadd.f32 %v4225, %v4563
        %4565 = vmatmul.bf16.gmra.mxu0 %v4184
        %v4566 = vpop.f32.mrf.mxu0
        %v4567 = vadd.f32 %v4225, %v4566
        %v4568 = vpop.f32.mrf.mxu0
        %v4569 = vadd.f32 %v4225, %v4568
        %4570 = vmatmul.bf16.gmra.mxu0 %v4185
        %v4571 = vpop.f32.mrf.mxu0
        %v4572 = vadd.f32 %v4225, %v4571
        %v4573 = vpop.f32.mrf.mxu0
        %v4574 = vadd.f32 %v4225, %v4573
        %4575 = vmatmul.bf16.gmra.mxu0 %v4186
        %v4576 = vpop.f32.mrf.mxu0
        %v4577 = vadd.f32 %v4225, %v4576
        %v4578 = vpop.f32.mrf.mxu0
        %v4579 = vadd.f32 %v4225, %v4578
        %4580 = vmatmul.bf16.gmra.mxu0 %v4187
        %v4581 = vpop.f32.mrf.mxu0
        %v4582 = vadd.f32 %v4225, %v4581
        %v4583 = vpop.f32.mrf.mxu0
        %v4584 = vadd.f32 %v4225, %v4583
        %4585 = vdwg.mxu0
        %v4586 = vmax.f32 %v4400, 0.0
        %v4587 = vmax.f32 %v4449, 0.0
        %v4588 = vmax.f32 %v4498, 0.0
        %v4589 = vmax.f32 %v4547, 0.0
        %v4590 = vmax.f32 %v4402, 0.0
        %v4591 = vmax.f32 %v4451, 0.0
        %v4592 = vmax.f32 %v4500, 0.0
        %v4593 = vmax.f32 %v4549, 0.0
        %v4594 = vmax.f32 %v4405, 0.0
        %v4595 = vmax.f32 %v4454, 0.0
        %v4596 = vmax.f32 %v4503, 0.0
        %v4597 = vmax.f32 %v4552, 0.0
        %v4598 = vmax.f32 %v4407, 0.0
        %v4599 = vmax.f32 %v4456, 0.0
        %v4600 = vmax.f32 %v4505, 0.0
        %v4601 = vmax.f32 %v4554, 0.0
        %v4602 = vmax.f32 %v4410, 0.0
        %v4603 = vmax.f32 %v4459, 0.0
        %v4604 = vmax.f32 %v4508, 0.0
        %v4605 = vmax.f32 %v4557, 0.0
        %v4606 = vmax.f32 %v4412, 0.0
        %v4607 = vmax.f32 %v4461, 0.0
        %v4608 = vmax.f32 %v4510, 0.0
        %v4609 = vmax.f32 %v4559, 0.0
        %v4610 = vmax.f32 %v4415, 0.0
        %v4611 = vmax.f32 %v4464, 0.0
        %v4612 = vmax.f32 %v4513, 0.0
        %v4613 = vmax.f32 %v4562, 0.0
        %v4614 = vmax.f32 %v4417, 0.0
        %v4615 = vmax.f32 %v4466, 0.0
        %v4616 = vmax.f32 %v4515, 0.0
        %v4617 = vmax.f32 %v4564, 0.0
        %v4618 = vmax.f32 %v4420, 0.0
        %v4619 = vmax.f32 %v4469, 0.0
        %v4620 = vmax.f32 %v4518, 0.0
        %v4621 = vmax.f32 %v4567, 0.0
        %v4622 = vmax.f32 %v4422, 0.0
        %v4623 = vmax.f32 %v4471, 0.0
        %v4624 = vmax.f32 %v4520, 0.0
        %v4625 = vmax.f32 %v4569, 0.0
        %v4626 = vmax.f32 %v4425, 0.0
        %v4627 = vmax.f32 %v4474, 0.0
        %v4628 = vmax.f32 %v4523, 0.0
        %v4629 = vmax.f32 %v4572, 0.0
        %v4630 = vmax.f32 %v4427, 0.0
        %v4631 = vmax.f32 %v4476, 0.0
        %v4632 = vmax.f32 %v4525, 0.0
        %v4633 = vmax.f32 %v4574, 0.0
        %v4634 = vmax.f32 %v4430, 0.0
        %v4635 = vmax.f32 %v4479, 0.0
        %v4636 = vmax.f32 %v4528, 0.0
        %v4637 = vmax.f32 %v4577, 0.0
        %v4638 = vmax.f32 %v4432, 0.0
        %v4639 = vmax.f32 %v4481, 0.0
        %v4640 = vmax.f32 %v4530, 0.0
        %v4641 = vmax.f32 %v4579, 0.0
        %v4642 = vmax.f32 %v4435, 0.0
        %v4643 = vmax.f32 %v4484, 0.0
        %v4644 = vmax.f32 %v4533, 0.0
        %v4645 = vmax.f32 %v4582, 0.0
        %v4646 = vmax.f32 %v4437, 0.0
        %v4647 = vmax.f32 %v4486, 0.0
        %v4648 = vmax.f32 %v4535, 0.0
        %v4649 = vmax.f32 %v4584, 0.0
        %v4650 = vpack.c.bf16 %v4590, %v4586
        %v4651 = vpack.c.bf16 %v4591, %v4587
        %v4652 = vpack.c.bf16 %v4592, %v4588
        %v4653 = vpack.c.bf16 %v4593, %v4589
        %v4654 = vpack.c.bf16 %v4598, %v4594
        %v4655 = vpack.c.bf16 %v4599, %v4595
        %v4656 = vpack.c.bf16 %v4600, %v4596
        %v4657 = vpack.c.bf16 %v4601, %v4597
        %v4658 = vpack.c.bf16 %v4606, %v4602
        %v4659 = vpack.c.bf16 %v4607, %v4603
        %v4660 = vpack.c.bf16 %v4608, %v4604
        %v4661 = vpack.c.bf16 %v4609, %v4605
        %v4662 = vpack.c.bf16 %v4614, %v4610
        %v4663 = vpack.c.bf16 %v4615, %v4611
        %v4664 = vpack.c.bf16 %v4616, %v4612
        %v4665 = vpack.c.bf16 %v4617, %v4613
        %v4666 = vpack.c.bf16 %v4622, %v4618
        %v4667 = vpack.c.bf16 %v4623, %v4619
        %v4668 = vpack.c.bf16 %v4624, %v4620
        %v4669 = vpack.c.bf16 %v4625, %v4621
        %v4670 = vpack.c.bf16 %v4630, %v4626
        %v4671 = vpack.c.bf16 %v4631, %v4627
        %v4672 = vpack.c.bf16 %v4632, %v4628
        %v4673 = vpack.c.bf16 %v4633, %v4629
        %v4674 = vpack.c.bf16 %v4638, %v4634
        %v4675 = vpack.c.bf16 %v4639, %v4635
        %v4676 = vpack.c.bf16 %v4640, %v4636
        %v4677 = vpack.c.bf16 %v4641, %v4637
        %v4678 = vpack.c.bf16 %v4646, %v4642
        %v4679 = vpack.c.bf16 %v4647, %v4643
        %v4680 = vpack.c.bf16 %v4648, %v4644
        %v4681 = vpack.c.bf16 %v4649, %v4645
        %v4682 = vld [vmem:[%s692] sm:$0xf]
        %v4683 = vld [vmem:[%s692 + $0x4] sm:$0xf]
        %v4684 = vld [vmem:[%s692 + $0x8] sm:$0xf]
        %v4685 = vld [vmem:[%s692 + $0xc] sm:$0xf]
        %v4686 = vld [vmem:[%s692 + $0x10] sm:$0xf]
        %v4687 = vld [vmem:[%s692 + $0x14] sm:$0xf]
        %v4688 = vld [vmem:[%s692 + $0x18] sm:$0xf]
        %v4689 = vld [vmem:[%s692 + $0x1c] sm:$0xf]
        %v4690 = vld [vmem:[%s692 + $0x20] sm:$0xf]
        %v4691 = vld [vmem:[%s692 + $0x24] sm:$0xf]
        %v4692 = vld [vmem:[%s692 + $0x28] sm:$0xf]
        %v4693 = vld [vmem:[%s692 + $0x2c] sm:$0xf]
        %v4694 = vld [vmem:[%s692 + $0x30] sm:$0xf]
        %v4695 = vld [vmem:[%s692 + $0x34] sm:$0xf]
        %v4696 = vld [vmem:[%s692 + $0x38] sm:$0xf]
        %v4697 = vld [vmem:[%s692 + $0x3c] sm:$0xf]
        %v4698 = vld [vmem:[%s692 + $0x40] sm:$0xf]
        %v4699 = vld [vmem:[%s692 + $0x44] sm:$0xf]
        %v4700 = vld [vmem:[%s692 + $0x48] sm:$0xf]
        %v4701 = vld [vmem:[%s692 + $0x4c] sm:$0xf]
        %v4702 = vld [vmem:[%s692 + $0x50] sm:$0xf]
        %v4703 = vld [vmem:[%s692 + $0x54] sm:$0xf]
        %v4704 = vld [vmem:[%s692 + $0x58] sm:$0xf]
        %v4705 = vld [vmem:[%s692 + $0x5c] sm:$0xf]
        %v4706 = vld [vmem:[%s692 + $0x60] sm:$0xf]
        %v4707 = vld [vmem:[%s692 + $0x64] sm:$0xf]
        %v4708 = vld [vmem:[%s692 + $0x68] sm:$0xf]
        %v4709 = vld [vmem:[%s692 + $0x6c] sm:$0xf]
        %v4710 = vld [vmem:[%s692 + $0x70] sm:$0xf]
        %v4711 = vld [vmem:[%s692 + $0x74] sm:$0xf]
        %v4712 = vld [vmem:[%s692 + $0x78] sm:$0xf]
        %v4713 = vld [vmem:[%s692 + $0x7c] sm:$0xf]
        %v4714 = vld [vmem:[%s692 + $0x80] sm:$0xf]
        %v4715 = vld [vmem:[%s692 + $0x84] sm:$0xf]
        %v4716 = vld [vmem:[%s692 + $0x88] sm:$0xf]
        %v4717 = vld [vmem:[%s692 + $0x8c] sm:$0xf]
        %v4718 = vld [vmem:[%s692 + $0x90] sm:$0xf]
        %v4719 = vld [vmem:[%s692 + $0x94] sm:$0xf]
        %v4720 = vld [vmem:[%s692 + $0x98] sm:$0xf]
        %v4721 = vld [vmem:[%s692 + $0x9c] sm:$0xf]
        %v4722 = vld [vmem:[%s692 + $0xa0] sm:$0xf]
        %v4723 = vld [vmem:[%s692 + $0xa4] sm:$0xf]
        %v4724 = vld [vmem:[%s692 + $0xa8] sm:$0xf]
        %v4725 = vld [vmem:[%s692 + $0xac] sm:$0xf]
        %v4726 = vld [vmem:[%s692 + $0xb0] sm:$0xf]
        %v4727 = vld [vmem:[%s692 + $0xb4] sm:$0xf]
        %v4728 = vld [vmem:[%s692 + $0xb8] sm:$0xf]
        %v4729 = vld [vmem:[%s692 + $0xbc] sm:$0xf]
        %v4730 = vld [vmem:[%s692 + $0xc0] sm:$0xf]
        %v4731 = vld [vmem:[%s692 + $0xc4] sm:$0xf]
        %v4732 = vld [vmem:[%s692 + $0xc8] sm:$0xf]
        %v4733 = vld [vmem:[%s692 + $0xcc] sm:$0xf]
        %v4734 = vld [vmem:[%s692 + $0xd0] sm:$0xf]
        %v4735 = vld [vmem:[%s692 + $0xd4] sm:$0xf]
        %v4736 = vld [vmem:[%s692 + $0xd8] sm:$0xf]
        %v4737 = vld [vmem:[%s692 + $0xdc] sm:$0xf]
        %v4738 = vld [vmem:[%s692 + $0xe0] sm:$0xf]
        %v4739 = vld [vmem:[%s692 + $0xe4] sm:$0xf]
        %v4740 = vld [vmem:[%s692 + $0xe8] sm:$0xf]
        %v4741 = vld [vmem:[%s692 + $0xec] sm:$0xf]
        %v4742 = vld [vmem:[%s692 + $0xf0] sm:$0xf]
        %v4743 = vld [vmem:[%s692 + $0xf4] sm:$0xf]
        %v4744 = vld [vmem:[%s692 + $0xf8] sm:$0xf]
        %v4745 = vld [vmem:[%s692 + $0xfc] sm:$0xf]
        %v4746 = vld [vmem:[%s695] sm:$0x1]
        %v4748 = vperm.slane %v4746, 0
        %v4814 = vunpack.c.l.b16 %v4682
        %v4815 = vunpack.c.l.b16 %v4683
        %v4816 = vunpack.c.l.b16 %v4684
        %v4817 = vunpack.c.l.b16 %v4685
        %v4818 = vunpack.c.l.b16 %v4686
        %v4819 = vunpack.c.l.b16 %v4687
        %v4820 = vunpack.c.l.b16 %v4688
        %v4821 = vunpack.c.l.b16 %v4689
        %v4822 = vunpack.c.l.b16 %v4690
        %v4823 = vunpack.c.l.b16 %v4691
        %v4824 = vunpack.c.l.b16 %v4692
        %v4825 = vunpack.c.l.b16 %v4693
        %v4826 = vunpack.c.l.b16 %v4694
        %v4827 = vunpack.c.l.b16 %v4695
        %v4828 = vunpack.c.l.b16 %v4696
        %v4829 = vunpack.c.l.b16 %v4697
        %v4830 = vunpack.c.l.b16 %v4698
        %v4831 = vunpack.c.l.b16 %v4699
        %v4832 = vunpack.c.l.b16 %v4700
        %v4833 = vunpack.c.l.b16 %v4701
        %v4834 = vunpack.c.l.b16 %v4702
        %v4835 = vunpack.c.l.b16 %v4703
        %v4836 = vunpack.c.l.b16 %v4704
        %v4837 = vunpack.c.l.b16 %v4705
        %v4838 = vunpack.c.l.b16 %v4706
        %v4839 = vunpack.c.l.b16 %v4707
        %v4840 = vunpack.c.l.b16 %v4708
        %v4841 = vunpack.c.l.b16 %v4709
        %v4842 = vunpack.c.l.b16 %v4710
        %v4843 = vunpack.c.l.b16 %v4711
        %v4844 = vunpack.c.l.b16 %v4712
        %v4845 = vunpack.c.l.b16 %v4713
        %v4846 = vunpack.c.l.b16 %v4714
        %v4847 = vunpack.c.l.b16 %v4715
        %v4848 = vunpack.c.l.b16 %v4716
        %v4849 = vunpack.c.l.b16 %v4717
        %v4850 = vunpack.c.l.b16 %v4718
        %v4851 = vunpack.c.l.b16 %v4719
        %v4852 = vunpack.c.l.b16 %v4720
        %v4853 = vunpack.c.l.b16 %v4721
        %v4854 = vunpack.c.l.b16 %v4722
        %v4855 = vunpack.c.l.b16 %v4723
        %v4856 = vunpack.c.l.b16 %v4724
        %v4857 = vunpack.c.l.b16 %v4725
        %v4858 = vunpack.c.l.b16 %v4726
        %v4859 = vunpack.c.l.b16 %v4727
        %v4860 = vunpack.c.l.b16 %v4728
        %v4861 = vunpack.c.l.b16 %v4729
        %v4862 = vunpack.c.l.b16 %v4730
        %v4863 = vunpack.c.l.b16 %v4731
        %v4864 = vunpack.c.l.b16 %v4732
        %v4865 = vunpack.c.l.b16 %v4733
        %v4866 = vunpack.c.l.b16 %v4734
        %v4867 = vunpack.c.l.b16 %v4735
        %v4868 = vunpack.c.l.b16 %v4736
        %v4869 = vunpack.c.l.b16 %v4737
        %v4870 = vunpack.c.l.b16 %v4738
        %v4871 = vunpack.c.l.b16 %v4739
        %v4872 = vunpack.c.l.b16 %v4740
        %v4873 = vunpack.c.l.b16 %v4741
        %v4874 = vunpack.c.l.b16 %v4742
        %v4875 = vunpack.c.l.b16 %v4743
        %v4876 = vunpack.c.l.b16 %v4744
        %v4877 = vunpack.c.l.b16 %v4745
        %v4878 = vpack.c.b16 %v4815, %v4814
        %v4879 = vpack.c.b16 %v4817, %v4816
        %v4880 = vpack.c.b16 %v4819, %v4818
        %v4881 = vpack.c.b16 %v4821, %v4820
        %v4882 = vpack.c.b16 %v4823, %v4822
        %v4883 = vpack.c.b16 %v4825, %v4824
        %v4884 = vpack.c.b16 %v4827, %v4826
        %v4885 = vpack.c.b16 %v4829, %v4828
        %v4886 = vpack.c.b16 %v4831, %v4830
        %v4887 = vpack.c.b16 %v4833, %v4832
        %v4888 = vpack.c.b16 %v4835, %v4834
        %v4889 = vpack.c.b16 %v4837, %v4836
        %v4890 = vpack.c.b16 %v4839, %v4838
        %v4891 = vpack.c.b16 %v4841, %v4840
        %v4892 = vpack.c.b16 %v4843, %v4842
        %v4893 = vpack.c.b16 %v4845, %v4844
        %v4894 = vpack.c.b16 %v4847, %v4846
        %v4895 = vpack.c.b16 %v4849, %v4848
        %v4896 = vpack.c.b16 %v4851, %v4850
        %v4897 = vpack.c.b16 %v4853, %v4852
        %v4898 = vpack.c.b16 %v4855, %v4854
        %v4899 = vpack.c.b16 %v4857, %v4856
        %v4900 = vpack.c.b16 %v4859, %v4858
        %v4901 = vpack.c.b16 %v4861, %v4860
        %v4902 = vpack.c.b16 %v4863, %v4862
        %v4903 = vpack.c.b16 %v4865, %v4864
        %v4904 = vpack.c.b16 %v4867, %v4866
        %v4905 = vpack.c.b16 %v4869, %v4868
        %v4906 = vpack.c.b16 %v4871, %v4870
        %v4907 = vpack.c.b16 %v4873, %v4872
        %v4908 = vpack.c.b16 %v4875, %v4874
        %v4909 = vpack.c.b16 %v4877, %v4876
        %4942 = vmatpush.bf16.msra.mxu0 %v4885
        %4943 = vmatpush.bf16.msra.mxu0 %v4884
        %4944 = vmatpush.bf16.msra.mxu0 %v4883
        %4945 = vmatpush.bf16.msra.mxu0 %v4882
        %4946 = vmatpush.bf16.msra.mxu0 %v4881
        %4947 = vmatpush.bf16.msra.mxu0 %v4880
        %4948 = vmatpush.bf16.msra.mxu0 %v4879
        %4949 = vmatpush.bf16.msra.mxu0 %v4878
        %4950 = vmatmul.bf16.gmra.mxu0 %v4650
        %v4951 = vpop.f32.mrf.mxu0
        %v4952 = vadd.f32 %v4748, %v4951
        %v4953 = vpop.f32.mrf.mxu0
        %v4954 = vadd.f32 %v4748, %v4953
        %4955 = vmatmul.bf16.gmra.mxu0 %v4654
        %v4956 = vpop.f32.mrf.mxu0
        %v4957 = vadd.f32 %v4748, %v4956
        %v4958 = vpop.f32.mrf.mxu0
        %v4959 = vadd.f32 %v4748, %v4958
        %4960 = vmatmul.bf16.gmra.mxu0 %v4658
        %v4961 = vpop.f32.mrf.mxu0
        %v4962 = vadd.f32 %v4748, %v4961
        %v4963 = vpop.f32.mrf.mxu0
        %v4964 = vadd.f32 %v4748, %v4963
        %4965 = vmatmul.bf16.gmra.mxu0 %v4662
        %v4966 = vpop.f32.mrf.mxu0
        %v4967 = vadd.f32 %v4748, %v4966
        %v4968 = vpop.f32.mrf.mxu0
        %v4969 = vadd.f32 %v4748, %v4968
        %4970 = vmatmul.bf16.gmra.mxu0 %v4666
        %v4971 = vpop.f32.mrf.mxu0
        %v4972 = vadd.f32 %v4748, %v4971
        %v4973 = vpop.f32.mrf.mxu0
        %v4974 = vadd.f32 %v4748, %v4973
        %4975 = vmatmul.bf16.gmra.mxu0 %v4670
        %v4976 = vpop.f32.mrf.mxu0
        %v4977 = vadd.f32 %v4748, %v4976
        %v4978 = vpop.f32.mrf.mxu0
        %v4979 = vadd.f32 %v4748, %v4978
        %4980 = vmatmul.bf16.gmra.mxu0 %v4674
        %v4981 = vpop.f32.mrf.mxu0
        %v4982 = vadd.f32 %v4748, %v4981
        %v4983 = vpop.f32.mrf.mxu0
        %v4984 = vadd.f32 %v4748, %v4983
        %4985 = vmatmul.bf16.gmra.mxu0 %v4678
        %v4986 = vpop.f32.mrf.mxu0
        %v4987 = vadd.f32 %v4748, %v4986
        %v4988 = vpop.f32.mrf.mxu0
        %v4989 = vadd.f32 %v4748, %v4988
        %4990 = vdwg.mxu0
        %4991 = vmatpush.bf16.msra.mxu0 %v4893
        %4992 = vmatpush.bf16.msra.mxu0 %v4892
        %4993 = vmatpush.bf16.msra.mxu0 %v4891
        %4994 = vmatpush.bf16.msra.mxu0 %v4890
        %4995 = vmatpush.bf16.msra.mxu0 %v4889
        %4996 = vmatpush.bf16.msra.mxu0 %v4888
        %4997 = vmatpush.bf16.msra.mxu0 %v4887
        %4998 = vmatpush.bf16.msra.mxu0 %v4886
        %4999 = vmatmul.bf16.gmra.mxu0 %v4651
        %v5000 = vpop.f32.mrf.mxu0
        %v5001 = vadd.f32 %v4952, %v5000
        %v5002 = vpop.f32.mrf.mxu0
        %v5003 = vadd.f32 %v4954, %v5002
        %5004 = vmatmul.bf16.gmra.mxu0 %v4655
        %v5005 = vpop.f32.mrf.mxu0
        %v5006 = vadd.f32 %v4957, %v5005
        %v5007 = vpop.f32.mrf.mxu0
        %v5008 = vadd.f32 %v4959, %v5007
        %5009 = vmatmul.bf16.gmra.mxu0 %v4659
        %v5010 = vpop.f32.mrf.mxu0
        %v5011 = vadd.f32 %v4962, %v5010
        %v5012 = vpop.f32.mrf.mxu0
        %v5013 = vadd.f32 %v4964, %v5012
        %5014 = vmatmul.bf16.gmra.mxu0 %v4663
        %v5015 = vpop.f32.mrf.mxu0
        %v5016 = vadd.f32 %v4967, %v5015
        %v5017 = vpop.f32.mrf.mxu0
        %v5018 = vadd.f32 %v4969, %v5017
        %5019 = vmatmul.bf16.gmra.mxu0 %v4667
        %v5020 = vpop.f32.mrf.mxu0
        %v5021 = vadd.f32 %v4972, %v5020
        %v5022 = vpop.f32.mrf.mxu0
        %v5023 = vadd.f32 %v4974, %v5022
        %5024 = vmatmul.bf16.gmra.mxu0 %v4671
        %v5025 = vpop.f32.mrf.mxu0
        %v5026 = vadd.f32 %v4977, %v5025
        %v5027 = vpop.f32.mrf.mxu0
        %v5028 = vadd.f32 %v4979, %v5027
        %5029 = vmatmul.bf16.gmra.mxu0 %v4675
        %v5030 = vpop.f32.mrf.mxu0
        %v5031 = vadd.f32 %v4982, %v5030
        %v5032 = vpop.f32.mrf.mxu0
        %v5033 = vadd.f32 %v4984, %v5032
        %5034 = vmatmul.bf16.gmra.mxu0 %v4679
        %v5035 = vpop.f32.mrf.mxu0
        %v5036 = vadd.f32 %v4987, %v5035
        %v5037 = vpop.f32.mrf.mxu0
        %v5038 = vadd.f32 %v4989, %v5037
        %5039 = vdwg.mxu0
        %5040 = vmatpush.bf16.msra.mxu0 %v4901
        %5041 = vmatpush.bf16.msra.mxu0 %v4900
        %5042 = vmatpush.bf16.msra.mxu0 %v4899
        %5043 = vmatpush.bf16.msra.mxu0 %v4898
        %5044 = vmatpush.bf16.msra.mxu0 %v4897
        %5045 = vmatpush.bf16.msra.mxu0 %v4896
        %5046 = vmatpush.bf16.msra.mxu0 %v4895
        %5047 = vmatpush.bf16.msra.mxu0 %v4894
        %5048 = vmatmul.bf16.gmra.mxu0 %v4652
        %v5049 = vpop.f32.mrf.mxu0
        %v5050 = vadd.f32 %v5001, %v5049
        %v5051 = vpop.f32.mrf.mxu0
        %v5052 = vadd.f32 %v5003, %v5051
        %5053 = vmatmul.bf16.gmra.mxu0 %v4656
        %v5054 = vpop.f32.mrf.mxu0
        %v5055 = vadd.f32 %v5006, %v5054
        %v5056 = vpop.f32.mrf.mxu0
        %v5057 = vadd.f32 %v5008, %v5056
        %5058 = vmatmul.bf16.gmra.mxu0 %v4660
        %v5059 = vpop.f32.mrf.mxu0
        %v5060 = vadd.f32 %v5011, %v5059
        %v5061 = vpop.f32.mrf.mxu0
        %v5062 = vadd.f32 %v5013, %v5061
        %5063 = vmatmul.bf16.gmra.mxu0 %v4664
        %v5064 = vpop.f32.mrf.mxu0
        %v5065 = vadd.f32 %v5016, %v5064
        %v5066 = vpop.f32.mrf.mxu0
        %v5067 = vadd.f32 %v5018, %v5066
        %5068 = vmatmul.bf16.gmra.mxu0 %v4668
        %v5069 = vpop.f32.mrf.mxu0
        %v5070 = vadd.f32 %v5021, %v5069
        %v5071 = vpop.f32.mrf.mxu0
        %v5072 = vadd.f32 %v5023, %v5071
        %5073 = vmatmul.bf16.gmra.mxu0 %v4672
        %v5074 = vpop.f32.mrf.mxu0
        %v5075 = vadd.f32 %v5026, %v5074
        %v5076 = vpop.f32.mrf.mxu0
        %v5077 = vadd.f32 %v5028, %v5076
        %5078 = vmatmul.bf16.gmra.mxu0 %v4676
        %v5079 = vpop.f32.mrf.mxu0
        %v5080 = vadd.f32 %v5031, %v5079
        %v5081 = vpop.f32.mrf.mxu0
        %v5082 = vadd.f32 %v5033, %v5081
        %5083 = vmatmul.bf16.gmra.mxu0 %v4680
        %v5084 = vpop.f32.mrf.mxu0
        %v5085 = vadd.f32 %v5036, %v5084
        %v5086 = vpop.f32.mrf.mxu0
        %v5087 = vadd.f32 %v5038, %v5086
        %5088 = vdwg.mxu0
        %5089 = vmatpush.bf16.msra.mxu0 %v4909
        %5090 = vmatpush.bf16.msra.mxu0 %v4908
        %5091 = vmatpush.bf16.msra.mxu0 %v4907
        %5092 = vmatpush.bf16.msra.mxu0 %v4906
        %5093 = vmatpush.bf16.msra.mxu0 %v4905
        %5094 = vmatpush.bf16.msra.mxu0 %v4904
        %5095 = vmatpush.bf16.msra.mxu0 %v4903
        %5096 = vmatpush.bf16.msra.mxu0 %v4902
        %5097 = vmatmul.bf16.gmra.mxu0 %v4653
        %v5098 = vpop.f32.mrf.mxu0
        %v5099 = vadd.f32 %v5050, %v5098
        %v5100 = vpop.f32.mrf.mxu0
        %v5101 = vadd.f32 %v5052, %v5100
        %5102 = vmatmul.bf16.gmra.mxu0 %v4657
        %v5103 = vpop.f32.mrf.mxu0
        %v5104 = vadd.f32 %v5055, %v5103
        %v5105 = vpop.f32.mrf.mxu0
        %v5106 = vadd.f32 %v5057, %v5105
        %5107 = vmatmul.bf16.gmra.mxu0 %v4661
        %v5108 = vpop.f32.mrf.mxu0
        %v5109 = vadd.f32 %v5060, %v5108
        %v5110 = vpop.f32.mrf.mxu0
        %v5111 = vadd.f32 %v5062, %v5110
        %5112 = vmatmul.bf16.gmra.mxu0 %v4665
        %v5113 = vpop.f32.mrf.mxu0
        %v5114 = vadd.f32 %v5065, %v5113
        %v5115 = vpop.f32.mrf.mxu0
        %v5116 = vadd.f32 %v5067, %v5115
        %5117 = vmatmul.bf16.gmra.mxu0 %v4669
        %v5118 = vpop.f32.mrf.mxu0
        %v5119 = vadd.f32 %v5070, %v5118
        %v5120 = vpop.f32.mrf.mxu0
        %v5121 = vadd.f32 %v5072, %v5120
        %5122 = vmatmul.bf16.gmra.mxu0 %v4673
        %v5123 = vpop.f32.mrf.mxu0
        %v5124 = vadd.f32 %v5075, %v5123
        %v5125 = vpop.f32.mrf.mxu0
        %v5126 = vadd.f32 %v5077, %v5125
        %5127 = vmatmul.bf16.gmra.mxu0 %v4677
        %v5128 = vpop.f32.mrf.mxu0
        %v5129 = vadd.f32 %v5080, %v5128
        %v5130 = vpop.f32.mrf.mxu0
        %v5131 = vadd.f32 %v5082, %v5130
        %5132 = vmatmul.bf16.gmra.mxu0 %v4681
        %v5133 = vpop.f32.mrf.mxu0
        %v5134 = vadd.f32 %v5085, %v5133
        %v5135 = vpop.f32.mrf.mxu0
        %v5136 = vadd.f32 %v5087, %v5135
        %5137 = vdwg.mxu0
        %v5138 = vadd.f32 %v3804, %v5099
        %v5139 = vadd.f32 %v3805, %v5101
        %v5140 = vadd.f32 %v3806, %v5104
        %v5141 = vadd.f32 %v3807, %v5106
        %v5142 = vadd.f32 %v3808, %v5109
        %v5143 = vadd.f32 %v3809, %v5111
        %v5144 = vadd.f32 %v3810, %v5114
        %v5145 = vadd.f32 %v3811, %v5116
        %v5146 = vadd.f32 %v3812, %v5119
        %v5147 = vadd.f32 %v3813, %v5121
        %v5148 = vadd.f32 %v3814, %v5124
        %v5149 = vadd.f32 %v3815, %v5126
        %v5150 = vadd.f32 %v3816, %v5129
        %v5151 = vadd.f32 %v3817, %v5131
        %v5152 = vadd.f32 %v3818, %v5134
        %v5153 = vadd.f32 %v3819, %v5136
        %5154 = vst [vmem:[#allocation2] sm:$0xff] %v5138
        %5155 = vst [vmem:[#allocation2 + $0x8] sm:$0xff] %v5139
        %5156 = vst [vmem:[#allocation2 + $0x10] sm:$0xff] %v5140
        %5157 = vst [vmem:[#allocation2 + $0x18] sm:$0xff] %v5141
        %5158 = vst [vmem:[#allocation2 + $0x20] sm:$0xff] %v5142
        %5159 = vst [vmem:[#allocation2 + $0x28] sm:$0xff] %v5143
        %5160 = vst [vmem:[#allocation2 + $0x30] sm:$0xff] %v5144
        %5161 = vst [vmem:[#allocation2 + $0x38] sm:$0xff] %v5145
        %5162 = vst [vmem:[#allocation2 + $0x40] sm:$0xff] %v5146
        %5163 = vst [vmem:[#allocation2 + $0x48] sm:$0xff] %v5147
        %5164 = vst [vmem:[#allocation2 + $0x50] sm:$0xff] %v5148
        %5165 = vst [vmem:[#allocation2 + $0x58] sm:$0xff] %v5149
        %5166 = vst [vmem:[#allocation2 + $0x60] sm:$0xff] %v5150
        %5167 = vst [vmem:[#allocation2 + $0x68] sm:$0xff] %v5151
        %5168 = vst [vmem:[#allocation2 + $0x70] sm:$0xff] %v5152
        %5169 = vst [vmem:[#allocation2 + $0x78] sm:$0xff] %v5153
        %p5170 = scmp.eq.s32.totalorder %s29, 1
        // Predicated region
        $region93: #{forward.1} parent=87 // pred_check
          %p5171 = pneg %p5170
        $region94: #{forward.1} parent=87 // pred_check_branch
          %5173 = sbr.rel (%p5171) target = $region96
        $region95: #{forward.1} parent=87 // pred_region
          %v5174 = vld [vmem:[#allocation2] sm:$0xff]
          %v5175 = vld [vmem:[#allocation2 + $0x8] sm:$0xff]
          %v5176 = vld [vmem:[#allocation2 + $0x10] sm:$0xff]
          %v5177 = vld [vmem:[#allocation2 + $0x18] sm:$0xff]
          %v5178 = vld [vmem:[#allocation2 + $0x20] sm:$0xff]
          %v5179 = vld [vmem:[#allocation2 + $0x28] sm:$0xff]
          %v5180 = vld [vmem:[#allocation2 + $0x30] sm:$0xff]
          %v5181 = vld [vmem:[#allocation2 + $0x38] sm:$0xff]
          %v5182 = vld [vmem:[#allocation2 + $0x40] sm:$0xff]
          %v5183 = vld [vmem:[#allocation2 + $0x48] sm:$0xff]
          %v5184 = vld [vmem:[#allocation2 + $0x50] sm:$0xff]
          %v5185 = vld [vmem:[#allocation2 + $0x58] sm:$0xff]
          %v5186 = vld [vmem:[#allocation2 + $0x60] sm:$0xff]
          %v5187 = vld [vmem:[#allocation2 + $0x68] sm:$0xff]
          %v5188 = vld [vmem:[#allocation2 + $0x70] sm:$0xff]
          %v5189 = vld [vmem:[#allocation2 + $0x78] sm:$0xff]
          %v5190 = vld [vmem:[%s13] sm:$0x1]
          %v5191 = vld [vmem:[%s14] sm:$0x1]
          %5192 = vadd.xlane.f32.xlu0 %v5174
          %v5193 = vpop.xlane.xlu0 %5192
          %5194 = vadd.xlane.f32.xlu0 %v5175
          %v5195 = vpop.xlane.xlu0 %5194
          %5196 = vadd.xlane.f32.xlu0 %v5176
          %v5197 = vpop.xlane.xlu0 %5196
          %5198 = vadd.xlane.f32.xlu0 %v5177
          %v5199 = vpop.xlane.xlu0 %5198
          %5200 = vadd.xlane.f32.xlu0 %v5178
          %v5201 = vpop.xlane.xlu0 %5200
          %5202 = vadd.xlane.f32.xlu0 %v5179
          %v5203 = vpop.xlane.xlu0 %5202
          %5204 = vadd.xlane.f32.xlu0 %v5180
          %v5205 = vpop.xlane.xlu0 %5204
          %5206 = vadd.xlane.f32.xlu0 %v5181
          %v5207 = vpop.xlane.xlu0 %5206
          %5208 = vadd.xlane.f32.xlu0 %v5182
          %v5209 = vpop.xlane.xlu0 %5208
          %5210 = vadd.xlane.f32.xlu0 %v5183
          %v5211 = vpop.xlane.xlu0 %5210
          %5212 = vadd.xlane.f32.xlu0 %v5184
          %v5213 = vpop.xlane.xlu0 %5212
          %5214 = vadd.xlane.f32.xlu0 %v5185
          %v5215 = vpop.xlane.xlu0 %5214
          %5216 = vadd.xlane.f32.xlu0 %v5186
          %v5217 = vpop.xlane.xlu0 %5216
          %5218 = vadd.xlane.f32.xlu0 %v5187
          %v5219 = vpop.xlane.xlu0 %5218
          %5220 = vadd.xlane.f32.xlu0 %v5188
          %v5221 = vpop.xlane.xlu0 %5220
          %5222 = vadd.xlane.f32.xlu0 %v5189
          %v5223 = vpop.xlane.xlu0 %5222
          %v5224 = vmul.f32 %v5193, %v813
          %v5225 = vmul.f32 %v5195, %v813
          %v5226 = vmul.f32 %v5197, %v813
          %v5227 = vmul.f32 %v5199, %v813
          %v5228 = vmul.f32 %v5201, %v813
          %v5229 = vmul.f32 %v5203, %v813
          %v5230 = vmul.f32 %v5205, %v813
          %v5231 = vmul.f32 %v5207, %v813
          %v5232 = vmul.f32 %v5209, %v813
          %v5233 = vmul.f32 %v5211, %v813
          %v5234 = vmul.f32 %v5213, %v813
          %v5235 = vmul.f32 %v5215, %v813
          %v5236 = vmul.f32 %v5217, %v813
          %v5237 = vmul.f32 %v5219, %v813
          %v5238 = vmul.f32 %v5221, %v813
          %v5239 = vmul.f32 %v5223, %v813
          %v5240 = vsub.f32 %v5174, %v5224
          %v5241 = vsub.f32 %v5175, %v5225
          %v5242 = vsub.f32 %v5176, %v5226
          %v5243 = vsub.f32 %v5177, %v5227
          %v5244 = vsub.f32 %v5178, %v5228
          %v5245 = vsub.f32 %v5179, %v5229
          %v5246 = vsub.f32 %v5180, %v5230
          %v5247 = vsub.f32 %v5181, %v5231
          %v5248 = vsub.f32 %v5182, %v5232
          %v5249 = vsub.f32 %v5183, %v5233
          %v5250 = vsub.f32 %v5184, %v5234
          %v5251 = vsub.f32 %v5185, %v5235
          %v5252 = vsub.f32 %v5186, %v5236
          %v5253 = vsub.f32 %v5187, %v5237
          %v5254 = vsub.f32 %v5188, %v5238
          %v5255 = vsub.f32 %v5189, %v5239
          %v5256 = vmul.f32 %v5240, %v5240
          %v5257 = vmul.f32 %v5241, %v5241
          %v5258 = vmul.f32 %v5242, %v5242
          %v5259 = vmul.f32 %v5243, %v5243
          %v5260 = vmul.f32 %v5244, %v5244
          %v5261 = vmul.f32 %v5245, %v5245
          %v5262 = vmul.f32 %v5246, %v5246
          %v5263 = vmul.f32 %v5247, %v5247
          %v5264 = vmul.f32 %v5248, %v5248
          %v5265 = vmul.f32 %v5249, %v5249
          %v5266 = vmul.f32 %v5250, %v5250
          %v5267 = vmul.f32 %v5251, %v5251
          %v5268 = vmul.f32 %v5252, %v5252
          %v5269 = vmul.f32 %v5253, %v5253
          %v5270 = vmul.f32 %v5254, %v5254
          %v5271 = vmul.f32 %v5255, %v5255
          %5272 = vadd.xlane.f32.xlu0 %v5256
          %v5273 = vpop.xlane.xlu0 %5272
          %5274 = vadd.xlane.f32.xlu0 %v5257
          %v5275 = vpop.xlane.xlu0 %5274
          %5276 = vadd.xlane.f32.xlu0 %v5258
          %v5277 = vpop.xlane.xlu0 %5276
          %5278 = vadd.xlane.f32.xlu0 %v5259
          %v5279 = vpop.xlane.xlu0 %5278
          %5280 = vadd.xlane.f32.xlu0 %v5260
          %v5281 = vpop.xlane.xlu0 %5280
          %5282 = vadd.xlane.f32.xlu0 %v5261
          %v5283 = vpop.xlane.xlu0 %5282
          %5284 = vadd.xlane.f32.xlu0 %v5262
          %v5285 = vpop.xlane.xlu0 %5284
          %5286 = vadd.xlane.f32.xlu0 %v5263
          %v5287 = vpop.xlane.xlu0 %5286
          %5288 = vadd.xlane.f32.xlu0 %v5264
          %v5289 = vpop.xlane.xlu0 %5288
          %5290 = vadd.xlane.f32.xlu0 %v5265
          %v5291 = vpop.xlane.xlu0 %5290
          %5292 = vadd.xlane.f32.xlu0 %v5266
          %v5293 = vpop.xlane.xlu0 %5292
          %5294 = vadd.xlane.f32.xlu0 %v5267
          %v5295 = vpop.xlane.xlu0 %5294
          %5296 = vadd.xlane.f32.xlu0 %v5268
          %v5297 = vpop.xlane.xlu0 %5296
          %5298 = vadd.xlane.f32.xlu0 %v5269
          %v5299 = vpop.xlane.xlu0 %5298
          %5300 = vadd.xlane.f32.xlu0 %v5270
          %v5301 = vpop.xlane.xlu0 %5300
          %5302 = vadd.xlane.f32.xlu0 %v5271
          %v5303 = vpop.xlane.xlu0 %5302
          %v5304 = vmul.f32 %v5273, %v813
          %v5305 = vmul.f32 %v5275, %v813
          %v5306 = vmul.f32 %v5277, %v813
          %v5307 = vmul.f32 %v5279, %v813
          %v5308 = vmul.f32 %v5281, %v813
          %v5309 = vmul.f32 %v5283, %v813
          %v5310 = vmul.f32 %v5285, %v813
          %v5311 = vmul.f32 %v5287, %v813
          %v5312 = vmul.f32 %v5289, %v813
          %v5313 = vmul.f32 %v5291, %v813
          %v5314 = vmul.f32 %v5293, %v813
          %v5315 = vmul.f32 %v5295, %v813
          %v5316 = vmul.f32 %v5297, %v813
          %v5317 = vmul.f32 %v5299, %v813
          %v5318 = vmul.f32 %v5301, %v813
          %v5319 = vmul.f32 %v5303, %v813
          %v5320 = vadd.f32 %v5304, 1e-05
          %v5321 = vadd.f32 %v5305, 1e-05
          %v5322 = vadd.f32 %v5306, 1e-05
          %v5323 = vadd.f32 %v5307, 1e-05
          %v5324 = vadd.f32 %v5308, 1e-05
          %v5325 = vadd.f32 %v5309, 1e-05
          %v5326 = vadd.f32 %v5310, 1e-05
          %v5327 = vadd.f32 %v5311, 1e-05
          %v5328 = vadd.f32 %v5312, 1e-05
          %v5329 = vadd.f32 %v5313, 1e-05
          %v5330 = vadd.f32 %v5314, 1e-05
          %v5331 = vadd.f32 %v5315, 1e-05
          %v5332 = vadd.f32 %v5316, 1e-05
          %v5333 = vadd.f32 %v5317, 1e-05
          %v5334 = vadd.f32 %v5318, 1e-05
          %v5335 = vadd.f32 %v5319, 1e-05
          %v5336 = vrsqrt.pop %v5320
          %v5337 = vmul.f32 %v5336, %v5320
          %v5338 = vmul.f32 %v5337, %v5336
          %v5339 = vmul.f32 0.5, %v5338
          %v5340 = vsub.f32 1.5, %v5339
          %v5341 = vmul.f32 %v5336, %v5340
          %vm5342 = vweird.f32 %v5320
          %vm5343 = vweird.f32 %v5336
          %vm5344 = vmor %vm5342, %vm5343
          %v5345 = vsel %vm5344, %v5336, %v5341
          %v5346 = vrsqrt.pop %v5321
          %v5347 = vmul.f32 %v5346, %v5321
          %v5348 = vmul.f32 %v5347, %v5346
          %v5349 = vmul.f32 0.5, %v5348
          %v5350 = vsub.f32 1.5, %v5349
          %v5351 = vmul.f32 %v5346, %v5350
          %vm5352 = vweird.f32 %v5321
          %vm5353 = vweird.f32 %v5346
          %vm5354 = vmor %vm5352, %vm5353
          %v5355 = vsel %vm5354, %v5346, %v5351
          %v5356 = vrsqrt.pop %v5322
          %v5357 = vmul.f32 %v5356, %v5322
          %v5358 = vmul.f32 %v5357, %v5356
          %v5359 = vmul.f32 0.5, %v5358
          %v5360 = vsub.f32 1.5, %v5359
          %v5361 = vmul.f32 %v5356, %v5360
          %vm5362 = vweird.f32 %v5322
          %vm5363 = vweird.f32 %v5356
          %vm5364 = vmor %vm5362, %vm5363
          %v5365 = vsel %vm5364, %v5356, %v5361
          %v5366 = vrsqrt.pop %v5323
          %v5367 = vmul.f32 %v5366, %v5323
          %v5368 = vmul.f32 %v5367, %v5366
          %v5369 = vmul.f32 0.5, %v5368
          %v5370 = vsub.f32 1.5, %v5369
          %v5371 = vmul.f32 %v5366, %v5370
          %vm5372 = vweird.f32 %v5323
          %vm5373 = vweird.f32 %v5366
          %vm5374 = vmor %vm5372, %vm5373
          %v5375 = vsel %vm5374, %v5366, %v5371
          %v5376 = vrsqrt.pop %v5324
          %v5377 = vmul.f32 %v5376, %v5324
          %v5378 = vmul.f32 %v5377, %v5376
          %v5379 = vmul.f32 0.5, %v5378
          %v5380 = vsub.f32 1.5, %v5379
          %v5381 = vmul.f32 %v5376, %v5380
          %vm5382 = vweird.f32 %v5324
          %vm5383 = vweird.f32 %v5376
          %vm5384 = vmor %vm5382, %vm5383
          %v5385 = vsel %vm5384, %v5376, %v5381
          %v5386 = vrsqrt.pop %v5325
          %v5387 = vmul.f32 %v5386, %v5325
          %v5388 = vmul.f32 %v5387, %v5386
          %v5389 = vmul.f32 0.5, %v5388
          %v5390 = vsub.f32 1.5, %v5389
          %v5391 = vmul.f32 %v5386, %v5390
          %vm5392 = vweird.f32 %v5325
          %vm5393 = vweird.f32 %v5386
          %vm5394 = vmor %vm5392, %vm5393
          %v5395 = vsel %vm5394, %v5386, %v5391
          %v5396 = vrsqrt.pop %v5326
          %v5397 = vmul.f32 %v5396, %v5326
          %v5398 = vmul.f32 %v5397, %v5396
          %v5399 = vmul.f32 0.5, %v5398
          %v5400 = vsub.f32 1.5, %v5399
          %v5401 = vmul.f32 %v5396, %v5400
          %vm5402 = vweird.f32 %v5326
          %vm5403 = vweird.f32 %v5396
          %vm5404 = vmor %vm5402, %vm5403
          %v5405 = vsel %vm5404, %v5396, %v5401
          %v5406 = vrsqrt.pop %v5327
          %v5407 = vmul.f32 %v5406, %v5327
          %v5408 = vmul.f32 %v5407, %v5406
          %v5409 = vmul.f32 0.5, %v5408
          %v5410 = vsub.f32 1.5, %v5409
          %v5411 = vmul.f32 %v5406, %v5410
          %vm5412 = vweird.f32 %v5327
          %vm5413 = vweird.f32 %v5406
          %vm5414 = vmor %vm5412, %vm5413
          %v5415 = vsel %vm5414, %v5406, %v5411
          %v5416 = vrsqrt.pop %v5328
          %v5417 = vmul.f32 %v5416, %v5328
          %v5418 = vmul.f32 %v5417, %v5416
          %v5419 = vmul.f32 0.5, %v5418
          %v5420 = vsub.f32 1.5, %v5419
          %v5421 = vmul.f32 %v5416, %v5420
          %vm5422 = vweird.f32 %v5328
          %vm5423 = vweird.f32 %v5416
          %vm5424 = vmor %vm5422, %vm5423
          %v5425 = vsel %vm5424, %v5416, %v5421
          %v5426 = vrsqrt.pop %v5329
          %v5427 = vmul.f32 %v5426, %v5329
          %v5428 = vmul.f32 %v5427, %v5426
          %v5429 = vmul.f32 0.5, %v5428
          %v5430 = vsub.f32 1.5, %v5429
          %v5431 = vmul.f32 %v5426, %v5430
          %vm5432 = vweird.f32 %v5329
          %vm5433 = vweird.f32 %v5426
          %vm5434 = vmor %vm5432, %vm5433
          %v5435 = vsel %vm5434, %v5426, %v5431
          %v5436 = vrsqrt.pop %v5330
          %v5437 = vmul.f32 %v5436, %v5330
          %v5438 = vmul.f32 %v5437, %v5436
          %v5439 = vmul.f32 0.5, %v5438
          %v5440 = vsub.f32 1.5, %v5439
          %v5441 = vmul.f32 %v5436, %v5440
          %vm5442 = vweird.f32 %v5330
          %vm5443 = vweird.f32 %v5436
          %vm5444 = vmor %vm5442, %vm5443
          %v5445 = vsel %vm5444, %v5436, %v5441
          %v5446 = vrsqrt.pop %v5331
          %v5447 = vmul.f32 %v5446, %v5331
          %v5448 = vmul.f32 %v5447, %v5446
          %v5449 = vmul.f32 0.5, %v5448
          %v5450 = vsub.f32 1.5, %v5449
          %v5451 = vmul.f32 %v5446, %v5450
          %vm5452 = vweird.f32 %v5331
          %vm5453 = vweird.f32 %v5446
          %vm5454 = vmor %vm5452, %vm5453
          %v5455 = vsel %vm5454, %v5446, %v5451
          %v5456 = vrsqrt.pop %v5332
          %v5457 = vmul.f32 %v5456, %v5332
          %v5458 = vmul.f32 %v5457, %v5456
          %v5459 = vmul.f32 0.5, %v5458
          %v5460 = vsub.f32 1.5, %v5459
          %v5461 = vmul.f32 %v5456, %v5460
          %vm5462 = vweird.f32 %v5332
          %vm5463 = vweird.f32 %v5456
          %vm5464 = vmor %vm5462, %vm5463
          %v5465 = vsel %vm5464, %v5456, %v5461
          %v5466 = vrsqrt.pop %v5333
          %v5467 = vmul.f32 %v5466, %v5333
          %v5468 = vmul.f32 %v5467, %v5466
          %v5469 = vmul.f32 0.5, %v5468
          %v5470 = vsub.f32 1.5, %v5469
          %v5471 = vmul.f32 %v5466, %v5470
          %vm5472 = vweird.f32 %v5333
          %vm5473 = vweird.f32 %v5466
          %vm5474 = vmor %vm5472, %vm5473
          %v5475 = vsel %vm5474, %v5466, %v5471
          %v5476 = vrsqrt.pop %v5334
          %v5477 = vmul.f32 %v5476, %v5334
          %v5478 = vmul.f32 %v5477, %v5476
          %v5479 = vmul.f32 0.5, %v5478
          %v5480 = vsub.f32 1.5, %v5479
          %v5481 = vmul.f32 %v5476, %v5480
          %vm5482 = vweird.f32 %v5334
          %vm5483 = vweird.f32 %v5476
          %vm5484 = vmor %vm5482, %vm5483
          %v5485 = vsel %vm5484, %v5476, %v5481
          %v5486 = vrsqrt.pop %v5335
          %v5487 = vmul.f32 %v5486, %v5335
          %v5488 = vmul.f32 %v5487, %v5486
          %v5489 = vmul.f32 0.5, %v5488
          %v5490 = vsub.f32 1.5, %v5489
          %v5491 = vmul.f32 %v5486, %v5490
          %vm5492 = vweird.f32 %v5335
          %vm5493 = vweird.f32 %v5486
          %vm5494 = vmor %vm5492, %vm5493
          %v5495 = vsel %vm5494, %v5486, %v5491
          %v5496 = vmul.f32 %v5240, %v5345
          %v5497 = vmul.f32 %v5241, %v5355
          %v5498 = vmul.f32 %v5242, %v5365
          %v5499 = vmul.f32 %v5243, %v5375
          %v5500 = vmul.f32 %v5244, %v5385
          %v5501 = vmul.f32 %v5245, %v5395
          %v5502 = vmul.f32 %v5246, %v5405
          %v5503 = vmul.f32 %v5247, %v5415
          %v5504 = vmul.f32 %v5248, %v5425
          %v5505 = vmul.f32 %v5249, %v5435
          %v5506 = vmul.f32 %v5250, %v5445
          %v5507 = vmul.f32 %v5251, %v5455
          %v5508 = vmul.f32 %v5252, %v5465
          %v5509 = vmul.f32 %v5253, %v5475
          %v5510 = vmul.f32 %v5254, %v5485
          %v5511 = vmul.f32 %v5255, %v5495
          %v5513 = vperm.slane %v5190, 0
          %v5515 = vmul.f32 %v5496, %v5513
          %v5516 = vmul.f32 %v5497, %v5513
          %v5517 = vmul.f32 %v5498, %v5513
          %v5518 = vmul.f32 %v5499, %v5513
          %v5519 = vmul.f32 %v5500, %v5513
          %v5520 = vmul.f32 %v5501, %v5513
          %v5521 = vmul.f32 %v5502, %v5513
          %v5522 = vmul.f32 %v5503, %v5513
          %v5523 = vmul.f32 %v5504, %v5513
          %v5524 = vmul.f32 %v5505, %v5513
          %v5525 = vmul.f32 %v5506, %v5513
          %v5526 = vmul.f32 %v5507, %v5513
          %v5527 = vmul.f32 %v5508, %v5513
          %v5528 = vmul.f32 %v5509, %v5513
          %v5529 = vmul.f32 %v5510, %v5513
          %v5530 = vmul.f32 %v5511, %v5513
          %v5532 = vperm.slane %v5191, 0
          %v5534 = vadd.f32 %v5515, %v5532
          %v5535 = vadd.f32 %v5516, %v5532
          %v5536 = vadd.f32 %v5517, %v5532
          %v5537 = vadd.f32 %v5518, %v5532
          %v5538 = vadd.f32 %v5519, %v5532
          %v5539 = vadd.f32 %v5520, %v5532
          %v5540 = vadd.f32 %v5521, %v5532
          %v5541 = vadd.f32 %v5522, %v5532
          %v5542 = vadd.f32 %v5523, %v5532
          %v5543 = vadd.f32 %v5524, %v5532
          %v5544 = vadd.f32 %v5525, %v5532
          %v5545 = vadd.f32 %v5526, %v5532
          %v5546 = vadd.f32 %v5527, %v5532
          %v5547 = vadd.f32 %v5528, %v5532
          %v5548 = vadd.f32 %v5529, %v5532
          %v5549 = vadd.f32 %v5530, %v5532
          %v5550 = vpack.c.bf16 %v5535, %v5534
          %v5551 = vpack.c.bf16 %v5537, %v5536
          %v5552 = vpack.c.bf16 %v5539, %v5538
          %v5553 = vpack.c.bf16 %v5541, %v5540
          %v5554 = vpack.c.bf16 %v5543, %v5542
          %v5555 = vpack.c.bf16 %v5545, %v5544
          %v5556 = vpack.c.bf16 %v5547, %v5546
          %v5557 = vpack.c.bf16 %v5549, %v5548
          %v5558 = vld [vmem:[%s15] sm:$0xf]
          %v5559 = vld [vmem:[%s15 + $0x4] sm:$0xf]
          %v5560 = vld [vmem:[%s15 + $0x8] sm:$0xf]
          %v5561 = vld [vmem:[%s15 + $0xc] sm:$0xf]
          %v5562 = vld [vmem:[%s15 + $0x10] sm:$0xf]
          %v5563 = vld [vmem:[%s15 + $0x14] sm:$0xf]
          %v5564 = vld [vmem:[%s15 + $0x18] sm:$0xf]
          %v5565 = vld [vmem:[%s15 + $0x1c] sm:$0xf]
          %v5566 = vld [vmem:[%s15 + $0x20] sm:$0xf]
          %v5567 = vld [vmem:[%s15 + $0x24] sm:$0xf]
          %v5568 = vld [vmem:[%s15 + $0x28] sm:$0xf]
          %v5569 = vld [vmem:[%s15 + $0x2c] sm:$0xf]
          %v5570 = vld [vmem:[%s15 + $0x30] sm:$0xf]
          %v5571 = vld [vmem:[%s15 + $0x34] sm:$0xf]
          %v5572 = vld [vmem:[%s15 + $0x38] sm:$0xf]
          %v5573 = vld [vmem:[%s15 + $0x3c] sm:$0xf]
          %v5574 = vld [vmem:[%s16] sm:$0x1]
          %v5576 = vperm.slane %v5574, 0
          %v5594 = vunpack.c.l.b16 %v5558
          %v5595 = vunpack.c.l.b16 %v5559
          %v5596 = vunpack.c.l.b16 %v5560
          %v5597 = vunpack.c.l.b16 %v5561
          %v5598 = vunpack.c.l.b16 %v5562
          %v5599 = vunpack.c.l.b16 %v5563
          %v5600 = vunpack.c.l.b16 %v5564
          %v5601 = vunpack.c.l.b16 %v5565
          %v5602 = vunpack.c.l.b16 %v5566
          %v5603 = vunpack.c.l.b16 %v5567
          %v5604 = vunpack.c.l.b16 %v5568
          %v5605 = vunpack.c.l.b16 %v5569
          %v5606 = vunpack.c.l.b16 %v5570
          %v5607 = vunpack.c.l.b16 %v5571
          %v5608 = vunpack.c.l.b16 %v5572
          %v5609 = vunpack.c.l.b16 %v5573
          %v5610 = vpack.c.b16 %v5595, %v5594
          %v5611 = vpack.c.b16 %v5597, %v5596
          %v5612 = vpack.c.b16 %v5599, %v5598
          %v5613 = vpack.c.b16 %v5601, %v5600
          %v5614 = vpack.c.b16 %v5603, %v5602
          %v5615 = vpack.c.b16 %v5605, %v5604
          %v5616 = vpack.c.b16 %v5607, %v5606
          %v5617 = vpack.c.b16 %v5609, %v5608
          %5626 = vmatpush.bf16.msra.mxu0 %v5617
          %5627 = vmatpush.bf16.msra.mxu0 %v5616
          %5628 = vmatpush.bf16.msra.mxu0 %v5615
          %5629 = vmatpush.bf16.msra.mxu0 %v5614
          %5630 = vmatpush.bf16.msra.mxu0 %v5613
          %5631 = vmatpush.bf16.msra.mxu0 %v5612
          %5632 = vmatpush.bf16.msra.mxu0 %v5611
          %5633 = vmatpush.bf16.msra.mxu0 %v5610
          %5634 = vmatmul.bf16.gmra.mxu0 %v5550
          %v5635 = vpop.f32.mrf.mxu0
          %v5636 = vadd.f32 %v5576, %v5635
          %v5637 = vpop.f32.mrf.mxu0
          %v5638 = vadd.f32 %v5576, %v5637
          %5639 = vmatmul.bf16.gmra.mxu0 %v5551
          %v5640 = vpop.f32.mrf.mxu0
          %v5641 = vadd.f32 %v5576, %v5640
          %v5642 = vpop.f32.mrf.mxu0
          %v5643 = vadd.f32 %v5576, %v5642
          %5644 = vmatmul.bf16.gmra.mxu0 %v5552
          %v5645 = vpop.f32.mrf.mxu0
          %v5646 = vadd.f32 %v5576, %v5645
          %v5647 = vpop.f32.mrf.mxu0
          %v5648 = vadd.f32 %v5576, %v5647
          %5649 = vmatmul.bf16.gmra.mxu0 %v5553
          %v5650 = vpop.f32.mrf.mxu0
          %v5651 = vadd.f32 %v5576, %v5650
          %v5652 = vpop.f32.mrf.mxu0
          %v5653 = vadd.f32 %v5576, %v5652
          %5654 = vmatmul.bf16.gmra.mxu0 %v5554
          %v5655 = vpop.f32.mrf.mxu0
          %v5656 = vadd.f32 %v5576, %v5655
          %v5657 = vpop.f32.mrf.mxu0
          %v5658 = vadd.f32 %v5576, %v5657
          %5659 = vmatmul.bf16.gmra.mxu0 %v5555
          %v5660 = vpop.f32.mrf.mxu0
          %v5661 = vadd.f32 %v5576, %v5660
          %v5662 = vpop.f32.mrf.mxu0
          %v5663 = vadd.f32 %v5576, %v5662
          %5664 = vmatmul.bf16.gmra.mxu0 %v5556
          %v5665 = vpop.f32.mrf.mxu0
          %v5666 = vadd.f32 %v5576, %v5665
          %v5667 = vpop.f32.mrf.mxu0
          %v5668 = vadd.f32 %v5576, %v5667
          %5669 = vmatmul.bf16.gmra.mxu0 %v5557
          %v5670 = vpop.f32.mrf.mxu0
          %v5671 = vadd.f32 %v5576, %v5670
          %v5672 = vpop.f32.mrf.mxu0
          %v5673 = vadd.f32 %v5576, %v5672
          %5674 = vdwg.mxu0
          %5675 = vst [vmem:[#allocation4] sm:$0xff] %v5636
          %5676 = vst [vmem:[#allocation4 + $0x8] sm:$0xff] %v5638
          %5677 = vst [vmem:[#allocation4 + $0x10] sm:$0xff] %v5641
          %5678 = vst [vmem:[#allocation4 + $0x18] sm:$0xff] %v5643
          %5679 = vst [vmem:[#allocation4 + $0x20] sm:$0xff] %v5646
          %5680 = vst [vmem:[#allocation4 + $0x28] sm:$0xff] %v5648
          %5681 = vst [vmem:[#allocation4 + $0x30] sm:$0xff] %v5651
          %5682 = vst [vmem:[#allocation4 + $0x38] sm:$0xff] %v5653
          %5683 = vst [vmem:[#allocation4 + $0x40] sm:$0xff] %v5656
          %5684 = vst [vmem:[#allocation4 + $0x48] sm:$0xff] %v5658
          %5685 = vst [vmem:[#allocation4 + $0x50] sm:$0xff] %v5661
          %5686 = vst [vmem:[#allocation4 + $0x58] sm:$0xff] %v5663
          %5687 = vst [vmem:[#allocation4 + $0x60] sm:$0xff] %v5666
          %5688 = vst [vmem:[#allocation4 + $0x68] sm:$0xff] %v5668
          %5689 = vst [vmem:[#allocation4 + $0x70] sm:$0xff] %v5671
          %5690 = vst [vmem:[#allocation4 + $0x78] sm:$0xff] %v5673
        $region96: #{forward.1} parent=87 // pred_fallthru
          _
        // Predicated region
        $region97: #{forward.1} parent=87 // pred_check
          %p5691 = pneg %p454
        $region98: #{forward.1} parent=87 // pred_check_branch
          %5693 = sbr.rel (%p5691) target = $region100
        $region99: #{forward.1} parent=87 // pred_region
          %5695 = vsyncadd [#allocation5], 0
          %s5696 = sshll.u32 [#allocation4], 4
          %s5697 = int_to_ptr.vmem [resolvable:$true] %s5696
          %s5698 = sshll.u32 %s17, 4
          %s5699 = int_to_ptr.hbm [resolvable:$true] %s5698
          %5704 = dma.vmem_to_hbm [thread:$0]  %s5697, 2048, %s5699, [#allocation5], 128, 128, 8
        $region100: #{forward.1} parent=87 // pred_fallthru
          _
        // Predicated region
        $region101: #{forward.1} parent=87 // pred_check
          %p5705 = pneg %p454
        $region102: #{forward.1} parent=87 // pred_check_branch
          %5707 = sbr.rel (%p5705) target = $region104
        $region103: #{forward.1} parent=87 // pred_region
          %5709 = dma.done [#allocation5], 2048
        $region104: #{forward.1} parent=87 // pred_fallthru
          _
      $region88: #{forward.1} parent=5 // pred_fallthru
        _
      %p5710 = scmp.le.s32.totalorder 2, %s24
      // Predicated region
      $region105: #{forward.1} parent=5 // pred_check
        %p5711 = pneg %p5710
      $region106: #{forward.1} parent=5 // pred_check_branch
        %5713 = sbr.rel (%p5711) target = $region108
      $region107: #{forward.1} parent=5 // pred_region
        %s5714 = ssub.s32 %s24, 2
      $region108: #{forward.1} parent=5 // pred_fallthru
        _
    $region6: #{forward.1} parent=1 // loop_footer
      %s28 = sadd.s32 1, %s24
    $region7: #{forward.1} parent=1 // loop_footer_branch
      %23 = sbr.rel target = $region3
    $region8: #{forward.1} parent=1 // loop_exit
      _
    %5715 = vsyncpa [#allocation5], 1
    %s5716 = scalar_lea.sflag [#allocation5], 1
    %5717 = vsyncpa %s5716, 1

</llo_original>
